<compile_context>
chip_gen: v7x
topology: tpu7x:2x2x1
jax: 0.10.0
libtpu: 0.0.40
codegen_flags: <defaults>
</compile_context>

<pallas_src>
import jax
import jax.numpy as jnp
from jax import lax
from jax.experimental import pallas as pl
from jax.experimental.pallas import tpu as pltpu

# ----------------------------- model dimensions ------------------------------
NUM_LOC = 8        # graph nodes (locations)
TIMESTEP = 6
IN_DIM = 4         # n_feat
HIDDEN1 = 8        # hidden_dim1 (per GAT head of layer 1)
NUM_HEADS = 2
HIDDEN2 = 16       # hidden_dim2
GRU_DIM = 16
PRED_WINDOW = 4

# ----------------------------- packed-vector layout ---------------------------
# One parameter row-vector per sublane, zero-padded to VEC_MAXW lanes.
VEC_LAYOUT = [
    ("bfc1", NUM_HEADS * HIDDEN1),     # layer1 fc bias (heads concatenated)
    ("asrc1", NUM_HEADS * HIDDEN1),    # layer1 attn weight, src half
    ("adst1", NUM_HEADS * HIDDEN1),    # layer1 attn weight, dst half
    ("battn1", NUM_HEADS),             # layer1 attn bias (one per head)
    ("bfc2", HIDDEN2),
    ("asrc2", HIDDEN2),
    ("adst2", HIDDEN2),
    ("battn2", 1),
    ("bi", 3 * GRU_DIM),               # GRU input bias, gates (r,z,n) concatenated
    ("bh", 3 * GRU_DIM),               # GRU hidden bias
    ("wres_ci", 2 * PRED_WINDOW + 2),  # [nn_res_I | nn_res_R | nn_res_sir] cI column
    ("wres_cr", 2 * PRED_WINDOW + 2),  # cR column
    ("bres", 2 * PRED_WINDOW + 2),     # fused res-head bias
    ("h0", GRU_DIM),                   # initial GRU hidden state
]
VEC_ROW = {name: i for i, (name, _) in enumerate(VEC_LAYOUT)}
VEC_WIDTH = {name: w for name, w in VEC_LAYOUT}
VEC_MAXW = max(VEC_WIDTH.values())     # 48
VEC_NROW = len(VEC_LAYOUT)             # 14

# per-step scalar table columns: [cI, cR, I, R, N, 1/N, 0, 0]
SCAL_NCOL = 8


# ----------------------------- small helpers ---------------------------------
def _elu(x):
    return jnp.where(x > 0, x, jnp.exp(x) - 1.0)


def _leaky_relu(x):
    return jnp.where(x > 0, x, 0.01 * x)


def _gat_attend(z, a_src, a_dst, b_attn, adj_bias):
    """Dense GAT attention (block-diagonal over time).
    z: (T*NL, D); a_src/a_dst: (1, D); b_attn: (1, 1);
    adj_bias[dst, src]: 0 in-block & connected, -1e30 otherwise."""
    s_src = jnp.sum(z * a_src, axis=1, keepdims=True)        # (T*NL, 1)
    s_dst = jnp.sum(z * a_dst, axis=1, keepdims=True)        # (T*NL, 1)
    e = s_dst + jnp.transpose(s_src) + b_attn                # e[dst, src]
    e = _leaky_relu(e) + adj_bias
    m = jnp.max(e, axis=1, keepdims=True)
    p = jnp.exp(e - m)
    denom = jnp.sum(p, axis=1, keepdims=True)
    alpha = p * pl.reciprocal(denom, approx=False)           # exact; pre-pass only
    return jnp.dot(alpha, z, preferred_element_type=jnp.float32)


# ----------------------------- the kernel -------------------------------------
def _stan_kernel(dyn_ref, adjb_ref, sc_ref, wfc1_ref, wfc2_ref, wi_ref, w2_ref,
                 vecs_ref, preds_ref, hout_ref, ab_scr):
    f32 = jnp.float32
    P, G, D1, NH = PRED_WINDOW, GRU_DIM, HIDDEN1, NUM_HEADS
    T = sc_ref.shape[0]
    NL = dyn_ref.shape[0] // T

    adj_bias = adjb_ref[...]                 # (T*NL, T*NL)
    vecs = vecs_ref[...]                     # (14, 48)
    sc = sc_ref[...]                         # (T, 8)

    def vec(name):
        k, w = VEC_ROW[name], VEC_WIDTH[name]
        return vecs[k:k + 1, 0:w]            # (1, w) — static slice, lane offset 0

    bfc1, asrc1, adst1, battn1 = vec("bfc1"), vec("asrc1"), vec("adst1"), vec("battn1")
    bfc2, asrc2, adst2, battn2 = vec("bfc2"), vec("asrc2"), vec("adst2"), vec("battn2")
    bi, bh = vec("bi"), vec("bh")
    wres_ci, wres_cr, bres = vec("wres_ci"), vec("wres_cr"), vec("bres")
    h0 = vec("h0")

    # ---- pre-pass 1: GAT encoder for ALL T steps at once (block-diag mask) ----
    x = dyn_ref[...]                                                      # (T*NL, F)
    z1c = jnp.dot(x, wfc1_ref[...], preferred_element_type=f32) + bfc1    # (T*NL, NH*D1)
    heads = []
    for hd in range(NH):
        sl = slice(hd * D1, (hd + 1) * D1)
        att = _gat_attend(z1c[:, sl], asrc1[:, sl], adst1[:, sl],
                          battn1[:, hd:hd + 1], adj_bias)
        heads.append(_elu(att))
    h1c = jnp.concatenate(heads, axis=1)                                  # (T*NL, NH*D1)
    z2 = jnp.dot(h1c, wfc2_ref[...], preferred_element_type=f32) + bfc2   # (T*NL, D2)
    h2 = _elu(_gat_attend(z2, asrc2, adst2, battn2, adj_bias))            # (T*NL, D2)
    xg_rows = [jnp.max(h2[t * NL:(t + 1) * NL, :], axis=0, keepdims=True)
               for t in range(T)]
    xg_all = jnp.concatenate(xg_rows, axis=0)                             # (T, D2)

    # ---- pre-pass 2: hoist everything independent of the GRU state ----
    lane = lax.broadcasted_iota(jnp.int32, (1, 3 * G), 1)
    bh_rz = jnp.where(lane < 2 * G, bh, 0.0)     # r/z hidden biases (fold into gi)
    bh_n = bh - bh_rz                            # n-gate hidden bias (stays inside r*)
    gi_all = (jnp.dot(xg_all, wi_ref[...], preferred_element_type=f32)
              + bi + bh_rz)                                               # (T, 3G)
    res_const = sc[:, 0:1] * wres_ci + sc[:, 1:2] * wres_cr + bres        # (T, 2P+2)

    w2 = w2_ref[...]                             # (G, 3G + 2P+2) = [W_hh | W_res_h]
    h = h0                                        # (1, G) register-carried GRU state
    h0w = jnp.dot(h, w2, preferred_element_type=f32)
    gh = h0w[:, 0:3 * G] + bh_n                  # h0 @ W_hh (+ n-gate bias)

    # ---- serial GRU recurrence: only the true dependency chain remains ----
    for t in range(T):
        gi = gi_all[t:t + 1, :]
        rz = jax.nn.sigmoid(gi[:, 0:2 * G] + gh[:, 0:2 * G])              # fused (1,2G)
        r, zg = rz[:, 0:G], rz[:, G:2 * G]
        ng = jnp.tanh(gi[:, 2 * G:3 * G] + r * gh[:, 2 * G:3 * G])
        h = (1.0 - zg) * ng + zg * h                                      # (1, G)

        # One fused matmul: next step's h@W_hh and this step's res-head output.
        hw = jnp.dot(h, w2, preferred_element_type=f32)                   # (1, 3G+2P+2)
        pred = hw[:, 3 * G:3 * G + 2 * P + 2] + res_const[t:t + 1, :]     # (1, 2P+2)
        preds_ref[t:t + 1, 0:2 * P] = pred[:, 0:2 * P]     # [pred_I | pred_R], per-step
        ab_scr[t:t + 1, :] = pred[:, 2 * P:2 * P + 2]      # sir pre-activations
        if t + 1 < T:
            gh = hw[:, 0:3 * G] + bh_n

    hout_ref[...] = h

    # ---- post-pass: SIR physics rollout, batched over all T steps ----
    ab = jax.nn.sigmoid(ab_scr[...])                                      # (T, 2)
    alpha, beta = ab[:, 0:1], ab[:, 1:2]
    last_I, last_R = sc[:, 2:3], sc[:, 3:4]
    n_val, inv_n = sc[:, 4:5], sc[:, 5:6]
    dI = dR = None
    phyI, phyR = [], []
    for i in range(P):
        if i > 0:
            last_I = last_I + dI
            last_R = last_R + dR
        last_S = n_val - last_I - last_R
        dI = alpha * last_I * (last_S * inv_n) - beta * last_I
        dR = beta * last_I
        phyI.append(dI)
        phyR.append(dR)
    preds_ref[:, 2 * P:3 * P] = jnp.concatenate(phyI, axis=1)             # (T, P)
    preds_ref[:, 3 * P:4 * P] = jnp.concatenate(phyR, axis=1)             # (T, P)


# ----------------------------- input packing ----------------------------------
def _pack_inputs(dynamic, adj, cI, cR, N, Iarr, Rarr, params, h0):
    f32 = jnp.float32
    T, NL, F = dynamic.shape
    NH = NUM_HEADS

    # Block-diagonal additive adjacency bias over time: (T*NL, T*NL).
    adj01 = (adj > 0).astype(f32)
    blk = jnp.kron(jnp.eye(T, dtype=f32), adj01)
    adj_bias = jnp.where(blk > 0, 0.0, -1e30).astype(f32)

    n_val = jnp.reshape(N, ()).astype(f32)
    inv_n = (1.0 / n_val).astype(f32)
    scal = jnp.stack(
        [cI.astype(f32), cR.astype(f32), Iarr.astype(f32), Rarr.astype(f32),
         jnp.full((T,), n_val, f32), jnp.full((T,), inv_n, f32),
         jnp.zeros((T,), f32), jnp.zeros((T,), f32)], axis=1)             # (T, 8)

    # Matrices passed separately (lane offset 0 each — no lane-rotate extraction).
    wfc1 = jnp.concatenate([params["wfc1"][hd] for hd in range(NH)], axis=1).astype(f32)
    wfc2 = jnp.concatenate([params["wfc2"][hd] for hd in range(NH)], axis=0).astype(f32)
    wi = jnp.concatenate([params["wi"][k] for k in range(3)], axis=1).astype(f32)
    wh = jnp.concatenate([params["wh"][k] for k in range(3)], axis=1).astype(f32)
    w2 = jnp.concatenate([wh, params["wres_h"].astype(f32)], axis=1)      # (G, 3G+2P+2)

    # vector slab (14, 48)
    vec_srcs = {
        "bfc1": jnp.concatenate([params["bfc1"][hd] for hd in range(NH)], axis=1),
        "asrc1": jnp.concatenate([params["asrc1"][hd] for hd in range(NH)], axis=1),
        "adst1": jnp.concatenate([params["adst1"][hd] for hd in range(NH)], axis=1),
        "battn1": jnp.concatenate([params["battn1"][hd] for hd in range(NH)], axis=1),
        "bfc2": params["bfc2"], "asrc2": params["asrc2"], "adst2": params["adst2"],
        "battn2": params["battn2"],
        "bi": jnp.concatenate([params["bi"][k] for k in range(3)], axis=1),
        "bh": jnp.concatenate([params["bh"][k] for k in range(3)], axis=1),
        "wres_ci": params["wres_ci"], "wres_cr": params["wres_cr"], "bres": params["bres"],
        "h0": h0,
    }
    vrows = []
    for name, w in VEC_LAYOUT:
        v = jnp.reshape(vec_srcs[name].astype(f32), (-1,))
        vrows.append(jnp.pad(v, (0, VEC_MAXW - v.shape[0])))
    vecs = jnp.stack(vrows, axis=0)                                       # (14, 48)

    dyn = jnp.reshape(dynamic.astype(f32), (T * NL, F))                   # (T*NL, F)
    return dyn, adj_bias, scal, wfc1, wfc2, wi, w2, vecs


# ----------------------------- Pallas wrapper ----------------------------------
@jax.jit
def stan_pallas(dynamic, adj, cI, cR, N, Iarr, Rarr, params, h0):
    f32 = jnp.float32
    T = dynamic.shape[0]
    P, G = PRED_WINDOW, GRU_DIM

    dyn, adj_bias, scal, wfc1, wfc2, wi, w2, vecs = _pack_inputs(
        dynamic, adj, cI, cR, N, Iarr, Rarr, params, h0)

    def vmem_spec():
        return pl.BlockSpec(memory_space=pltpu.MemorySpace.VMEM)

    # TODO(synk): on v7x, a real batched workload (multiple graphs/sequences) should
    # add a leading grid axis with dimension_semantics=("parallel",) to use both
    # TensorCores; this single-instance forward has nothing to shard.
    preds, h_last = pl.pallas_call(
        _stan_kernel,
        in_specs=[vmem_spec() for _ in range(8)],
        out_specs=(vmem_spec(), vmem_spec()),
        out_shape=(jax.ShapeDtypeStruct((T, 4 * P), f32),
                   jax.ShapeDtypeStruct((1, G), f32)),
        scratch_shapes=[pltpu.VMEM((T, 2), f32)],
    )(dyn, adj_bias, scal, wfc1, wfc2, wi, w2, vecs)

    new_I = preds[None, :, 0:P]          # (1, T, P), matches torch permute(1, 0, 2)
    new_R = preds[None, :, P:2 * P]
    phy_I = preds[None, :, 2 * P:3 * P]
    phy_R = preds[None, :, 3 * P:4 * P]
    return new_I, new_R, phy_I, phy_R, h_last


# ----------------------------- pure-JAX reference ------------------------------
def stan_reference(dynamic, adj, cI, cR, N, Iarr, Rarr, params, h0):
    """Independent reference: per-step per-head GAT loops, 6 GRU matmuls, real divisions."""
    T = dynamic.shape[0]
    NH, D1, D2, G, P = NUM_HEADS, HIDDEN1, HIDDEN2, GRU_DIM, PRED_WINDOW
    n_val = jnp.reshape(N, (1, 1)).astype(jnp.float32)

    def gat(z, a_src, a_dst, b_attn):
        s_src = jnp.sum(z * a_src, axis=1, keepdims=True)
        s_dst = jnp.sum(z * a_dst, axis=1, keepdims=True)
        e = s_dst + jnp.transpose(s_src) + b_attn
        e = jnp.where(e > 0, e, 0.01 * e)
        e = jnp.where(adj > 0, e, -1e30)
        alpha = jax.nn.softmax(e, axis=1)
        return alpha @ z

    def lin(v, w, b):
        return v @ w + b

    h = h0.astype(jnp.float32)
    nI, nR, pI, pR = [], [], [], []
    w2_full = jnp.concatenate([params["wfc2"][hd] for hd in range(NH)], axis=0)
    for t in range(T):
        x = dynamic[t].astype(jnp.float32)
        heads = []
        for hd in range(NH):
            z1 = x @ params["wfc1"][hd] + params["bfc1"][hd]
            heads.append(_elu(gat(z1, params["asrc1"][hd], params["adst1"][hd],
                                  params["battn1"][hd])))
        h1 = jnp.concatenate(heads, axis=1)
        z2 = h1 @ w2_full + params["bfc2"]
        h2 = _elu(gat(z2, params["asrc2"], params["adst2"], params["battn2"]))
        xg = jnp.max(h2, axis=0, keepdims=True)

        r = jax.nn.sigmoid(lin(xg, params["wi"][0], params["bi"][0])
                           + lin(h, params["wh"][0], params["bh"][0]))
        zg = jax.nn.sigmoid(lin(xg, params["wi"][1], params["bi"][1])
                            + lin(h, params["wh"][1], params["bh"][1]))
        ng = jnp.tanh(lin(xg, params["wi"][2], params["bi"][2])
                      + r * lin(h, params["wh"][2], params["bh"][2]))
        h = (1.0 - zg) * ng + zg * h

        ci = jnp.reshape(cI[t], (1, 1))
        cr = jnp.reshape(cR[t], (1, 1))
        pred = h @ params["wres_h"] + ci * params["wres_ci"] + cr * params["wres_cr"] + params["bres"]
        pred_I = pred[:, 0:P]
        pred_R = pred[:, P:2 * P]
        alpha_s = jax.nn.sigmoid(pred[:, 2 * P:2 * P + 1])
        beta_s = jax.nn.sigmoid(pred[:, 2 * P + 1:2 * P + 2])

        last_I = jnp.reshape(Iarr[t], (1, 1))
        last_R = jnp.reshape(Rarr[t], (1, 1))
        dI = dR = None
        phyI_cols, phyR_cols = [], []
        for i in range(P):
            if i > 0:
                last_I = last_I + dI
                last_R = last_R + dR
            last_S = n_val - last_I - last_R
            dI = alpha_s * last_I * (last_S / n_val) - beta_s * last_I
            dR = beta_s * last_I
            phyI_cols.append(dI)
            phyR_cols.append(dR)

        nI.append(pred_I)
        nR.append(pred_R)
        pI.append(jnp.concatenate(phyI_cols, axis=1))
        pR.append(jnp.concatenate(phyR_cols, axis=1))

    stack = lambda xs: jnp.transpose(jnp.stack(xs, axis=0), (1, 0, 2))   # (1, T, P)
    return stack(nI), stack(nR), stack(pI), stack(pR), h


# ----------------------------- main --------------------------------------------
if __name__ == "__main__":
    key = jax.random.PRNGKey(0)
    keys = iter(jax.random.split(key, 32))

    def nrm(shape, scale):
        return scale * jax.random.normal(next(keys), shape, jnp.float32)

    NH, D1, D2, G, P = NUM_HEADS, HIDDEN1, HIDDEN2, GRU_DIM, PRED_WINDOW
    F, NL, T = IN_DIM, NUM_LOC, TIMESTEP

    # Deterministic synthetic parameters (shapes follow the nn.Module __init__).
    params = {
        "wfc1":  nrm((NH, F, D1), 0.6),       # layer1 fc weights (pre-transposed)
        "bfc1":  nrm((NH, 1, D1), 0.1),
        "asrc1": nrm((NH, 1, D1), 0.4),       # attn_fc weight, src half
        "adst1": nrm((NH, 1, D1), 0.4),       # attn_fc weight, dst half
        "battn1": nrm((NH, 1, 1), 0.1),
        "wfc2":  nrm((NH, D1, D2), 0.3),      # layer2 fc (per-head chunks of (NH*D1, D2))
        "bfc2":  nrm((1, D2), 0.1),
        "asrc2": nrm((1, D2), 0.3),
        "adst2": nrm((1, D2), 0.3),
        "battn2": nrm((1, 1), 0.1),
        "wi":    nrm((3, D2, G), 0.3),        # GRU W_ih split (r, z, n), pre-transposed
        "wh":    nrm((3, G, G), 0.3),         # GRU W_hh split (r, z, n)
        "bi":    nrm((3, 1, G), 0.1),
        "bh":    nrm((3, 1, G), 0.1),
        "wres_h":  nrm((G, 2 * P + 2), 0.3),  # [nn_res_I | nn_res_R | nn_res_sir], h part
        "wres_ci": nrm((1, 2 * P + 2), 0.3),  # cI column
        "wres_cr": nrm((1, 2 * P + 2), 0.3),  # cR column
        "bres":    nrm((1, 2 * P + 2), 0.1),
    }
    h0 = nrm((1, G), 0.5)   # stands in for the xavier_normal_ initial hidden state

    # Deterministic synthetic inputs.
    dynamic = nrm((T, NL, F), 1.0)
    adj = jnp.ones((NL, NL), jnp.float32)   # fully connected graph incl. self loops
    cI = 1.0 + jax.random.uniform(next(keys), (T,), jnp.float32)
    cR = 1.0 + jax.random.uniform(next(keys), (T,), jnp.float32)
    Iarr = 10.0 + 50.0 * jax.random.uniform(next(keys), (T,), jnp.float32)
    Rarr = 5.0 + 20.0 * jax.random.uniform(next(keys), (T,), jnp.float32)
    N = jnp.array([1000.0], jnp.float32)

    outs = stan_pallas(dynamic, adj, cI, cR, N, Iarr, Rarr, params, h0)
    outs = jax.block_until_ready(outs)

    refs = stan_reference(dynamic, adj, cI, cR, N, Iarr, Rarr, params, h0)
    for o, r in zip(outs, refs):
        err = float(jnp.max(jnp.abs(o - r)))
        scale = float(jnp.max(jnp.abs(r))) + 1.0
        assert err <= 1e-2 * scale, (err, scale)

    # TODO(synk): alpha_list / beta_list / *_scaled module-attribute side outputs are
    # not part of the returned tuple and are not materialized here.
    print("KERNEL_OK")
</pallas_src>

<mosaic_0001>
module attributes {stable_mosaic.version = 11 : i64} {
  func.func @_stan_kernel(%arg0: memref<48x4xf32, #tpu.memory_space<vmem>>, %arg1: memref<48x48xf32, #tpu.memory_space<vmem>>, %arg2: memref<6x8xf32, #tpu.memory_space<vmem>>, %arg3: memref<4x16xf32, #tpu.memory_space<vmem>>, %arg4: memref<16x16xf32, #tpu.memory_space<vmem>>, %arg5: memref<16x48xf32, #tpu.memory_space<vmem>>, %arg6: memref<16x58xf32, #tpu.memory_space<vmem>>, %arg7: memref<14x48xf32, #tpu.memory_space<vmem>>, %arg8: memref<6x16xf32, #tpu.memory_space<vmem>>, %arg9: memref<1x16xf32, #tpu.memory_space<vmem>>, %arg10: memref<6x2xf32, #tpu.memory_space<vmem>>) attributes {dimension_semantics = [], scalar_prefetch = 0 : i64, scratch_operands = 1 : i64, tpu.core_type = #tpu.core_type<tc>} {
    %c0 = arith.constant 0 : index
    %c0_0 = arith.constant 0 : index
    %0 = vector.load %arg1[%c0, %c0_0] : memref<48x48xf32, #tpu.memory_space<vmem>>, vector<48x48xf32>
    %c0_1 = arith.constant 0 : index
    %c0_2 = arith.constant 0 : index
    %1 = vector.load %arg7[%c0_1, %c0_2] : memref<14x48xf32, #tpu.memory_space<vmem>>, vector<14x48xf32>
    %c0_3 = arith.constant 0 : index
    %c0_4 = arith.constant 0 : index
    %2 = vector.load %arg2[%c0_3, %c0_4] : memref<6x8xf32, #tpu.memory_space<vmem>>, vector<6x8xf32>
    %3 = vector.extract_strided_slice %1 {offsets = [0, 0], sizes = [1, 16], strides = [1, 1]} : vector<14x48xf32> to vector<1x16xf32>
    %4 = vector.extract_strided_slice %1 {offsets = [1, 0], sizes = [1, 16], strides = [1, 1]} : vector<14x48xf32> to vector<1x16xf32>
    %5 = vector.extract_strided_slice %1 {offsets = [2, 0], sizes = [1, 16], strides = [1, 1]} : vector<14x48xf32> to vector<1x16xf32>
    %6 = vector.extract_strided_slice %1 {offsets = [3, 0], sizes = [1, 2], strides = [1, 1]} : vector<14x48xf32> to vector<1x2xf32>
    %7 = vector.extract_strided_slice %1 {offsets = [4, 0], sizes = [1, 16], strides = [1, 1]} : vector<14x48xf32> to vector<1x16xf32>
    %8 = vector.extract_strided_slice %1 {offsets = [5, 0], sizes = [1, 16], strides = [1, 1]} : vector<14x48xf32> to vector<1x16xf32>
    %9 = vector.extract_strided_slice %1 {offsets = [6, 0], sizes = [1, 16], strides = [1, 1]} : vector<14x48xf32> to vector<1x16xf32>
    %10 = vector.extract_strided_slice %1 {offsets = [7, 0], sizes = [1, 1], strides = [1, 1]} : vector<14x48xf32> to vector<1x1xf32>
    %11 = vector.extract_strided_slice %1 {offsets = [8, 0], sizes = [1, 48], strides = [1, 1]} : vector<14x48xf32> to vector<1x48xf32>
    %12 = vector.extract_strided_slice %1 {offsets = [9, 0], sizes = [1, 48], strides = [1, 1]} : vector<14x48xf32> to vector<1x48xf32>
    %13 = vector.extract_strided_slice %1 {offsets = [10, 0], sizes = [1, 10], strides = [1, 1]} : vector<14x48xf32> to vector<1x10xf32>
    %14 = vector.extract_strided_slice %1 {offsets = [11, 0], sizes = [1, 10], strides = [1, 1]} : vector<14x48xf32> to vector<1x10xf32>
    %15 = vector.extract_strided_slice %1 {offsets = [12, 0], sizes = [1, 10], strides = [1, 1]} : vector<14x48xf32> to vector<1x10xf32>
    %16 = vector.extract_strided_slice %1 {offsets = [13, 0], sizes = [1, 16], strides = [1, 1]} : vector<14x48xf32> to vector<1x16xf32>
    %c0_5 = arith.constant 0 : index
    %c0_6 = arith.constant 0 : index
    %17 = vector.load %arg0[%c0_5, %c0_6] : memref<48x4xf32, #tpu.memory_space<vmem>>, vector<48x4xf32>
    %c0_7 = arith.constant 0 : index
    %c0_8 = arith.constant 0 : index
    %18 = vector.load %arg3[%c0_7, %c0_8] : memref<4x16xf32, #tpu.memory_space<vmem>>, vector<4x16xf32>
    %cst = arith.constant dense<0.000000e+00> : vector<48x16xf32>
    %19 = tpu.matmul %17, %18, %cst {dimension_numbers = #tpu.dot_dimension_numbers<[1], [0], [0], [1], [0, 0, 1, 1], [], []>} : vector<48x4xf32>, vector<4x16xf32>, vector<48x16xf32> -> vector<48x16xf32>
    %20 = vector.broadcast %3 : vector<1x16xf32> to vector<48x16xf32>
    %21 = arith.addf %19, %20 : vector<48x16xf32>
    %22 = vector.extract_strided_slice %21 {offsets = [0, 0], sizes = [48, 8], strides = [1, 1]} : vector<48x16xf32> to vector<48x8xf32>
    %23 = vector.extract_strided_slice %4 {offsets = [0, 0], sizes = [1, 8], strides = [1, 1]} : vector<1x16xf32> to vector<1x8xf32>
    %24 = vector.extract_strided_slice %5 {offsets = [0, 0], sizes = [1, 8], strides = [1, 1]} : vector<1x16xf32> to vector<1x8xf32>
    %25 = vector.extract_strided_slice %6 {offsets = [0, 0], sizes = [1, 1], strides = [1, 1]} : vector<1x2xf32> to vector<1x1xf32>
    %26 = vector.broadcast %23 : vector<1x8xf32> to vector<48x8xf32>
    %27 = arith.mulf %22, %26 : vector<48x8xf32>
    %cst_9 = arith.constant dense<0.000000e+00> : vector<48xf32>
    %28 = vector.multi_reduction <add>, %27, %cst_9 [1] : vector<48x8xf32> to vector<48xf32>
    %29 = vector.shape_cast %28 : vector<48xf32> to vector<48x1xf32>
    %30 = vector.broadcast %24 : vector<1x8xf32> to vector<48x8xf32>
    %31 = arith.mulf %22, %30 : vector<48x8xf32>
    %cst_10 = arith.constant dense<0.000000e+00> : vector<48xf32>
    %32 = vector.multi_reduction <add>, %31, %cst_10 [1] : vector<48x8xf32> to vector<48xf32>
    %33 = vector.shape_cast %32 : vector<48xf32> to vector<48x1xf32>
    %34 = tpu.transpose %29, [1, 0] : vector<48x1xf32> -> vector<1x48xf32>
    %35 = vector.broadcast %33 : vector<48x1xf32> to vector<48x48xf32>
    %36 = vector.broadcast %34 : vector<1x48xf32> to vector<48x48xf32>
    %37 = arith.addf %35, %36 : vector<48x48xf32>
    %38 = vector.broadcast %25 : vector<1x1xf32> to vector<48x48xf32>
    %39 = arith.addf %37, %38 : vector<48x48xf32>
    %cst_11 = arith.constant 0.000000e+00 : f32
    %40 = vector.broadcast %cst_11 : f32 to vector<48x48xf32>
    %41 = arith.cmpf ogt, %39, %40 : vector<48x48xf32>
    %cst_12 = arith.constant 0.00999999977 : f32
    %42 = vector.broadcast %cst_12 : f32 to vector<48x48xf32>
    %43 = arith.mulf %42, %39 : vector<48x48xf32>
    %44 = arith.select %41, %39, %43 : vector<48x48xi1>, vector<48x48xf32>
    %45 = arith.addf %44, %0 : vector<48x48xf32>
    %cst_13 = arith.constant dense<0xFF800000> : vector<48xf32>
    %46 = vector.multi_reduction <maximumf>, %45, %cst_13 [1] : vector<48x48xf32> to vector<48xf32>
    %47 = vector.shape_cast %46 : vector<48xf32> to vector<48x1xf32>
    %48 = vector.broadcast %47 : vector<48x1xf32> to vector<48x48xf32>
    %49 = arith.subf %45, %48 : vector<48x48xf32>
    %50 = math.exp %49 : vector<48x48xf32>
    %cst_14 = arith.constant dense<0.000000e+00> : vector<48xf32>
    %51 = vector.multi_reduction <add>, %50, %cst_14 [1] : vector<48x48xf32> to vector<48xf32>
    %52 = vector.shape_cast %51 : vector<48xf32> to vector<48x1xf32>
    %53 = tpu.reciprocal %52 : vector<48x1xf32> -> vector<48x1xf32>
    %54 = vector.broadcast %53 : vector<48x1xf32> to vector<48x48xf32>
    %55 = arith.mulf %50, %54 : vector<48x48xf32>
    %cst_15 = arith.constant dense<0.000000e+00> : vector<48x8xf32>
    %56 = tpu.matmul %55, %22, %cst_15 {dimension_numbers = #tpu.dot_dimension_numbers<[1], [0], [0], [1], [0, 0, 1, 1], [], []>} : vector<48x48xf32>, vector<48x8xf32>, vector<48x8xf32> -> vector<48x8xf32>
    %cst_16 = arith.constant 0.000000e+00 : f32
    %57 = vector.broadcast %cst_16 : f32 to vector<48x8xf32>
    %58 = arith.cmpf ogt, %56, %57 : vector<48x8xf32>
    %59 = math.exp %56 : vector<48x8xf32>
    %cst_17 = arith.constant 1.000000e+00 : f32
    %60 = vector.broadcast %cst_17 : f32 to vector<48x8xf32>
    %61 = arith.subf %59, %60 : vector<48x8xf32>
    %62 = arith.select %58, %56, %61 : vector<48x8xi1>, vector<48x8xf32>
    %63 = vector.extract_strided_slice %21 {offsets = [0, 8], sizes = [48, 8], strides = [1, 1]} : vector<48x16xf32> to vector<48x8xf32>
    %64 = vector.extract_strided_slice %4 {offsets = [0, 8], sizes = [1, 8], strides = [1, 1]} : vector<1x16xf32> to vector<1x8xf32>
    %65 = vector.extract_strided_slice %5 {offsets = [0, 8], sizes = [1, 8], strides = [1, 1]} : vector<1x16xf32> to vector<1x8xf32>
    %66 = vector.extract_strided_slice %6 {offsets = [0, 1], sizes = [1, 1], strides = [1, 1]} : vector<1x2xf32> to vector<1x1xf32>
    %67 = vector.broadcast %64 : vector<1x8xf32> to vector<48x8xf32>
    %68 = arith.mulf %63, %67 : vector<48x8xf32>
    %cst_18 = arith.constant dense<0.000000e+00> : vector<48xf32>
    %69 = vector.multi_reduction <add>, %68, %cst_18 [1] : vector<48x8xf32> to vector<48xf32>
    %70 = vector.shape_cast %69 : vector<48xf32> to vector<48x1xf32>
    %71 = vector.broadcast %65 : vector<1x8xf32> to vector<48x8xf32>
    %72 = arith.mulf %63, %71 : vector<48x8xf32>
    %cst_19 = arith.constant dense<0.000000e+00> : vector<48xf32>
    %73 = vector.multi_reduction <add>, %72, %cst_19 [1] : vector<48x8xf32> to vector<48xf32>
    %74 = vector.shape_cast %73 : vector<48xf32> to vector<48x1xf32>
    %75 = tpu.transpose %70, [1, 0] : vector<48x1xf32> -> vector<1x48xf32>
    %76 = vector.broadcast %74 : vector<48x1xf32> to vector<48x48xf32>
    %77 = vector.broadcast %75 : vector<1x48xf32> to vector<48x48xf32>
    %78 = arith.addf %76, %77 : vector<48x48xf32>
    %79 = vector.broadcast %66 : vector<1x1xf32> to vector<48x48xf32>
    %80 = arith.addf %78, %79 : vector<48x48xf32>
    %cst_20 = arith.constant 0.000000e+00 : f32
    %81 = vector.broadcast %cst_20 : f32 to vector<48x48xf32>
    %82 = arith.cmpf ogt, %80, %81 : vector<48x48xf32>
    %cst_21 = arith.constant 0.00999999977 : f32
    %83 = vector.broadcast %cst_21 : f32 to vector<48x48xf32>
    %84 = arith.mulf %83, %80 : vector<48x48xf32>
    %85 = arith.select %82, %80, %84 : vector<48x48xi1>, vector<48x48xf32>
    %86 = arith.addf %85, %0 : vector<48x48xf32>
    %cst_22 = arith.constant dense<0xFF800000> : vector<48xf32>
    %87 = vector.multi_reduction <maximumf>, %86, %cst_22 [1] : vector<48x48xf32> to vector<48xf32>
    %88 = vector.shape_cast %87 : vector<48xf32> to vector<48x1xf32>
    %89 = vector.broadcast %88 : vector<48x1xf32> to vector<48x48xf32>
    %90 = arith.subf %86, %89 : vector<48x48xf32>
    %91 = math.exp %90 : vector<48x48xf32>
    %cst_23 = arith.constant dense<0.000000e+00> : vector<48xf32>
    %92 = vector.multi_reduction <add>, %91, %cst_23 [1] : vector<48x48xf32> to vector<48xf32>
    %93 = vector.shape_cast %92 : vector<48xf32> to vector<48x1xf32>
    %94 = tpu.reciprocal %93 : vector<48x1xf32> -> vector<48x1xf32>
    %95 = vector.broadcast %94 : vector<48x1xf32> to vector<48x48xf32>
    %96 = arith.mulf %91, %95 : vector<48x48xf32>
    %cst_24 = arith.constant dense<0.000000e+00> : vector<48x8xf32>
    %97 = tpu.matmul %96, %63, %cst_24 {dimension_numbers = #tpu.dot_dimension_numbers<[1], [0], [0], [1], [0, 0, 1, 1], [], []>} : vector<48x48xf32>, vector<48x8xf32>, vector<48x8xf32> -> vector<48x8xf32>
    %cst_25 = arith.constant 0.000000e+00 : f32
    %98 = vector.broadcast %cst_25 : f32 to vector<48x8xf32>
    %99 = arith.cmpf ogt, %97, %98 : vector<48x8xf32>
    %100 = math.exp %97 : vector<48x8xf32>
    %cst_26 = arith.constant 1.000000e+00 : f32
    %101 = vector.broadcast %cst_26 : f32 to vector<48x8xf32>
    %102 = arith.subf %100, %101 : vector<48x8xf32>
    %103 = arith.select %99, %97, %102 : vector<48x8xi1>, vector<48x8xf32>
    %104 = tpu.concatenate %62, %103 in 1 : vector<48x8xf32>, vector<48x8xf32> -> vector<48x16xf32>
    %c0_27 = arith.constant 0 : index
    %c0_28 = arith.constant 0 : index
    %105 = vector.load %arg4[%c0_27, %c0_28] : memref<16x16xf32, #tpu.memory_space<vmem>>, vector<16x16xf32>
    %cst_29 = arith.constant dense<0.000000e+00> : vector<48x16xf32>
    %106 = tpu.matmul %104, %105, %cst_29 {dimension_numbers = #tpu.dot_dimension_numbers<[1], [0], [0], [1], [0, 0, 1, 1], [], []>} : vector<48x16xf32>, vector<16x16xf32>, vector<48x16xf32> -> vector<48x16xf32>
    %107 = vector.broadcast %7 : vector<1x16xf32> to vector<48x16xf32>
    %108 = arith.addf %106, %107 : vector<48x16xf32>
    %109 = vector.broadcast %8 : vector<1x16xf32> to vector<48x16xf32>
    %110 = arith.mulf %108, %109 : vector<48x16xf32>
    %cst_30 = arith.constant dense<0.000000e+00> : vector<48xf32>
    %111 = vector.multi_reduction <add>, %110, %cst_30 [1] : vector<48x16xf32> to vector<48xf32>
    %112 = vector.shape_cast %111 : vector<48xf32> to vector<48x1xf32>
    %113 = vector.broadcast %9 : vector<1x16xf32> to vector<48x16xf32>
    %114 = arith.mulf %108, %113 : vector<48x16xf32>
    %cst_31 = arith.constant dense<0.000000e+00> : vector<48xf32>
    %115 = vector.multi_reduction <add>, %114, %cst_31 [1] : vector<48x16xf32> to vector<48xf32>
    %116 = vector.shape_cast %115 : vector<48xf32> to vector<48x1xf32>
    %117 = tpu.transpose %112, [1, 0] : vector<48x1xf32> -> vector<1x48xf32>
    %118 = vector.broadcast %116 : vector<48x1xf32> to vector<48x48xf32>
    %119 = vector.broadcast %117 : vector<1x48xf32> to vector<48x48xf32>
    %120 = arith.addf %118, %119 : vector<48x48xf32>
    %121 = vector.broadcast %10 : vector<1x1xf32> to vector<48x48xf32>
    %122 = arith.addf %120, %121 : vector<48x48xf32>
    %cst_32 = arith.constant 0.000000e+00 : f32
    %123 = vector.broadcast %cst_32 : f32 to vector<48x48xf32>
    %124 = arith.cmpf ogt, %122, %123 : vector<48x48xf32>
    %cst_33 = arith.constant 0.00999999977 : f32
    %125 = vector.broadcast %cst_33 : f32 to vector<48x48xf32>
    %126 = arith.mulf %125, %122 : vector<48x48xf32>
    %127 = arith.select %124, %122, %126 : vector<48x48xi1>, vector<48x48xf32>
    %128 = arith.addf %127, %0 : vector<48x48xf32>
    %cst_34 = arith.constant dense<0xFF800000> : vector<48xf32>
    %129 = vector.multi_reduction <maximumf>, %128, %cst_34 [1] : vector<48x48xf32> to vector<48xf32>
    %130 = vector.shape_cast %129 : vector<48xf32> to vector<48x1xf32>
    %131 = vector.broadcast %130 : vector<48x1xf32> to vector<48x48xf32>
    %132 = arith.subf %128, %131 : vector<48x48xf32>
    %133 = math.exp %132 : vector<48x48xf32>
    %cst_35 = arith.constant dense<0.000000e+00> : vector<48xf32>
    %134 = vector.multi_reduction <add>, %133, %cst_35 [1] : vector<48x48xf32> to vector<48xf32>
    %135 = vector.shape_cast %134 : vector<48xf32> to vector<48x1xf32>
    %136 = tpu.reciprocal %135 : vector<48x1xf32> -> vector<48x1xf32>
    %137 = vector.broadcast %136 : vector<48x1xf32> to vector<48x48xf32>
    %138 = arith.mulf %133, %137 : vector<48x48xf32>
    %cst_36 = arith.constant dense<0.000000e+00> : vector<48x16xf32>
    %139 = tpu.matmul %138, %108, %cst_36 {dimension_numbers = #tpu.dot_dimension_numbers<[1], [0], [0], [1], [0, 0, 1, 1], [], []>} : vector<48x48xf32>, vector<48x16xf32>, vector<48x16xf32> -> vector<48x16xf32>
    %cst_37 = arith.constant 0.000000e+00 : f32
    %140 = vector.broadcast %cst_37 : f32 to vector<48x16xf32>
    %141 = arith.cmpf ogt, %139, %140 : vector<48x16xf32>
    %142 = math.exp %139 : vector<48x16xf32>
    %cst_38 = arith.constant 1.000000e+00 : f32
    %143 = vector.broadcast %cst_38 : f32 to vector<48x16xf32>
    %144 = arith.subf %142, %143 : vector<48x16xf32>
    %145 = arith.select %141, %139, %144 : vector<48x16xi1>, vector<48x16xf32>
    %146 = vector.extract_strided_slice %145 {offsets = [0, 0], sizes = [8, 16], strides = [1, 1]} : vector<48x16xf32> to vector<8x16xf32>
    %cst_39 = arith.constant dense<0xFF800000> : vector<16xf32>
    %147 = vector.multi_reduction <maximumf>, %146, %cst_39 [0] : vector<8x16xf32> to vector<16xf32>
    %148 = vector.shape_cast %147 : vector<16xf32> to vector<1x16xf32>
    %149 = vector.extract_strided_slice %145 {offsets = [8, 0], sizes = [8, 16], strides = [1, 1]} : vector<48x16xf32> to vector<8x16xf32>
    %cst_40 = arith.constant dense<0xFF800000> : vector<16xf32>
    %150 = vector.multi_reduction <maximumf>, %149, %cst_40 [0] : vector<8x16xf32> to vector<16xf32>
    %151 = vector.shape_cast %150 : vector<16xf32> to vector<1x16xf32>
    %152 = vector.extract_strided_slice %145 {offsets = [16, 0], sizes = [8, 16], strides = [1, 1]} : vector<48x16xf32> to vector<8x16xf32>
    %cst_41 = arith.constant dense<0xFF800000> : vector<16xf32>
    %153 = vector.multi_reduction <maximumf>, %152, %cst_41 [0] : vector<8x16xf32> to vector<16xf32>
    %154 = vector.shape_cast %153 : vector<16xf32> to vector<1x16xf32>
    %155 = vector.extract_strided_slice %145 {offsets = [24, 0], sizes = [8, 16], strides = [1, 1]} : vector<48x16xf32> to vector<8x16xf32>
    %cst_42 = arith.constant dense<0xFF800000> : vector<16xf32>
    %156 = vector.multi_reduction <maximumf>, %155, %cst_42 [0] : vector<8x16xf32> to vector<16xf32>
    %157 = vector.shape_cast %156 : vector<16xf32> to vector<1x16xf32>
    %158 = vector.extract_strided_slice %145 {offsets = [32, 0], sizes = [8, 16], strides = [1, 1]} : vector<48x16xf32> to vector<8x16xf32>
    %cst_43 = arith.constant dense<0xFF800000> : vector<16xf32>
    %159 = vector.multi_reduction <maximumf>, %158, %cst_43 [0] : vector<8x16xf32> to vector<16xf32>
    %160 = vector.shape_cast %159 : vector<16xf32> to vector<1x16xf32>
    %161 = vector.extract_strided_slice %145 {offsets = [40, 0], sizes = [8, 16], strides = [1, 1]} : vector<48x16xf32> to vector<8x16xf32>
    %cst_44 = arith.constant dense<0xFF800000> : vector<16xf32>
    %162 = vector.multi_reduction <maximumf>, %161, %cst_44 [0] : vector<8x16xf32> to vector<16xf32>
    %163 = vector.shape_cast %162 : vector<16xf32> to vector<1x16xf32>
    %164 = tpu.concatenate %148, %151, %154, %157, %160, %163 in 0 : vector<1x16xf32>, vector<1x16xf32>, vector<1x16xf32>, vector<1x16xf32>, vector<1x16xf32>, vector<1x16xf32> -> vector<6x16xf32>
    %165 = tpu.iota {dimensions = array<i32: 1>} : vector<1x48xi32>
    %c32_i32 = arith.constant 32 : i32
    %166 = vector.broadcast %c32_i32 : i32 to vector<1x48xi32>
    %167 = arith.cmpi slt, %165, %166 : vector<1x48xi32>
    %cst_45 = arith.constant 0.000000e+00 : f32
    %168 = vector.broadcast %cst_45 : f32 to vector<1x48xf32>
    %169 = arith.select %167, %12, %168 : vector<1x48xi1>, vector<1x48xf32>
    %170 = arith.subf %12, %169 : vector<1x48xf32>
    %c0_46 = arith.constant 0 : index
    %c0_47 = arith.constant 0 : index
    %171 = vector.load %arg5[%c0_46, %c0_47] : memref<16x48xf32, #tpu.memory_space<vmem>>, vector<16x48xf32>
    %cst_48 = arith.constant dense<0.000000e+00> : vector<6x48xf32>
    %172 = tpu.matmul %164, %171, %cst_48 {dimension_numbers = #tpu.dot_dimension_numbers<[1], [0], [0], [1], [0, 0, 1, 1], [], []>} : vector<6x16xf32>, vector<16x48xf32>, vector<6x48xf32> -> vector<6x48xf32>
    %173 = vector.broadcast %11 : vector<1x48xf32> to vector<6x48xf32>
    %174 = arith.addf %172, %173 : vector<6x48xf32>
    %175 = vector.broadcast %169 : vector<1x48xf32> to vector<6x48xf32>
    %176 = arith.addf %174, %175 : vector<6x48xf32>
    %177 = vector.extract_strided_slice %2 {offsets = [0, 0], sizes = [6, 1], strides = [1, 1]} : vector<6x8xf32> to vector<6x1xf32>
    %178 = vector.broadcast %177 : vector<6x1xf32> to vector<6x10xf32>
    %179 = vector.broadcast %13 : vector<1x10xf32> to vector<6x10xf32>
    %180 = arith.mulf %178, %179 : vector<6x10xf32>
    %181 = vector.extract_strided_slice %2 {offsets = [0, 1], sizes = [6, 1], strides = [1, 1]} : vector<6x8xf32> to vector<6x1xf32>
    %182 = vector.broadcast %181 : vector<6x1xf32> to vector<6x10xf32>
    %183 = vector.broadcast %14 : vector<1x10xf32> to vector<6x10xf32>
    %184 = arith.mulf %182, %183 : vector<6x10xf32>
    %185 = arith.addf %180, %184 : vector<6x10xf32>
    %186 = vector.broadcast %15 : vector<1x10xf32> to vector<6x10xf32>
    %187 = arith.addf %185, %186 : vector<6x10xf32>
    %c0_49 = arith.constant 0 : index
    %c0_50 = arith.constant 0 : index
    %188 = vector.load %arg6[%c0_49, %c0_50] : memref<16x58xf32, #tpu.memory_space<vmem>>, vector<16x58xf32>
    %cst_51 = arith.constant dense<0.000000e+00> : vector<1x58xf32>
    %189 = tpu.matmul %16, %188, %cst_51 {dimension_numbers = #tpu.dot_dimension_numbers<[1], [0], [0], [1], [0, 0, 1, 1], [], []>} : vector<1x16xf32>, vector<16x58xf32>, vector<1x58xf32> -> vector<1x58xf32>
    %190 = vector.extract_strided_slice %189 {offsets = [0, 0], sizes = [1, 48], strides = [1, 1]} : vector<1x58xf32> to vector<1x48xf32>
    %191 = arith.addf %190, %170 : vector<1x48xf32>
    %192 = vector.extract_strided_slice %176 {offsets = [0, 0], sizes = [1, 48], strides = [1, 1]} : vector<6x48xf32> to vector<1x48xf32>
    %193 = vector.extract_strided_slice %192 {offsets = [0, 0], sizes = [1, 32], strides = [1, 1]} : vector<1x48xf32> to vector<1x32xf32>
    %194 = vector.extract_strided_slice %191 {offsets = [0, 0], sizes = [1, 32], strides = [1, 1]} : vector<1x48xf32> to vector<1x32xf32>
    %195 = arith.addf %193, %194 : vector<1x32xf32>
    %196 = arith.negf %195 : vector<1x32xf32>
    %197 = math.exp %196 : vector<1x32xf32>
    %cst_52 = arith.constant 1.000000e+00 : f32
    %198 = vector.broadcast %cst_52 : f32 to vector<1x32xf32>
    %199 = arith.addf %198, %197 : vector<1x32xf32>
    %200 = arith.divf %198, %199 : vector<1x32xf32>
    %201 = vector.extract_strided_slice %200 {offsets = [0, 0], sizes = [1, 16], strides = [1, 1]} : vector<1x32xf32> to vector<1x16xf32>
    %202 = vector.extract_strided_slice %200 {offsets = [0, 16], sizes = [1, 16], strides = [1, 1]} : vector<1x32xf32> to vector<1x16xf32>
    %203 = vector.extract_strided_slice %192 {offsets = [0, 32], sizes = [1, 16], strides = [1, 1]} : vector<1x48xf32> to vector<1x16xf32>
    %204 = vector.extract_strided_slice %191 {offsets = [0, 32], sizes = [1, 16], strides = [1, 1]} : vector<1x48xf32> to vector<1x16xf32>
    %205 = arith.mulf %201, %204 : vector<1x16xf32>
    %206 = arith.addf %203, %205 : vector<1x16xf32>
    %207 = math.tanh %206 : vector<1x16xf32>
    %cst_53 = arith.constant 1.000000e+00 : f32
    %208 = vector.broadcast %cst_53 : f32 to vector<1x16xf32>
    %209 = arith.subf %208, %202 : vector<1x16xf32>
    %210 = arith.mulf %209, %207 : vector<1x16xf32>
    %211 = arith.mulf %202, %16 : vector<1x16xf32>
    %212 = arith.addf %210, %211 : vector<1x16xf32>
    %cst_54 = arith.constant dense<0.000000e+00> : vector<1x58xf32>
    %213 = tpu.matmul %212, %188, %cst_54 {dimension_numbers = #tpu.dot_dimension_numbers<[1], [0], [0], [1], [0, 0, 1, 1], [], []>} : vector<1x16xf32>, vector<16x58xf32>, vector<1x58xf32> -> vector<1x58xf32>
    %214 = vector.extract_strided_slice %213 {offsets = [0, 48], sizes = [1, 10], strides = [1, 1]} : vector<1x58xf32> to vector<1x10xf32>
    %215 = vector.extract_strided_slice %187 {offsets = [0, 0], sizes = [1, 10], strides = [1, 1]} : vector<6x10xf32> to vector<1x10xf32>
    %216 = arith.addf %214, %215 : vector<1x10xf32>
    %217 = vector.extract_strided_slice %216 {offsets = [0, 0], sizes = [1, 8], strides = [1, 1]} : vector<1x10xf32> to vector<1x8xf32>
    %c0_55 = arith.constant 0 : index
    %c0_56 = arith.constant 0 : index
    %218 = vector.load %arg8[%c0_55, %c0_56] : memref<6x16xf32, #tpu.memory_space<vmem>>, vector<1x8xf32>
    tpu.vector_store %arg8[%c0_55, %c0_56], %217 {strides = array<i32>} : memref<6x16xf32, #tpu.memory_space<vmem>>, vector<1x8xf32>,
    %219 = vector.extract_strided_slice %216 {offsets = [0, 8], sizes = [1, 2], strides = [1, 1]} : vector<1x10xf32> to vector<1x2xf32>
    %c0_57 = arith.constant 0 : index
    %c0_58 = arith.constant 0 : index
    %220 = vector.load %arg10[%c0_57, %c0_58] : memref<6x2xf32, #tpu.memory_space<vmem>>, vector<1x2xf32>
    tpu.vector_store %arg10[%c0_57, %c0_58], %219 {strides = array<i32>} : memref<6x2xf32, #tpu.memory_space<vmem>>, vector<1x2xf32>,
    %221 = vector.extract_strided_slice %213 {offsets = [0, 0], sizes = [1, 48], strides = [1, 1]} : vector<1x58xf32> to vector<1x48xf32>
    %222 = arith.addf %221, %170 : vector<1x48xf32>
    %223 = vector.extract_strided_slice %176 {offsets = [1, 0], sizes = [1, 48], strides = [1, 1]} : vector<6x48xf32> to vector<1x48xf32>
    %224 = vector.extract_strided_slice %223 {offsets = [0, 0], sizes = [1, 32], strides = [1, 1]} : vector<1x48xf32> to vector<1x32xf32>
    %225 = vector.extract_strided_slice %222 {offsets = [0, 0], sizes = [1, 32], strides = [1, 1]} : vector<1x48xf32> to vector<1x32xf32>
    %226 = arith.addf %224, %225 : vector<1x32xf32>
    %227 = arith.negf %226 : vector<1x32xf32>
    %228 = math.exp %227 : vector<1x32xf32>
    %cst_59 = arith.constant 1.000000e+00 : f32
    %229 = vector.broadcast %cst_59 : f32 to vector<1x32xf32>
    %230 = arith.addf %229, %228 : vector<1x32xf32>
    %231 = arith.divf %229, %230 : vector<1x32xf32>
    %232 = vector.extract_strided_slice %231 {offsets = [0, 0], sizes = [1, 16], strides = [1, 1]} : vector<1x32xf32> to vector<1x16xf32>
    %233 = vector.extract_strided_slice %231 {offsets = [0, 16], sizes = [1, 16], strides = [1, 1]} : vector<1x32xf32> to vector<1x16xf32>
    %234 = vector.extract_strided_slice %223 {offsets = [0, 32], sizes = [1, 16], strides = [1, 1]} : vector<1x48xf32> to vector<1x16xf32>
    %235 = vector.extract_strided_slice %222 {offsets = [0, 32], sizes = [1, 16], strides = [1, 1]} : vector<1x48xf32> to vector<1x16xf32>
    %236 = arith.mulf %232, %235 : vector<1x16xf32>
    %237 = arith.addf %234, %236 : vector<1x16xf32>
    %238 = math.tanh %237 : vector<1x16xf32>
    %cst_60 = arith.constant 1.000000e+00 : f32
    %239 = vector.broadcast %cst_60 : f32 to vector<1x16xf32>
    %240 = arith.subf %239, %233 : vector<1x16xf32>
    %241 = arith.mulf %240, %238 : vector<1x16xf32>
    %242 = arith.mulf %233, %212 : vector<1x16xf32>
    %243 = arith.addf %241, %242 : vector<1x16xf32>
    %cst_61 = arith.constant dense<0.000000e+00> : vector<1x58xf32>
    %244 = tpu.matmul %243, %188, %cst_61 {dimension_numbers = #tpu.dot_dimension_numbers<[1], [0], [0], [1], [0, 0, 1, 1], [], []>} : vector<1x16xf32>, vector<16x58xf32>, vector<1x58xf32> -> vector<1x58xf32>
    %245 = vector.extract_strided_slice %244 {offsets = [0, 48], sizes = [1, 10], strides = [1, 1]} : vector<1x58xf32> to vector<1x10xf32>
    %246 = vector.extract_strided_slice %187 {offsets = [1, 0], sizes = [1, 10], strides = [1, 1]} : vector<6x10xf32> to vector<1x10xf32>
    %247 = arith.addf %245, %246 : vector<1x10xf32>
    %248 = vector.extract_strided_slice %247 {offsets = [0, 0], sizes = [1, 8], strides = [1, 1]} : vector<1x10xf32> to vector<1x8xf32>
    %c1 = arith.constant 1 : index
    %c0_62 = arith.constant 0 : index
    %249 = vector.load %arg8[%c1, %c0_62] : memref<6x16xf32, #tpu.memory_space<vmem>>, vector<1x8xf32>
    tpu.vector_store %arg8[%c1, %c0_62], %248 {strides = array<i32>} : memref<6x16xf32, #tpu.memory_space<vmem>>, vector<1x8xf32>,
    %250 = vector.extract_strided_slice %247 {offsets = [0, 8], sizes = [1, 2], strides = [1, 1]} : vector<1x10xf32> to vector<1x2xf32>
    %c1_63 = arith.constant 1 : index
    %c0_64 = arith.constant 0 : index
    %251 = vector.load %arg10[%c1_63, %c0_64] : memref<6x2xf32, #tpu.memory_space<vmem>>, vector<1x2xf32>
    tpu.vector_store %arg10[%c1_63, %c0_64], %250 {strides = array<i32>} : memref<6x2xf32, #tpu.memory_space<vmem>>, vector<1x2xf32>,
    %252 = vector.extract_strided_slice %244 {offsets = [0, 0], sizes = [1, 48], strides = [1, 1]} : vector<1x58xf32> to vector<1x48xf32>
    %253 = arith.addf %252, %170 : vector<1x48xf32>
    %254 = vector.extract_strided_slice %176 {offsets = [2, 0], sizes = [1, 48], strides = [1, 1]} : vector<6x48xf32> to vector<1x48xf32>
    %255 = vector.extract_strided_slice %254 {offsets = [0, 0], sizes = [1, 32], strides = [1, 1]} : vector<1x48xf32> to vector<1x32xf32>
    %256 = vector.extract_strided_slice %253 {offsets = [0, 0], sizes = [1, 32], strides = [1, 1]} : vector<1x48xf32> to vector<1x32xf32>
    %257 = arith.addf %255, %256 : vector<1x32xf32>
    %258 = arith.negf %257 : vector<1x32xf32>
    %259 = math.exp %258 : vector<1x32xf32>
    %cst_65 = arith.constant 1.000000e+00 : f32
    %260 = vector.broadcast %cst_65 : f32 to vector<1x32xf32>
    %261 = arith.addf %260, %259 : vector<1x32xf32>
    %262 = arith.divf %260, %261 : vector<1x32xf32>
    %263 = vector.extract_strided_slice %262 {offsets = [0, 0], sizes = [1, 16], strides = [1, 1]} : vector<1x32xf32> to vector<1x16xf32>
    %264 = vector.extract_strided_slice %262 {offsets = [0, 16], sizes = [1, 16], strides = [1, 1]} : vector<1x32xf32> to vector<1x16xf32>
    %265 = vector.extract_strided_slice %254 {offsets = [0, 32], sizes = [1, 16], strides = [1, 1]} : vector<1x48xf32> to vector<1x16xf32>
    %266 = vector.extract_strided_slice %253 {offsets = [0, 32], sizes = [1, 16], strides = [1, 1]} : vector<1x48xf32> to vector<1x16xf32>
    %267 = arith.mulf %263, %266 : vector<1x16xf32>
    %268 = arith.addf %265, %267 : vector<1x16xf32>
    %269 = math.tanh %268 : vector<1x16xf32>
    %cst_66 = arith.constant 1.000000e+00 : f32
    %270 = vector.broadcast %cst_66 : f32 to vector<1x16xf32>
    %271 = arith.subf %270, %264 : vector<1x16xf32>
    %272 = arith.mulf %271, %269 : vector<1x16xf32>
    %273 = arith.mulf %264, %243 : vector<1x16xf32>
    %274 = arith.addf %272, %273 : vector<1x16xf32>
    %cst_67 = arith.constant dense<0.000000e+00> : vector<1x58xf32>
    %275 = tpu.matmul %274, %188, %cst_67 {dimension_numbers = #tpu.dot_dimension_numbers<[1], [0], [0], [1], [0, 0, 1, 1], [], []>} : vector<1x16xf32>, vector<16x58xf32>, vector<1x58xf32> -> vector<1x58xf32>
    %276 = vector.extract_strided_slice %275 {offsets = [0, 48], sizes = [1, 10], strides = [1, 1]} : vector<1x58xf32> to vector<1x10xf32>
    %277 = vector.extract_strided_slice %187 {offsets = [2, 0], sizes = [1, 10], strides = [1, 1]} : vector<6x10xf32> to vector<1x10xf32>
    %278 = arith.addf %276, %277 : vector<1x10xf32>
    %279 = vector.extract_strided_slice %278 {offsets = [0, 0], sizes = [1, 8], strides = [1, 1]} : vector<1x10xf32> to vector<1x8xf32>
    %c2 = arith.constant 2 : index
    %c0_68 = arith.constant 0 : index
    %280 = vector.load %arg8[%c2, %c0_68] : memref<6x16xf32, #tpu.memory_space<vmem>>, vector<1x8xf32>
    tpu.vector_store %arg8[%c2, %c0_68], %279 {strides = array<i32>} : memref<6x16xf32, #tpu.memory_space<vmem>>, vector<1x8xf32>,
    %281 = vector.extract_strided_slice %278 {offsets = [0, 8], sizes = [1, 2], strides = [1, 1]} : vector<1x10xf32> to vector<1x2xf32>
    %c2_69 = arith.constant 2 : index
    %c0_70 = arith.constant 0 : index
    %282 = vector.load %arg10[%c2_69, %c0_70] : memref<6x2xf32, #tpu.memory_space<vmem>>, vector<1x2xf32>
    tpu.vector_store %arg10[%c2_69, %c0_70], %281 {strides = array<i32>} : memref<6x2xf32, #tpu.memory_space<vmem>>, vector<1x2xf32>,
    %283 = vector.extract_strided_slice %275 {offsets = [0, 0], sizes = [1, 48], strides = [1, 1]} : vector<1x58xf32> to vector<1x48xf32>
    %284 = arith.addf %283, %170 : vector<1x48xf32>
    %285 = vector.extract_strided_slice %176 {offsets = [3, 0], sizes = [1, 48], strides = [1, 1]} : vector<6x48xf32> to vector<1x48xf32>
    %286 = vector.extract_strided_slice %285 {offsets = [0, 0], sizes = [1, 32], strides = [1, 1]} : vector<1x48xf32> to vector<1x32xf32>
    %287 = vector.extract_strided_slice %284 {offsets = [0, 0], sizes = [1, 32], strides = [1, 1]} : vector<1x48xf32> to vector<1x32xf32>
    %288 = arith.addf %286, %287 : vector<1x32xf32>
    %289 = arith.negf %288 : vector<1x32xf32>
    %290 = math.exp %289 : vector<1x32xf32>
    %cst_71 = arith.constant 1.000000e+00 : f32
    %291 = vector.broadcast %cst_71 : f32 to vector<1x32xf32>
    %292 = arith.addf %291, %290 : vector<1x32xf32>
    %293 = arith.divf %291, %292 : vector<1x32xf32>
    %294 = vector.extract_strided_slice %293 {offsets = [0, 0], sizes = [1, 16], strides = [1, 1]} : vector<1x32xf32> to vector<1x16xf32>
    %295 = vector.extract_strided_slice %293 {offsets = [0, 16], sizes = [1, 16], strides = [1, 1]} : vector<1x32xf32> to vector<1x16xf32>
    %296 = vector.extract_strided_slice %285 {offsets = [0, 32], sizes = [1, 16], strides = [1, 1]} : vector<1x48xf32> to vector<1x16xf32>
    %297 = vector.extract_strided_slice %284 {offsets = [0, 32], sizes = [1, 16], strides = [1, 1]} : vector<1x48xf32> to vector<1x16xf32>
    %298 = arith.mulf %294, %297 : vector<1x16xf32>
    %299 = arith.addf %296, %298 : vector<1x16xf32>
    %300 = math.tanh %299 : vector<1x16xf32>
    %cst_72 = arith.constant 1.000000e+00 : f32
    %301 = vector.broadcast %cst_72 : f32 to vector<1x16xf32>
    %302 = arith.subf %301, %295 : vector<1x16xf32>
    %303 = arith.mulf %302, %300 : vector<1x16xf32>
    %304 = arith.mulf %295, %274 : vector<1x16xf32>
    %305 = arith.addf %303, %304 : vector<1x16xf32>
    %cst_73 = arith.constant dense<0.000000e+00> : vector<1x58xf32>
    %306 = tpu.matmul %305, %188, %cst_73 {dimension_numbers = #tpu.dot_dimension_numbers<[1], [0], [0], [1], [0, 0, 1, 1], [], []>} : vector<1x16xf32>, vector<16x58xf32>, vector<1x58xf32> -> vector<1x58xf32>
    %307 = vector.extract_strided_slice %306 {offsets = [0, 48], sizes = [1, 10], strides = [1, 1]} : vector<1x58xf32> to vector<1x10xf32>
    %308 = vector.extract_strided_slice %187 {offsets = [3, 0], sizes = [1, 10], strides = [1, 1]} : vector<6x10xf32> to vector<1x10xf32>
    %309 = arith.addf %307, %308 : vector<1x10xf32>
    %310 = vector.extract_strided_slice %309 {offsets = [0, 0], sizes = [1, 8], strides = [1, 1]} : vector<1x10xf32> to vector<1x8xf32>
    %c3 = arith.constant 3 : index
    %c0_74 = arith.constant 0 : index
    %311 = vector.load %arg8[%c3, %c0_74] : memref<6x16xf32, #tpu.memory_space<vmem>>, vector<1x8xf32>
    tpu.vector_store %arg8[%c3, %c0_74], %310 {strides = array<i32>} : memref<6x16xf32, #tpu.memory_space<vmem>>, vector<1x8xf32>,
    %312 = vector.extract_strided_slice %309 {offsets = [0, 8], sizes = [1, 2], strides = [1, 1]} : vector<1x10xf32> to vector<1x2xf32>
    %c3_75 = arith.constant 3 : index
    %c0_76 = arith.constant 0 : index
    %313 = vector.load %arg10[%c3_75, %c0_76] : memref<6x2xf32, #tpu.memory_space<vmem>>, vector<1x2xf32>
    tpu.vector_store %arg10[%c3_75, %c0_76], %312 {strides = array<i32>} : memref<6x2xf32, #tpu.memory_space<vmem>>, vector<1x2xf32>,
    %314 = vector.extract_strided_slice %306 {offsets = [0, 0], sizes = [1, 48], strides = [1, 1]} : vector<1x58xf32> to vector<1x48xf32>
    %315 = arith.addf %314, %170 : vector<1x48xf32>
    %316 = vector.extract_strided_slice %176 {offsets = [4, 0], sizes = [1, 48], strides = [1, 1]} : vector<6x48xf32> to vector<1x48xf32>
    %317 = vector.extract_strided_slice %316 {offsets = [0, 0], sizes = [1, 32], strides = [1, 1]} : vector<1x48xf32> to vector<1x32xf32>
    %318 = vector.extract_strided_slice %315 {offsets = [0, 0], sizes = [1, 32], strides = [1, 1]} : vector<1x48xf32> to vector<1x32xf32>
    %319 = arith.addf %317, %318 : vector<1x32xf32>
    %320 = arith.negf %319 : vector<1x32xf32>
    %321 = math.exp %320 : vector<1x32xf32>
    %cst_77 = arith.constant 1.000000e+00 : f32
    %322 = vector.broadcast %cst_77 : f32 to vector<1x32xf32>
    %323 = arith.addf %322, %321 : vector<1x32xf32>
    %324 = arith.divf %322, %323 : vector<1x32xf32>
    %325 = vector.extract_strided_slice %324 {offsets = [0, 0], sizes = [1, 16], strides = [1, 1]} : vector<1x32xf32> to vector<1x16xf32>
    %326 = vector.extract_strided_slice %324 {offsets = [0, 16], sizes = [1, 16], strides = [1, 1]} : vector<1x32xf32> to vector<1x16xf32>
    %327 = vector.extract_strided_slice %316 {offsets = [0, 32], sizes = [1, 16], strides = [1, 1]} : vector<1x48xf32> to vector<1x16xf32>
    %328 = vector.extract_strided_slice %315 {offsets = [0, 32], sizes = [1, 16], strides = [1, 1]} : vector<1x48xf32> to vector<1x16xf32>
    %329 = arith.mulf %325, %328 : vector<1x16xf32>
    %330 = arith.addf %327, %329 : vector<1x16xf32>
    %331 = math.tanh %330 : vector<1x16xf32>
    %cst_78 = arith.constant 1.000000e+00 : f32
    %332 = vector.broadcast %cst_78 : f32 to vector<1x16xf32>
    %333 = arith.subf %332, %326 : vector<1x16xf32>
    %334 = arith.mulf %333, %331 : vector<1x16xf32>
    %335 = arith.mulf %326, %305 : vector<1x16xf32>
    %336 = arith.addf %334, %335 : vector<1x16xf32>
    %cst_79 = arith.constant dense<0.000000e+00> : vector<1x58xf32>
    %337 = tpu.matmul %336, %188, %cst_79 {dimension_numbers = #tpu.dot_dimension_numbers<[1], [0], [0], [1], [0, 0, 1, 1], [], []>} : vector<1x16xf32>, vector<16x58xf32>, vector<1x58xf32> -> vector<1x58xf32>
    %338 = vector.extract_strided_slice %337 {offsets = [0, 48], sizes = [1, 10], strides = [1, 1]} : vector<1x58xf32> to vector<1x10xf32>
    %339 = vector.extract_strided_slice %187 {offsets = [4, 0], sizes = [1, 10], strides = [1, 1]} : vector<6x10xf32> to vector<1x10xf32>
    %340 = arith.addf %338, %339 : vector<1x10xf32>
    %341 = vector.extract_strided_slice %340 {offsets = [0, 0], sizes = [1, 8], strides = [1, 1]} : vector<1x10xf32> to vector<1x8xf32>
    %c4 = arith.constant 4 : index
    %c0_80 = arith.constant 0 : index
    %342 = vector.load %arg8[%c4, %c0_80] : memref<6x16xf32, #tpu.memory_space<vmem>>, vector<1x8xf32>
    tpu.vector_store %arg8[%c4, %c0_80], %341 {strides = array<i32>} : memref<6x16xf32, #tpu.memory_space<vmem>>, vector<1x8xf32>,
    %343 = vector.extract_strided_slice %340 {offsets = [0, 8], sizes = [1, 2], strides = [1, 1]} : vector<1x10xf32> to vector<1x2xf32>
    %c4_81 = arith.constant 4 : index
    %c0_82 = arith.constant 0 : index
    %344 = vector.load %arg10[%c4_81, %c0_82] : memref<6x2xf32, #tpu.memory_space<vmem>>, vector<1x2xf32>
    tpu.vector_store %arg10[%c4_81, %c0_82], %343 {strides = array<i32>} : memref<6x2xf32, #tpu.memory_space<vmem>>, vector<1x2xf32>,
    %345 = vector.extract_strided_slice %337 {offsets = [0, 0], sizes = [1, 48], strides = [1, 1]} : vector<1x58xf32> to vector<1x48xf32>
    %346 = arith.addf %345, %170 : vector<1x48xf32>
    %347 = vector.extract_strided_slice %176 {offsets = [5, 0], sizes = [1, 48], strides = [1, 1]} : vector<6x48xf32> to vector<1x48xf32>
    %348 = vector.extract_strided_slice %347 {offsets = [0, 0], sizes = [1, 32], strides = [1, 1]} : vector<1x48xf32> to vector<1x32xf32>
    %349 = vector.extract_strided_slice %346 {offsets = [0, 0], sizes = [1, 32], strides = [1, 1]} : vector<1x48xf32> to vector<1x32xf32>
    %350 = arith.addf %348, %349 : vector<1x32xf32>
    %351 = arith.negf %350 : vector<1x32xf32>
    %352 = math.exp %351 : vector<1x32xf32>
    %cst_83 = arith.constant 1.000000e+00 : f32
    %353 = vector.broadcast %cst_83 : f32 to vector<1x32xf32>
    %354 = arith.addf %353, %352 : vector<1x32xf32>
    %355 = arith.divf %353, %354 : vector<1x32xf32>
    %356 = vector.extract_strided_slice %355 {offsets = [0, 0], sizes = [1, 16], strides = [1, 1]} : vector<1x32xf32> to vector<1x16xf32>
    %357 = vector.extract_strided_slice %355 {offsets = [0, 16], sizes = [1, 16], strides = [1, 1]} : vector<1x32xf32> to vector<1x16xf32>
    %358 = vector.extract_strided_slice %347 {offsets = [0, 32], sizes = [1, 16], strides = [1, 1]} : vector<1x48xf32> to vector<1x16xf32>
    %359 = vector.extract_strided_slice %346 {offsets = [0, 32], sizes = [1, 16], strides = [1, 1]} : vector<1x48xf32> to vector<1x16xf32>
    %360 = arith.mulf %356, %359 : vector<1x16xf32>
    %361 = arith.addf %358, %360 : vector<1x16xf32>
    %362 = math.tanh %361 : vector<1x16xf32>
    %cst_84 = arith.constant 1.000000e+00 : f32
    %363 = vector.broadcast %cst_84 : f32 to vector<1x16xf32>
    %364 = arith.subf %363, %357 : vector<1x16xf32>
    %365 = arith.mulf %364, %362 : vector<1x16xf32>
    %366 = arith.mulf %357, %336 : vector<1x16xf32>
    %367 = arith.addf %365, %366 : vector<1x16xf32>
    %cst_85 = arith.constant dense<0.000000e+00> : vector<1x58xf32>
    %368 = tpu.matmul %367, %188, %cst_85 {dimension_numbers = #tpu.dot_dimension_numbers<[1], [0], [0], [1], [0, 0, 1, 1], [], []>} : vector<1x16xf32>, vector<16x58xf32>, vector<1x58xf32> -> vector<1x58xf32>
    %369 = vector.extract_strided_slice %368 {offsets = [0, 48], sizes = [1, 10], strides = [1, 1]} : vector<1x58xf32> to vector<1x10xf32>
    %370 = vector.extract_strided_slice %187 {offsets = [5, 0], sizes = [1, 10], strides = [1, 1]} : vector<6x10xf32> to vector<1x10xf32>
    %371 = arith.addf %369, %370 : vector<1x10xf32>
    %372 = vector.extract_strided_slice %371 {offsets = [0, 0], sizes = [1, 8], strides = [1, 1]} : vector<1x10xf32> to vector<1x8xf32>
    %c5 = arith.constant 5 : index
    %c0_86 = arith.constant 0 : index
    %373 = vector.load %arg8[%c5, %c0_86] : memref<6x16xf32, #tpu.memory_space<vmem>>, vector<1x8xf32>
    tpu.vector_store %arg8[%c5, %c0_86], %372 {strides = array<i32>} : memref<6x16xf32, #tpu.memory_space<vmem>>, vector<1x8xf32>,
    %374 = vector.extract_strided_slice %371 {offsets = [0, 8], sizes = [1, 2], strides = [1, 1]} : vector<1x10xf32> to vector<1x2xf32>
    %c5_87 = arith.constant 5 : index
    %c0_88 = arith.constant 0 : index
    %375 = vector.load %arg10[%c5_87, %c0_88] : memref<6x2xf32, #tpu.memory_space<vmem>>, vector<1x2xf32>
    tpu.vector_store %arg10[%c5_87, %c0_88], %374 {strides = array<i32>} : memref<6x2xf32, #tpu.memory_space<vmem>>, vector<1x2xf32>,
    %c0_89 = arith.constant 0 : index
    %c0_90 = arith.constant 0 : index
    %376 = vector.load %arg9[%c0_89, %c0_90] : memref<1x16xf32, #tpu.memory_space<vmem>>, vector<1x16xf32>
    tpu.vector_store %arg9[%c0_89, %c0_90], %367 {strides = array<i32>} : memref<1x16xf32, #tpu.memory_space<vmem>>, vector<1x16xf32>,
    %c0_91 = arith.constant 0 : index
    %c0_92 = arith.constant 0 : index
    %377 = vector.load %arg10[%c0_91, %c0_92] : memref<6x2xf32, #tpu.memory_space<vmem>>, vector<6x2xf32>
    %378 = arith.negf %377 : vector<6x2xf32>
    %379 = math.exp %378 : vector<6x2xf32>
    %cst_93 = arith.constant 1.000000e+00 : f32
    %380 = vector.broadcast %cst_93 : f32 to vector<6x2xf32>
    %381 = arith.addf %380, %379 : vector<6x2xf32>
    %382 = arith.divf %380, %381 : vector<6x2xf32>
    %383 = vector.extract_strided_slice %382 {offsets = [0, 0], sizes = [6, 1], strides = [1, 1]} : vector<6x2xf32> to vector<6x1xf32>
    %384 = vector.extract_strided_slice %382 {offsets = [0, 1], sizes = [6, 1], strides = [1, 1]} : vector<6x2xf32> to vector<6x1xf32>
    %385 = vector.extract_strided_slice %2 {offsets = [0, 2], sizes = [6, 1], strides = [1, 1]} : vector<6x8xf32> to vector<6x1xf32>
    %386 = vector.extract_strided_slice %2 {offsets = [0, 3], sizes = [6, 1], strides = [1, 1]} : vector<6x8xf32> to vector<6x1xf32>
    %387 = vector.extract_strided_slice %2 {offsets = [0, 4], sizes = [6, 1], strides = [1, 1]} : vector<6x8xf32> to vector<6x1xf32>
    %388 = vector.extract_strided_slice %2 {offsets = [0, 5], sizes = [6, 1], strides = [1, 1]} : vector<6x8xf32> to vector<6x1xf32>
    %389 = arith.subf %387, %385 : vector<6x1xf32>
    %390 = arith.subf %389, %386 : vector<6x1xf32>
    %391 = arith.mulf %383, %385 : vector<6x1xf32>
    %392 = arith.mulf %390, %388 : vector<6x1xf32>
    %393 = arith.mulf %391, %392 : vector<6x1xf32>
    %394 = arith.mulf %384, %385 : vector<6x1xf32>
    %395 = arith.subf %393, %394 : vector<6x1xf32>
    %396 = arith.mulf %384, %385 : vector<6x1xf32>
    %397 = arith.addf %385, %395 : vector<6x1xf32>
    %398 = arith.addf %386, %396 : vector<6x1xf32>
    %399 = arith.subf %387, %397 : vector<6x1xf32>
    %400 = arith.subf %399, %398 : vector<6x1xf32>
    %401 = arith.mulf %383, %397 : vector<6x1xf32>
    %402 = arith.mulf %400, %388 : vector<6x1xf32>
    %403 = arith.mulf %401, %402 : vector<6x1xf32>
    %404 = arith.mulf %384, %397 : vector<6x1xf32>
    %405 = arith.subf %403, %404 : vector<6x1xf32>
    %406 = arith.mulf %384, %397 : vector<6x1xf32>
    %407 = arith.addf %397, %405 : vector<6x1xf32>
    %408 = arith.addf %398, %406 : vector<6x1xf32>
    %409 = arith.subf %387, %407 : vector<6x1xf32>
    %410 = arith.subf %409, %408 : vector<6x1xf32>
    %411 = arith.mulf %383, %407 : vector<6x1xf32>
    %412 = arith.mulf %410, %388 : vector<6x1xf32>
    %413 = arith.mulf %411, %412 : vector<6x1xf32>
    %414 = arith.mulf %384, %407 : vector<6x1xf32>
    %415 = arith.subf %413, %414 : vector<6x1xf32>
    %416 = arith.mulf %384, %407 : vector<6x1xf32>
    %417 = arith.addf %407, %415 : vector<6x1xf32>
    %418 = arith.addf %408, %416 : vector<6x1xf32>
    %419 = arith.subf %387, %417 : vector<6x1xf32>
    %420 = arith.subf %419, %418 : vector<6x1xf32>
    %421 = arith.mulf %383, %417 : vector<6x1xf32>
    %422 = arith.mulf %420, %388 : vector<6x1xf32>
    %423 = arith.mulf %421, %422 : vector<6x1xf32>
    %424 = arith.mulf %384, %417 : vector<6x1xf32>
    %425 = arith.subf %423, %424 : vector<6x1xf32>
    %426 = arith.mulf %384, %417 : vector<6x1xf32>
    %427 = tpu.concatenate %395, %405, %415, %425 in 1 : vector<6x1xf32>, vector<6x1xf32>, vector<6x1xf32>, vector<6x1xf32> -> vector<6x4xf32>
    %c0_94 = arith.constant 0 : index
    %c8 = arith.constant 8 : index
    %428 = vector.load %arg8[%c0_94, %c8] : memref<6x16xf32, #tpu.memory_space<vmem>>, vector<6x4xf32>
    tpu.vector_store %arg8[%c0_94, %c8], %427 {strides = array<i32>} : memref<6x16xf32, #tpu.memory_space<vmem>>, vector<6x4xf32>,
    %429 = tpu.concatenate %396, %406, %416, %426 in 1 : vector<6x1xf32>, vector<6x1xf32>, vector<6x1xf32>, vector<6x1xf32> -> vector<6x4xf32>
    %c0_95 = arith.constant 0 : index
    %c12 = arith.constant 12 : index
    %430 = vector.load %arg8[%c0_95, %c12] : memref<6x16xf32, #tpu.memory_space<vmem>>, vector<6x4xf32>
    tpu.vector_store %arg8[%c0_95, %c12], %429 {strides = array<i32>} : memref<6x16xf32, #tpu.memory_space<vmem>>, vector<6x4xf32>,
    return
  }
}

</mosaic_0001>

<llo_original>
// kernel: stan_pallas.1
$region0: #{stan_pallas.1}
  #allocation0 [shape = 'u32[]', space=smem, size = 0x4, offset = 0x4, fixed_abs, tag = 'smem constant byte address 0x4 - core index']
  #allocation1 [shape = 'u32[144,128]{1,0:T(1,128)}', space=vmem, size = 0x12000, scoped, tag = 'internal scratch']
  #allocation2 [shape = 'f32[6,2]{1,0:T(8,128)}', space=vmem, size = 0x1000, scoped, tag = 'scratch operand']
  %s0 = inlined_call_operand.vmem [shape: f32[48,4], index: 0, kind: input, shape index: {}]
  %s1 = inlined_call_operand.vmem [shape: f32[48,48], index: 1, kind: input, shape index: {}]
  %s2 = inlined_call_operand.vmem [shape: f32[6,8], index: 2, kind: input, shape index: {}]
  %s3 = inlined_call_operand.vmem [shape: f32[4,16], index: 3, kind: input, shape index: {}]
  %s4 = inlined_call_operand.vmem [shape: f32[16,16], index: 4, kind: input, shape index: {}]
  %s5 = inlined_call_operand.vmem [shape: f32[16,48], index: 5, kind: input, shape index: {}]
  %s6 = inlined_call_operand.vmem [shape: f32[16,58], index: 6, kind: input, shape index: {}]
  %s7 = inlined_call_operand.vmem [shape: f32[14,48], index: 7, kind: input, shape index: {}]
  %s8 = inlined_call_operand.vmem [shape: f32[6,16], index: 8, kind: output, shape index: {0}]
  %s9 = inlined_call_operand.hbm [shape: f32[1,16], index: 9, kind: output, shape index: {1}]
  %10 = xla_tuple %s8, %s9
  %s11 = sld [smem:[#allocation0]]
  $region50: #{stan_pallas.1} parent=0
    _
  %s13 = ssub.s32 1, %s11
  %s14 = scalar_select 0, %s13, %s11
  $region1: #{stan_pallas.1} parent=0
    #allocation3 [shape = 'u8[512]{0}', space=vmem, size = 0x400, scoped, tag = 'output window, operand 1, single buffered']
    #allocation4 [shape = 's32[1]{0}', space=sflag, size = 0x4, scoped, tag = 'scoped memory for stan_pallas.1']
    %15 = vsyncpa [#allocation4], 0
    // Predicated region
    $region2: #{stan_pallas.1} parent=1 // pred_check
      _
    $region3: #{stan_pallas.1} parent=1 // pred_check_branch
      %17 = sbr.rel (0) target = $region5
    $region4: #{stan_pallas.1} parent=1 // pred_region
      _
    $region5: #{stan_pallas.1} parent=1 // pred_fallthru
      _
    // Predicated region
    $region6: #{stan_pallas.1} parent=1 // pred_check
      _
    $region7: #{stan_pallas.1} parent=1 // pred_check_branch
      %19 = sbr.rel (0) target = $region9
    $region8: #{stan_pallas.1} parent=1 // pred_region
      _
    $region9: #{stan_pallas.1} parent=1 // pred_fallthru
      _
    // Predicated region
    $region10: #{stan_pallas.1} parent=1 // pred_check
      _
    $region11: #{stan_pallas.1} parent=1 // pred_check_branch
      %21 = sbr.rel (0) target = $region13
    $region12: #{stan_pallas.1} parent=1 // pred_region
      _
    $region13: #{stan_pallas.1} parent=1 // pred_fallthru
      _
    // Predicated region
    $region14: #{stan_pallas.1} parent=1 // pred_check
      _
    $region15: #{stan_pallas.1} parent=1 // pred_check_branch
      %23 = sbr.rel (0) target = $region17
    $region16: #{stan_pallas.1} parent=1 // pred_region
      _
    $region17: #{stan_pallas.1} parent=1 // pred_fallthru
      _
    // Predicated region
    $region18: #{stan_pallas.1} parent=1 // pred_check
      _
    $region19: #{stan_pallas.1} parent=1 // pred_check_branch
      %25 = sbr.rel (0) target = $region21
    $region20: #{stan_pallas.1} parent=1 // pred_region
      _
    $region21: #{stan_pallas.1} parent=1 // pred_fallthru
      _
    // Predicated region
    $region22: #{stan_pallas.1} parent=1 // pred_check
      _
    $region23: #{stan_pallas.1} parent=1 // pred_check_branch
      %27 = sbr.rel (0) target = $region25
    $region24: #{stan_pallas.1} parent=1 // pred_region
      _
    $region25: #{stan_pallas.1} parent=1 // pred_fallthru
      _
    // Predicated region
    $region26: #{stan_pallas.1} parent=1 // pred_check
      _
    $region27: #{stan_pallas.1} parent=1 // pred_check_branch
      %29 = sbr.rel (0) target = $region29
    $region28: #{stan_pallas.1} parent=1 // pred_region
      _
    $region29: #{stan_pallas.1} parent=1 // pred_fallthru
      _
    // Predicated region
    $region30: #{stan_pallas.1} parent=1 // pred_check
      _
    $region31: #{stan_pallas.1} parent=1 // pred_check_branch
      %31 = sbr.rel (0) target = $region33
    $region32: #{stan_pallas.1} parent=1 // pred_region
      _
    $region33: #{stan_pallas.1} parent=1 // pred_fallthru
      _
    %v32 = vld [vmem:[%s1] sm:$0xff]
    %v33 = vld [vmem:[%s1 + $0x8] sm:$0xff]
    %v34 = vld [vmem:[%s1 + $0x10] sm:$0xff]
    %v35 = vld [vmem:[%s1 + $0x18] sm:$0xff]
    %v36 = vld [vmem:[%s1 + $0x20] sm:$0xff]
    %v37 = vld [vmem:[%s1 + $0x28] sm:$0xff]
    %v38 = vld [vmem:[%s7] sm:$0xff]
    %v39 = vld [vmem:[%s7 + $0x8] sm:$0x3f]
    %v40 = vld [vmem:[%s2] sm:$0x3f]
    %v41 = vld [vmem:[%s0] sm:$0xff]
    %v42 = vld [vmem:[%s0 + $0x8] sm:$0xff]
    %v43 = vld [vmem:[%s0 + $0x10] sm:$0xff]
    %v44 = vld [vmem:[%s0 + $0x18] sm:$0xff]
    %v45 = vld [vmem:[%s0 + $0x20] sm:$0xff]
    %v46 = vld [vmem:[%s0 + $0x28] sm:$0xff]
    %v47 = vld [vmem:[%s3] sm:$0xf]
    %v48 = vlaneseq
    %v49 = vshrl.u32 %v48, 7
    %v50 = vsub.s32 0, %v49
    %v51 = vrot.slane %v38, %v50
    %vm52 = vcmask 31744
    %v54 = vsel %vm52, %v41, 0
    %v57 = vsel %vm52, %v42, 0
    %v60 = vsel %vm52, %v43, 0
    %v63 = vsel %vm52, %v44, 0
    %v66 = vsel %vm52, %v45, 0
    %v69 = vsel %vm52, %v46, 0
    %vm71 = vcmask 1043456
    %v73 = vsel %vm71, %v47, 0
    %75 = vmatprep.subr.mxu0 0.0
    %76 = vmatpush1.msra.mxu0 %v73
    %77 = vmatprep.subr.mxu0 0.0
    %78 = vmatpush1.msra.mxu0 0.0
    %79 = vmatprep.subr.mxu0 0.0
    %80 = vmatpush1.msra.mxu0 0.0
    %81 = vmatprep.subr.mxu0 0.0
    %82 = vmatpush1.msra.mxu0 0.0
    %83 = vmatprep.subr.mxu0 0.0
    %84 = vmatpush1.msra.mxu0 0.0
    %85 = vmatprep.subr.mxu0 0.0
    %86 = vmatpush1.msra.mxu0 0.0
    %87 = vmatprep.subr.mxu0 0.0
    %88 = vmatpush1.msra.mxu0 0.0
    %89 = vmatprep.subr.mxu0 0.0
    %90 = vmatpush1.msra.mxu0 0.0
    %91 = vmatprep.subr.mxu0 0.0
    %92 = vmatpush1.msra.mxu0 0.0
    %93 = vmatprep.subr.mxu0 0.0
    %94 = vmatpush1.msra.mxu0 0.0
    %95 = vmatprep.subr.mxu0 0.0
    %96 = vmatpush1.msra.mxu0 0.0
    %97 = vmatprep.subr.mxu0 0.0
    %98 = vmatpush1.msra.mxu0 0.0
    %99 = vmatprep.subr.mxu0 0.0
    %100 = vmatpush1.msra.mxu0 0.0
    %101 = vmatprep.subr.mxu0 0.0
    %102 = vmatpush1.msra.mxu0 0.0
    %103 = vmatprep.subr.mxu0 0.0
    %104 = vmatpush1.msra.mxu0 0.0
    %105 = vmatprep.subr.mxu0 0.0
    %106 = vmatpush1.msra.mxu0 0.0
    %107 = vmatprep.subr.mxu0 0.0
    %108 = vmatpush1.msra.mxu0 0.0
    %109 = vmatprep.subr.mxu0 0.0
    %110 = vmatpush1.msra.mxu0 0.0
    %111 = vmatprep.subr.mxu0 0.0
    %112 = vmatpush1.msra.mxu0 0.0
    %113 = vmatprep.subr.mxu0 0.0
    %114 = vmatpush1.msra.mxu0 0.0
    %115 = vmatprep.subr.mxu0 0.0
    %116 = vmatpush1.msra.mxu0 0.0
    %117 = vmatprep.subr.mxu0 0.0
    %118 = vmatpush1.msra.mxu0 0.0
    %119 = vmatprep.subr.mxu0 0.0
    %120 = vmatpush1.msra.mxu0 0.0
    %121 = vmatprep.subr.mxu0 0.0
    %122 = vmatpush1.msra.mxu0 0.0
    %123 = vmatprep.subr.mxu0 0.0
    %124 = vmatpush1.msra.mxu0 0.0
    %125 = vmatprep.subr.mxu0 0.0
    %126 = vmatpush1.msra.mxu0 0.0
    %127 = vmatprep.subr.mxu0 0.0
    %128 = vmatpush1.msra.mxu0 0.0
    %129 = vmatprep.subr.mxu0 0.0
    %130 = vmatpush1.msra.mxu0 0.0
    %131 = vmatprep.subr.mxu0 0.0
    %132 = vmatpush1.msra.mxu0 0.0
    %133 = vmatprep.subr.mxu0 0.0
    %134 = vmatpush1.msra.mxu0 0.0
    %135 = vmatprep.subr.mxu0 0.0
    %136 = vmatpush1.msra.mxu0 0.0
    %137 = vmatprep.subr.mxu0 0.0
    %138 = vmatpush1.msra.mxu0 0.0
    %139 = vmatprep.mubr.f32.mxu0 0.0
    %140 = vmatmul.mubr.f32.gmra.mrb[0].mxu0 %v54
    %v141 = vpop.f32.mrb[0].mxu0
    %v142 = vadd.f32 %v51, %v141
    %v143 = vpop.f32.mrb[0].mxu0
    %144 = vmatprep.mubr.f32.mxu0 0.0
    %145 = vmatmul.mubr.f32.gmra.mrb[0].mxu0 %v57
    %v146 = vpop.f32.mrb[0].mxu0
    %v147 = vadd.f32 %v51, %v146
    %v148 = vpop.f32.mrb[0].mxu0
    %149 = vmatprep.mubr.f32.mxu0 0.0
    %150 = vmatmul.mubr.f32.gmra.mrb[0].mxu0 %v60
    %v151 = vpop.f32.mrb[0].mxu0
    %v152 = vadd.f32 %v51, %v151
    %v153 = vpop.f32.mrb[0].mxu0
    %154 = vmatprep.mubr.f32.mxu0 0.0
    %155 = vmatmul.mubr.f32.gmra.mrb[0].mxu0 %v63
    %v156 = vpop.f32.mrb[0].mxu0
    %v157 = vadd.f32 %v51, %v156
    %v158 = vpop.f32.mrb[0].mxu0
    %159 = vmatprep.mubr.f32.mxu0 0.0
    %160 = vmatmul.mubr.f32.gmra.mrb[0].mxu0 %v66
    %v161 = vpop.f32.mrb[0].mxu0
    %v162 = vadd.f32 %v51, %v161
    %v163 = vpop.f32.mrb[0].mxu0
    %164 = vmatprep.mubr.f32.mxu0 0.0
    %165 = vmatmul.mubr.f32.gmra.mrb[0].mxu0 %v69
    %v166 = vpop.f32.mrb[0].mxu0
    %v167 = vadd.f32 %v51, %v166
    %v168 = vpop.f32.mrb[0].mxu0
    %169 = vdwg.mxu0
    %v170 = vlaneseq
    %v171 = vshrl.u32 %v170, 7
    %v172 = vsub.s32 1, %v171
    %v173 = vrot.slane %v38, %v172
    %v174 = vmul.f32 %v142, %v173
    %v175 = vmul.f32 %v147, %v173
    %v176 = vmul.f32 %v152, %v173
    %v177 = vmul.f32 %v157, %v173
    %v178 = vmul.f32 %v162, %v173
    %v179 = vmul.f32 %v167, %v173
    %vm180 = vcmask 64512
    %v181 = vsel %vm180, %v174, 0.0
    %182 = vadd.xlane.f32.xlu0 %v181
    %v183 = vpop.xlane.xlu0 %182
    %v184 = vsel %vm180, %v175, 0.0
    %185 = vadd.xlane.f32.xlu0 %v184
    %v186 = vpop.xlane.xlu0 %185
    %v187 = vsel %vm180, %v176, 0.0
    %188 = vadd.xlane.f32.xlu0 %v187
    %v189 = vpop.xlane.xlu0 %188
    %v190 = vsel %vm180, %v177, 0.0
    %191 = vadd.xlane.f32.xlu0 %v190
    %v192 = vpop.xlane.xlu0 %191
    %v193 = vsel %vm180, %v178, 0.0
    %194 = vadd.xlane.f32.xlu0 %v193
    %v195 = vpop.xlane.xlu0 %194
    %v196 = vsel %vm180, %v179, 0.0
    %197 = vadd.xlane.f32.xlu0 %v196
    %v198 = vpop.xlane.xlu0 %197
    %v199 = vlaneseq
    %v200 = vshrl.u32 %v199, 7
    %v201 = vsub.s32 2, %v200
    %v202 = vrot.slane %v38, %v201
    %v203 = vmul.f32 %v142, %v202
    %v204 = vmul.f32 %v147, %v202
    %v205 = vmul.f32 %v152, %v202
    %v206 = vmul.f32 %v157, %v202
    %v207 = vmul.f32 %v162, %v202
    %v208 = vmul.f32 %v167, %v202
    %v209 = vsel %vm180, %v203, 0.0
    %210 = vadd.xlane.f32.xlu0 %v209
    %v211 = vpop.xlane.xlu0 %210
    %v212 = vsel %vm180, %v204, 0.0
    %213 = vadd.xlane.f32.xlu0 %v212
    %v214 = vpop.xlane.xlu0 %213
    %v215 = vsel %vm180, %v205, 0.0
    %216 = vadd.xlane.f32.xlu0 %v215
    %v217 = vpop.xlane.xlu0 %216
    %v218 = vsel %vm180, %v206, 0.0
    %219 = vadd.xlane.f32.xlu0 %v218
    %v220 = vpop.xlane.xlu0 %219
    %v221 = vsel %vm180, %v207, 0.0
    %222 = vadd.xlane.f32.xlu0 %v221
    %v223 = vpop.xlane.xlu0 %222
    %v224 = vsel %vm180, %v208, 0.0
    %225 = vadd.xlane.f32.xlu0 %v224
    %v226 = vpop.xlane.xlu0 %225
    %227 = vxpose.xlu0.b32.start [1/16] %v183, 128
    %228 = vxpose.xlu0.b32.cont [2/16] %v186, 128
    %229 = vxpose.xlu0.b32.cont [3/16] %v189, 128
    %230 = vxpose.xlu0.b32.cont [4/16] %v192, 128
    %231 = vxpose.xlu0.b32.cont [5/16] %v195, 128
    %232 = vxpose.xlu0.b32.cont [6/16] %v198, 128
    %233 = vxpose.xlu0.b32.cont [7/16] 0.0, 128
    %234 = vxpose.xlu0.b32.cont [8/16] 0.0, 128
    %235 = vxpose.xlu0.b32.cont [9/16] 0.0, 128
    %236 = vxpose.xlu0.b32.cont [10/16] 0.0, 128
    %237 = vxpose.xlu0.b32.cont [11/16] 0.0, 128
    %238 = vxpose.xlu0.b32.cont [12/16] 0.0, 128
    %239 = vxpose.xlu0.b32.cont [13/16] 0.0, 128
    %240 = vxpose.xlu0.b32.cont [14/16] 0.0, 128
    %241 = vxpose.xlu0.b32.cont [15/16] 0.0, 128
    %242 = vxpose.xlu0.b32.end [16/16] 0.0, 128
    %v243 = vpop.trf.xlu0
    %v244 = vpop.trf.xlu0
    %v245 = vpop.trf.xlu0
    %v246 = vpop.trf.xlu0
    %v247 = vpop.trf.xlu0
    %v248 = vpop.trf.xlu0
    %v249 = vpop.trf.xlu0
    %v250 = vpop.trf.xlu0
    %v251 = vpop.trf.xlu0
    %v252 = vpop.trf.xlu0
    %v253 = vpop.trf.xlu0
    %v254 = vpop.trf.xlu0
    %v255 = vpop.trf.xlu0
    %v256 = vpop.trf.xlu0
    %v257 = vpop.trf.xlu0
    %v258 = vpop.trf.xlu0
    %v259 = vlaneseq
    %v260 = vshrl.u32 %v259, 7
    %v261 = vsub.s32 0, %v260
    %v262 = vrot.slane %v243, %v261
    %v263 = vadd.f32 %v211, %v262
    %v264 = vadd.f32 %v214, %v262
    %v265 = vadd.f32 %v217, %v262
    %v266 = vadd.f32 %v220, %v262
    %v267 = vadd.f32 %v223, %v262
    %v268 = vadd.f32 %v226, %v262
    %v270 = vrot.slane %v38, 3
    %s271 = vtos %v270
    %v272 = vstv %s271
    %v274 = vadd.f32 %v263, %v272
    %v275 = vadd.f32 %v264, %v272
    %v276 = vadd.f32 %v265, %v272
    %v277 = vadd.f32 %v266, %v272
    %v278 = vadd.f32 %v267, %v272
    %v279 = vadd.f32 %v268, %v272
    %vm280 = vcmp.gt.f32.partialorder %v274, 0.0
    %vm281 = vcmp.gt.f32.partialorder %v275, 0.0
    %vm282 = vcmp.gt.f32.partialorder %v276, 0.0
    %vm283 = vcmp.gt.f32.partialorder %v277, 0.0
    %vm284 = vcmp.gt.f32.partialorder %v278, 0.0
    %vm285 = vcmp.gt.f32.partialorder %v279, 0.0
    %v286 = vmul.f32 %v274, 0.01
    %v287 = vmul.f32 %v275, 0.01
    %v288 = vmul.f32 %v276, 0.01
    %v289 = vmul.f32 %v277, 0.01
    %v290 = vmul.f32 %v278, 0.01
    %v291 = vmul.f32 %v279, 0.01
    %v292 = vsel %vm280, %v274, %v286
    %v293 = vsel %vm281, %v275, %v287
    %v294 = vsel %vm282, %v276, %v288
    %v295 = vsel %vm283, %v277, %v289
    %v296 = vsel %vm284, %v278, %v290
    %v297 = vsel %vm285, %v279, %v291
    %v298 = vadd.f32 %v292, %v32
    %v299 = vadd.f32 %v293, %v33
    %v300 = vadd.f32 %v294, %v34
    %v301 = vadd.f32 %v295, %v35
    %v302 = vadd.f32 %v296, %v36
    %v303 = vadd.f32 %v297, %v37
    %vm304 = vcmask 392192
    %v305 = vsel %vm304, %v298, -inf
    %306 = vmax.xlane.f32.xlu0 %v305
    %v307 = vpop.xlane.xlu0 %306
    %v308 = vsel %vm304, %v299, -inf
    %309 = vmax.xlane.f32.xlu0 %v308
    %v310 = vpop.xlane.xlu0 %309
    %v311 = vsel %vm304, %v300, -inf
    %312 = vmax.xlane.f32.xlu0 %v311
    %v313 = vpop.xlane.xlu0 %312
    %v314 = vsel %vm304, %v301, -inf
    %315 = vmax.xlane.f32.xlu0 %v314
    %v316 = vpop.xlane.xlu0 %315
    %v317 = vsel %vm304, %v302, -inf
    %318 = vmax.xlane.f32.xlu0 %v317
    %v319 = vpop.xlane.xlu0 %318
    %v320 = vsel %vm304, %v303, -inf
    %321 = vmax.xlane.f32.xlu0 %v320
    %v322 = vpop.xlane.xlu0 %321
    %v323 = vsub.f32 %v298, %v307
    %v324 = vsub.f32 %v299, %v310
    %v325 = vsub.f32 %v300, %v313
    %v326 = vsub.f32 %v301, %v316
    %v327 = vsub.f32 %v302, %v319
    %v328 = vsub.f32 %v303, %v322
    %v329 = vmul.f32 %v323, 1.442695
    %v330 = vpow.pop %v329
    %v331 = vmul.f32 %v324, 1.442695
    %v332 = vpow.pop %v331
    %v333 = vmul.f32 %v325, 1.442695
    %v334 = vpow.pop %v333
    %v335 = vmul.f32 %v326, 1.442695
    %v336 = vpow.pop %v335
    %v337 = vmul.f32 %v327, 1.442695
    %v338 = vpow.pop %v337
    %v339 = vmul.f32 %v328, 1.442695
    %v340 = vpow.pop %v339
    %v341 = vsel %vm304, %v330, 0.0
    %342 = vadd.xlane.f32.xlu0 %v341
    %v343 = vpop.xlane.xlu0 %342
    %v344 = vsel %vm304, %v332, 0.0
    %345 = vadd.xlane.f32.xlu0 %v344
    %v346 = vpop.xlane.xlu0 %345
    %v347 = vsel %vm304, %v334, 0.0
    %348 = vadd.xlane.f32.xlu0 %v347
    %v349 = vpop.xlane.xlu0 %348
    %v350 = vsel %vm304, %v336, 0.0
    %351 = vadd.xlane.f32.xlu0 %v350
    %v352 = vpop.xlane.xlu0 %351
    %v353 = vsel %vm304, %v338, 0.0
    %354 = vadd.xlane.f32.xlu0 %v353
    %v355 = vpop.xlane.xlu0 %354
    %v356 = vsel %vm304, %v340, 0.0
    %357 = vadd.xlane.f32.xlu0 %v356
    %v358 = vpop.xlane.xlu0 %357
    %v359 = vrcp.pop %v343
    %v360 = vrcp.pop %v346
    %v361 = vrcp.pop %v349
    %v362 = vrcp.pop %v352
    %v363 = vrcp.pop %v355
    %v364 = vrcp.pop %v358
    %v365 = vmul.f32 %v330, %v359
    %v366 = vmul.f32 %v332, %v360
    %v367 = vmul.f32 %v334, %v361
    %v368 = vmul.f32 %v336, %v362
    %v369 = vmul.f32 %v338, %v363
    %v370 = vmul.f32 %v340, %v364
    %v372 = vsel %vm304, %v365, 0
    %v375 = vsel %vm304, %v366, 0
    %v378 = vsel %vm304, %v367, 0
    %v381 = vsel %vm304, %v368, 0
    %v384 = vsel %vm304, %v369, 0
    %v387 = vsel %vm304, %v370, 0
    %389 = vmatprep.subr.mxu0 0.0
    %390 = vmatpush1.msra.mxu0 %v142
    %391 = vmatprep.subr.mxu0 0.0
    %392 = vmatpush1.msra.mxu0 %v147
    %393 = vmatprep.subr.mxu0 0.0
    %394 = vmatpush1.msra.mxu0 %v152
    %395 = vmatprep.subr.mxu0 0.0
    %396 = vmatpush1.msra.mxu0 %v157
    %397 = vmatprep.subr.mxu0 0.0
    %398 = vmatpush1.msra.mxu0 %v162
    %399 = vmatprep.subr.mxu0 0.0
    %400 = vmatpush1.msra.mxu0 %v167
    %401 = vmatprep.subr.mxu0 0.0
    %402 = vmatpush1.msra.mxu0 0.0
    %403 = vmatprep.subr.mxu0 0.0
    %404 = vmatpush1.msra.mxu0 0.0
    %405 = vmatprep.subr.mxu0 0.0
    %406 = vmatpush1.msra.mxu0 0.0
    %407 = vmatprep.subr.mxu0 0.0
    %408 = vmatpush1.msra.mxu0 0.0
    %409 = vmatprep.subr.mxu0 0.0
    %410 = vmatpush1.msra.mxu0 0.0
    %411 = vmatprep.subr.mxu0 0.0
    %412 = vmatpush1.msra.mxu0 0.0
    %413 = vmatprep.subr.mxu0 0.0
    %414 = vmatpush1.msra.mxu0 0.0
    %415 = vmatprep.subr.mxu0 0.0
    %416 = vmatpush1.msra.mxu0 0.0
    %417 = vmatprep.subr.mxu0 0.0
    %418 = vmatpush1.msra.mxu0 0.0
    %419 = vmatprep.subr.mxu0 0.0
    %420 = vmatpush1.msra.mxu0 0.0
    %421 = vmatprep.subr.mxu0 0.0
    %422 = vmatpush1.msra.mxu0 0.0
    %423 = vmatprep.subr.mxu0 0.0
    %424 = vmatpush1.msra.mxu0 0.0
    %425 = vmatprep.subr.mxu0 0.0
    %426 = vmatpush1.msra.mxu0 0.0
    %427 = vmatprep.subr.mxu0 0.0
    %428 = vmatpush1.msra.mxu0 0.0
    %429 = vmatprep.subr.mxu0 0.0
    %430 = vmatpush1.msra.mxu0 0.0
    %431 = vmatprep.subr.mxu0 0.0
    %432 = vmatpush1.msra.mxu0 0.0
    %433 = vmatprep.subr.mxu0 0.0
    %434 = vmatpush1.msra.mxu0 0.0
    %435 = vmatprep.subr.mxu0 0.0
    %436 = vmatpush1.msra.mxu0 0.0
    %437 = vmatprep.subr.mxu0 0.0
    %438 = vmatpush1.msra.mxu0 0.0
    %439 = vmatprep.subr.mxu0 0.0
    %440 = vmatpush1.msra.mxu0 0.0
    %441 = vmatprep.subr.mxu0 0.0
    %442 = vmatpush1.msra.mxu0 0.0
    %443 = vmatprep.subr.mxu0 0.0
    %444 = vmatpush1.msra.mxu0 0.0
    %445 = vmatprep.subr.mxu0 0.0
    %446 = vmatpush1.msra.mxu0 0.0
    %447 = vmatprep.subr.mxu0 0.0
    %448 = vmatpush1.msra.mxu0 0.0
    %449 = vmatprep.subr.mxu0 0.0
    %450 = vmatpush1.msra.mxu0 0.0
    %451 = vmatprep.subr.mxu0 0.0
    %452 = vmatpush1.msra.mxu0 0.0
    %453 = vmatprep.mubr.f32.mxu0 0.0
    %454 = vmatmul.mubr.f32.gmra.mrb[0].mxu0 %v372
    %v455 = vpop.f32.mrb[0].mxu0
    %v456 = vadd.f32 0.0, %v455
    %v457 = vpop.f32.mrb[0].mxu0
    %458 = vmatprep.mubr.f32.mxu0 0.0
    %459 = vmatmul.mubr.f32.gmra.mrb[0].mxu0 %v375
    %v460 = vpop.f32.mrb[0].mxu0
    %v461 = vadd.f32 0.0, %v460
    %v462 = vpop.f32.mrb[0].mxu0
    %463 = vmatprep.mubr.f32.mxu0 0.0
    %464 = vmatmul.mubr.f32.gmra.mrb[0].mxu0 %v378
    %v465 = vpop.f32.mrb[0].mxu0
    %v466 = vadd.f32 0.0, %v465
    %v467 = vpop.f32.mrb[0].mxu0
    %468 = vmatprep.mubr.f32.mxu0 0.0
    %469 = vmatmul.mubr.f32.gmra.mrb[0].mxu0 %v381
    %v470 = vpop.f32.mrb[0].mxu0
    %v471 = vadd.f32 0.0, %v470
    %v472 = vpop.f32.mrb[0].mxu0
    %473 = vmatprep.mubr.f32.mxu0 0.0
    %474 = vmatmul.mubr.f32.gmra.mrb[0].mxu0 %v384
    %v475 = vpop.f32.mrb[0].mxu0
    %v476 = vadd.f32 0.0, %v475
    %v477 = vpop.f32.mrb[0].mxu0
    %478 = vmatprep.mubr.f32.mxu0 0.0
    %479 = vmatmul.mubr.f32.gmra.mrb[0].mxu0 %v387
    %v480 = vpop.f32.mrb[0].mxu0
    %v481 = vadd.f32 0.0, %v480
    %v482 = vpop.f32.mrb[0].mxu0
    %483 = vdwg.mxu0
    %vm484 = vcmp.gt.f32.partialorder %v456, 0.0
    %vm485 = vcmp.gt.f32.partialorder %v461, 0.0
    %vm486 = vcmp.gt.f32.partialorder %v466, 0.0
    %vm487 = vcmp.gt.f32.partialorder %v471, 0.0
    %vm488 = vcmp.gt.f32.partialorder %v476, 0.0
    %vm489 = vcmp.gt.f32.partialorder %v481, 0.0
    %v490 = vmul.f32 %v456, 1.442695
    %v491 = vpow.pop %v490
    %v492 = vmul.f32 %v461, 1.442695
    %v493 = vpow.pop %v492
    %v494 = vmul.f32 %v466, 1.442695
    %v495 = vpow.pop %v494
    %v496 = vmul.f32 %v471, 1.442695
    %v497 = vpow.pop %v496
    %v498 = vmul.f32 %v476, 1.442695
    %v499 = vpow.pop %v498
    %v500 = vmul.f32 %v481, 1.442695
    %v501 = vpow.pop %v500
    %v502 = vsub.f32 %v491, 1.0
    %v503 = vsub.f32 %v493, 1.0
    %v504 = vsub.f32 %v495, 1.0
    %v505 = vsub.f32 %v497, 1.0
    %v506 = vsub.f32 %v499, 1.0
    %v507 = vsub.f32 %v501, 1.0
    %v508 = vsel %vm484, %v456, %v502
    %v509 = vsel %vm485, %v461, %v503
    %v510 = vsel %vm486, %v466, %v504
    %v511 = vsel %vm487, %v471, %v505
    %v512 = vsel %vm488, %v476, %v506
    %v513 = vsel %vm489, %v481, %v507
    %520 = vrot.lane.b32.xlu0 %v174, 120
    %v521 = vpop.permute.xlu0 %520
    %522 = vrot.lane.b32.xlu0 %v175, 120
    %v523 = vpop.permute.xlu0 %522
    %524 = vrot.lane.b32.xlu0 %v176, 120
    %v525 = vpop.permute.xlu0 %524
    %526 = vrot.lane.b32.xlu0 %v177, 120
    %v527 = vpop.permute.xlu0 %526
    %528 = vrot.lane.b32.xlu0 %v178, 120
    %v529 = vpop.permute.xlu0 %528
    %530 = vrot.lane.b32.xlu0 %v179, 120
    %v531 = vpop.permute.xlu0 %530
    %v538 = vsel %vm180, %v521, 0.0
    %539 = vadd.xlane.f32.xlu0 %v538
    %v540 = vpop.xlane.xlu0 %539
    %v541 = vsel %vm180, %v523, 0.0
    %542 = vadd.xlane.f32.xlu0 %v541
    %v543 = vpop.xlane.xlu0 %542
    %v544 = vsel %vm180, %v525, 0.0
    %545 = vadd.xlane.f32.xlu0 %v544
    %v546 = vpop.xlane.xlu0 %545
    %v547 = vsel %vm180, %v527, 0.0
    %548 = vadd.xlane.f32.xlu0 %v547
    %v549 = vpop.xlane.xlu0 %548
    %v550 = vsel %vm180, %v529, 0.0
    %551 = vadd.xlane.f32.xlu0 %v550
    %v552 = vpop.xlane.xlu0 %551
    %v553 = vsel %vm180, %v531, 0.0
    %554 = vadd.xlane.f32.xlu0 %v553
    %v555 = vpop.xlane.xlu0 %554
    %562 = vrot.lane.b32.xlu0 %v203, 120
    %v563 = vpop.permute.xlu0 %562
    %564 = vrot.lane.b32.xlu0 %v204, 120
    %v565 = vpop.permute.xlu0 %564
    %566 = vrot.lane.b32.xlu0 %v205, 120
    %v567 = vpop.permute.xlu0 %566
    %568 = vrot.lane.b32.xlu0 %v206, 120
    %v569 = vpop.permute.xlu0 %568
    %570 = vrot.lane.b32.xlu0 %v207, 120
    %v571 = vpop.permute.xlu0 %570
    %572 = vrot.lane.b32.xlu0 %v208, 120
    %v573 = vpop.permute.xlu0 %572
    %v580 = vsel %vm180, %v563, 0.0
    %581 = vadd.xlane.f32.xlu0 %v580
    %v582 = vpop.xlane.xlu0 %581
    %v583 = vsel %vm180, %v565, 0.0
    %584 = vadd.xlane.f32.xlu0 %v583
    %v585 = vpop.xlane.xlu0 %584
    %v586 = vsel %vm180, %v567, 0.0
    %587 = vadd.xlane.f32.xlu0 %v586
    %v588 = vpop.xlane.xlu0 %587
    %v589 = vsel %vm180, %v569, 0.0
    %590 = vadd.xlane.f32.xlu0 %v589
    %v591 = vpop.xlane.xlu0 %590
    %v592 = vsel %vm180, %v571, 0.0
    %593 = vadd.xlane.f32.xlu0 %v592
    %v594 = vpop.xlane.xlu0 %593
    %v595 = vsel %vm180, %v573, 0.0
    %596 = vadd.xlane.f32.xlu0 %v595
    %v597 = vpop.xlane.xlu0 %596
    %598 = vxpose.xlu0.b32.start [1/16] %v540, 128
    %599 = vxpose.xlu0.b32.cont [2/16] %v543, 128
    %600 = vxpose.xlu0.b32.cont [3/16] %v546, 128
    %601 = vxpose.xlu0.b32.cont [4/16] %v549, 128
    %602 = vxpose.xlu0.b32.cont [5/16] %v552, 128
    %603 = vxpose.xlu0.b32.cont [6/16] %v555, 128
    %604 = vxpose.xlu0.b32.cont [7/16] 0.0, 128
    %605 = vxpose.xlu0.b32.cont [8/16] 0.0, 128
    %606 = vxpose.xlu0.b32.cont [9/16] 0.0, 128
    %607 = vxpose.xlu0.b32.cont [10/16] 0.0, 128
    %608 = vxpose.xlu0.b32.cont [11/16] 0.0, 128
    %609 = vxpose.xlu0.b32.cont [12/16] 0.0, 128
    %610 = vxpose.xlu0.b32.cont [13/16] 0.0, 128
    %611 = vxpose.xlu0.b32.cont [14/16] 0.0, 128
    %612 = vxpose.xlu0.b32.cont [15/16] 0.0, 128
    %613 = vxpose.xlu0.b32.end [16/16] 0.0, 128
    %v614 = vpop.trf.xlu0
    %v615 = vpop.trf.xlu0
    %v616 = vpop.trf.xlu0
    %v617 = vpop.trf.xlu0
    %v618 = vpop.trf.xlu0
    %v619 = vpop.trf.xlu0
    %v620 = vpop.trf.xlu0
    %v621 = vpop.trf.xlu0
    %v622 = vpop.trf.xlu0
    %v623 = vpop.trf.xlu0
    %v624 = vpop.trf.xlu0
    %v625 = vpop.trf.xlu0
    %v626 = vpop.trf.xlu0
    %v627 = vpop.trf.xlu0
    %v628 = vpop.trf.xlu0
    %v629 = vpop.trf.xlu0
    %v630 = vlaneseq
    %v631 = vshrl.u32 %v630, 7
    %v632 = vsub.s32 0, %v631
    %v633 = vrot.slane %v614, %v632
    %v634 = vadd.f32 %v582, %v633
    %v635 = vadd.f32 %v585, %v633
    %v636 = vadd.f32 %v588, %v633
    %v637 = vadd.f32 %v591, %v633
    %v638 = vadd.f32 %v594, %v633
    %v639 = vadd.f32 %v597, %v633
    %640 = vrot.lane.b32.xlu0 %v270, 127
    %v641 = vpop.permute.xlu0 %640
    %s642 = vtos %v641
    %v643 = vstv %s642
    %v645 = vadd.f32 %v634, %v643
    %v646 = vadd.f32 %v635, %v643
    %v647 = vadd.f32 %v636, %v643
    %v648 = vadd.f32 %v637, %v643
    %v649 = vadd.f32 %v638, %v643
    %v650 = vadd.f32 %v639, %v643
    %vm651 = vcmp.gt.f32.partialorder %v645, 0.0
    %vm652 = vcmp.gt.f32.partialorder %v646, 0.0
    %vm653 = vcmp.gt.f32.partialorder %v647, 0.0
    %vm654 = vcmp.gt.f32.partialorder %v648, 0.0
    %vm655 = vcmp.gt.f32.partialorder %v649, 0.0
    %vm656 = vcmp.gt.f32.partialorder %v650, 0.0
    %v657 = vmul.f32 %v645, 0.01
    %v658 = vmul.f32 %v646, 0.01
    %v659 = vmul.f32 %v647, 0.01
    %v660 = vmul.f32 %v648, 0.01
    %v661 = vmul.f32 %v649, 0.01
    %v662 = vmul.f32 %v650, 0.01
    %v663 = vsel %vm651, %v645, %v657
    %v664 = vsel %vm652, %v646, %v658
    %v665 = vsel %vm653, %v647, %v659
    %v666 = vsel %vm654, %v648, %v660
    %v667 = vsel %vm655, %v649, %v661
    %v668 = vsel %vm656, %v650, %v662
    %v669 = vadd.f32 %v663, %v32
    %v670 = vadd.f32 %v664, %v33
    %v671 = vadd.f32 %v665, %v34
    %v672 = vadd.f32 %v666, %v35
    %v673 = vadd.f32 %v667, %v36
    %v674 = vadd.f32 %v668, %v37
    %v675 = vsel %vm304, %v669, -inf
    %676 = vmax.xlane.f32.xlu0 %v675
    %v677 = vpop.xlane.xlu0 %676
    %v678 = vsel %vm304, %v670, -inf
    %679 = vmax.xlane.f32.xlu0 %v678
    %v680 = vpop.xlane.xlu0 %679
    %v681 = vsel %vm304, %v671, -inf
    %682 = vmax.xlane.f32.xlu0 %v681
    %v683 = vpop.xlane.xlu0 %682
    %v684 = vsel %vm304, %v672, -inf
    %685 = vmax.xlane.f32.xlu0 %v684
    %v686 = vpop.xlane.xlu0 %685
    %v687 = vsel %vm304, %v673, -inf
    %688 = vmax.xlane.f32.xlu0 %v687
    %v689 = vpop.xlane.xlu0 %688
    %v690 = vsel %vm304, %v674, -inf
    %691 = vmax.xlane.f32.xlu0 %v690
    %v692 = vpop.xlane.xlu0 %691
    %v693 = vsub.f32 %v669, %v677
    %v694 = vsub.f32 %v670, %v680
    %v695 = vsub.f32 %v671, %v683
    %v696 = vsub.f32 %v672, %v686
    %v697 = vsub.f32 %v673, %v689
    %v698 = vsub.f32 %v674, %v692
    %v699 = vmul.f32 %v693, 1.442695
    %v700 = vpow.pop %v699
    %v701 = vmul.f32 %v694, 1.442695
    %v702 = vpow.pop %v701
    %v703 = vmul.f32 %v695, 1.442695
    %v704 = vpow.pop %v703
    %v705 = vmul.f32 %v696, 1.442695
    %v706 = vpow.pop %v705
    %v707 = vmul.f32 %v697, 1.442695
    %v708 = vpow.pop %v707
    %v709 = vmul.f32 %v698, 1.442695
    %v710 = vpow.pop %v709
    %v711 = vsel %vm304, %v700, 0.0
    %712 = vadd.xlane.f32.xlu0 %v711
    %v713 = vpop.xlane.xlu0 %712
    %v714 = vsel %vm304, %v702, 0.0
    %715 = vadd.xlane.f32.xlu0 %v714
    %v716 = vpop.xlane.xlu0 %715
    %v717 = vsel %vm304, %v704, 0.0
    %718 = vadd.xlane.f32.xlu0 %v717
    %v719 = vpop.xlane.xlu0 %718
    %v720 = vsel %vm304, %v706, 0.0
    %721 = vadd.xlane.f32.xlu0 %v720
    %v722 = vpop.xlane.xlu0 %721
    %v723 = vsel %vm304, %v708, 0.0
    %724 = vadd.xlane.f32.xlu0 %v723
    %v725 = vpop.xlane.xlu0 %724
    %v726 = vsel %vm304, %v710, 0.0
    %727 = vadd.xlane.f32.xlu0 %v726
    %v728 = vpop.xlane.xlu0 %727
    %v729 = vrcp.pop %v713
    %v730 = vrcp.pop %v716
    %v731 = vrcp.pop %v719
    %v732 = vrcp.pop %v722
    %v733 = vrcp.pop %v725
    %v734 = vrcp.pop %v728
    %v735 = vmul.f32 %v700, %v729
    %v736 = vmul.f32 %v702, %v730
    %v737 = vmul.f32 %v704, %v731
    %v738 = vmul.f32 %v706, %v732
    %v739 = vmul.f32 %v708, %v733
    %v740 = vmul.f32 %v710, %v734
    %747 = vrot.lane.b32.xlu0 %v142, 120
    %v748 = vpop.permute.xlu0 %747
    %749 = vrot.lane.b32.xlu0 %v147, 120
    %v750 = vpop.permute.xlu0 %749
    %751 = vrot.lane.b32.xlu0 %v152, 120
    %v752 = vpop.permute.xlu0 %751
    %753 = vrot.lane.b32.xlu0 %v157, 120
    %v754 = vpop.permute.xlu0 %753
    %755 = vrot.lane.b32.xlu0 %v162, 120
    %v756 = vpop.permute.xlu0 %755
    %757 = vrot.lane.b32.xlu0 %v167, 120
    %v758 = vpop.permute.xlu0 %757
    %v766 = vsel %vm304, %v735, 0
    %v769 = vsel %vm304, %v736, 0
    %v772 = vsel %vm304, %v737, 0
    %v775 = vsel %vm304, %v738, 0
    %v778 = vsel %vm304, %v739, 0
    %v781 = vsel %vm304, %v740, 0
    %783 = vmatprep.subr.mxu0 0.0
    %784 = vmatpush1.msra.mxu0 %v748
    %785 = vmatprep.subr.mxu0 0.0
    %786 = vmatpush1.msra.mxu0 %v750
    %787 = vmatprep.subr.mxu0 0.0
    %788 = vmatpush1.msra.mxu0 %v752
    %789 = vmatprep.subr.mxu0 0.0
    %790 = vmatpush1.msra.mxu0 %v754
    %791 = vmatprep.subr.mxu0 0.0
    %792 = vmatpush1.msra.mxu0 %v756
    %793 = vmatprep.subr.mxu0 0.0
    %794 = vmatpush1.msra.mxu0 %v758
    %795 = vmatprep.subr.mxu0 0.0
    %796 = vmatpush1.msra.mxu0 0.0
    %797 = vmatprep.subr.mxu0 0.0
    %798 = vmatpush1.msra.mxu0 0.0
    %799 = vmatprep.subr.mxu0 0.0
    %800 = vmatpush1.msra.mxu0 0.0
    %801 = vmatprep.subr.mxu0 0.0
    %802 = vmatpush1.msra.mxu0 0.0
    %803 = vmatprep.subr.mxu0 0.0
    %804 = vmatpush1.msra.mxu0 0.0
    %805 = vmatprep.subr.mxu0 0.0
    %806 = vmatpush1.msra.mxu0 0.0
    %807 = vmatprep.subr.mxu0 0.0
    %808 = vmatpush1.msra.mxu0 0.0
    %809 = vmatprep.subr.mxu0 0.0
    %810 = vmatpush1.msra.mxu0 0.0
    %811 = vmatprep.subr.mxu0 0.0
    %812 = vmatpush1.msra.mxu0 0.0
    %813 = vmatprep.subr.mxu0 0.0
    %814 = vmatpush1.msra.mxu0 0.0
    %815 = vmatprep.subr.mxu0 0.0
    %816 = vmatpush1.msra.mxu0 0.0
    %817 = vmatprep.subr.mxu0 0.0
    %818 = vmatpush1.msra.mxu0 0.0
    %819 = vmatprep.subr.mxu0 0.0
    %820 = vmatpush1.msra.mxu0 0.0
    %821 = vmatprep.subr.mxu0 0.0
    %822 = vmatpush1.msra.mxu0 0.0
    %823 = vmatprep.subr.mxu0 0.0
    %824 = vmatpush1.msra.mxu0 0.0
    %825 = vmatprep.subr.mxu0 0.0
    %826 = vmatpush1.msra.mxu0 0.0
    %827 = vmatprep.subr.mxu0 0.0
    %828 = vmatpush1.msra.mxu0 0.0
    %829 = vmatprep.subr.mxu0 0.0
    %830 = vmatpush1.msra.mxu0 0.0
    %831 = vmatprep.subr.mxu0 0.0
    %832 = vmatpush1.msra.mxu0 0.0
    %833 = vmatprep.subr.mxu0 0.0
    %834 = vmatpush1.msra.mxu0 0.0
    %835 = vmatprep.subr.mxu0 0.0
    %836 = vmatpush1.msra.mxu0 0.0
    %837 = vmatprep.subr.mxu0 0.0
    %838 = vmatpush1.msra.mxu0 0.0
    %839 = vmatprep.subr.mxu0 0.0
    %840 = vmatpush1.msra.mxu0 0.0
    %841 = vmatprep.subr.mxu0 0.0
    %842 = vmatpush1.msra.mxu0 0.0
    %843 = vmatprep.subr.mxu0 0.0
    %844 = vmatpush1.msra.mxu0 0.0
    %845 = vmatprep.subr.mxu0 0.0
    %846 = vmatpush1.msra.mxu0 0.0
    %847 = vmatprep.mubr.f32.mxu0 0.0
    %848 = vmatmul.mubr.f32.gmra.mrb[0].mxu0 %v766
    %v849 = vpop.f32.mrb[0].mxu0
    %v850 = vadd.f32 0.0, %v849
    %v851 = vpop.f32.mrb[0].mxu0
    %852 = vmatprep.mubr.f32.mxu0 0.0
    %853 = vmatmul.mubr.f32.gmra.mrb[0].mxu0 %v769
    %v854 = vpop.f32.mrb[0].mxu0
    %v855 = vadd.f32 0.0, %v854
    %v856 = vpop.f32.mrb[0].mxu0
    %857 = vmatprep.mubr.f32.mxu0 0.0
    %858 = vmatmul.mubr.f32.gmra.mrb[0].mxu0 %v772
    %v859 = vpop.f32.mrb[0].mxu0
    %v860 = vadd.f32 0.0, %v859
    %v861 = vpop.f32.mrb[0].mxu0
    %862 = vmatprep.mubr.f32.mxu0 0.0
    %863 = vmatmul.mubr.f32.gmra.mrb[0].mxu0 %v775
    %v864 = vpop.f32.mrb[0].mxu0
    %v865 = vadd.f32 0.0, %v864
    %v866 = vpop.f32.mrb[0].mxu0
    %867 = vmatprep.mubr.f32.mxu0 0.0
    %868 = vmatmul.mubr.f32.gmra.mrb[0].mxu0 %v778
    %v869 = vpop.f32.mrb[0].mxu0
    %v870 = vadd.f32 0.0, %v869
    %v871 = vpop.f32.mrb[0].mxu0
    %872 = vmatprep.mubr.f32.mxu0 0.0
    %873 = vmatmul.mubr.f32.gmra.mrb[0].mxu0 %v781
    %v874 = vpop.f32.mrb[0].mxu0
    %v875 = vadd.f32 0.0, %v874
    %v876 = vpop.f32.mrb[0].mxu0
    %877 = vdwg.mxu0
    %vm878 = vcmp.gt.f32.partialorder %v850, 0.0
    %vm879 = vcmp.gt.f32.partialorder %v855, 0.0
    %vm880 = vcmp.gt.f32.partialorder %v860, 0.0
    %vm881 = vcmp.gt.f32.partialorder %v865, 0.0
    %vm882 = vcmp.gt.f32.partialorder %v870, 0.0
    %vm883 = vcmp.gt.f32.partialorder %v875, 0.0
    %v884 = vmul.f32 %v850, 1.442695
    %v885 = vpow.pop %v884
    %v886 = vmul.f32 %v855, 1.442695
    %v887 = vpow.pop %v886
    %v888 = vmul.f32 %v860, 1.442695
    %v889 = vpow.pop %v888
    %v890 = vmul.f32 %v865, 1.442695
    %v891 = vpow.pop %v890
    %v892 = vmul.f32 %v870, 1.442695
    %v893 = vpow.pop %v892
    %v894 = vmul.f32 %v875, 1.442695
    %v895 = vpow.pop %v894
    %v896 = vsub.f32 %v885, 1.0
    %v897 = vsub.f32 %v887, 1.0
    %v898 = vsub.f32 %v889, 1.0
    %v899 = vsub.f32 %v891, 1.0
    %v900 = vsub.f32 %v893, 1.0
    %v901 = vsub.f32 %v895, 1.0
    %v902 = vsel %vm878, %v850, %v896
    %v903 = vsel %vm879, %v855, %v897
    %v904 = vsel %vm880, %v860, %v898
    %v905 = vsel %vm881, %v865, %v899
    %v906 = vsel %vm882, %v870, %v900
    %v907 = vsel %vm883, %v875, %v901
    %914 = vrot.lane.b32.xlu0 %v902, 8
    %v915 = vpop.permute.xlu0 %914
    %916 = vrot.lane.b32.xlu0 %v903, 8
    %v917 = vpop.permute.xlu0 %916
    %918 = vrot.lane.b32.xlu0 %v904, 8
    %v919 = vpop.permute.xlu0 %918
    %920 = vrot.lane.b32.xlu0 %v905, 8
    %v921 = vpop.permute.xlu0 %920
    %922 = vrot.lane.b32.xlu0 %v906, 8
    %v923 = vpop.permute.xlu0 %922
    %924 = vrot.lane.b32.xlu0 %v907, 8
    %v925 = vpop.permute.xlu0 %924
    %v932 = vsel %vm180, %v508, %v915
    %v933 = vsel %vm180, %v509, %v917
    %v934 = vsel %vm180, %v510, %v919
    %v935 = vsel %vm180, %v511, %v921
    %v936 = vsel %vm180, %v512, %v923
    %v937 = vsel %vm180, %v513, %v925
    %v938 = vld [vmem:[%s4] sm:$0xff]
    %v939 = vld [vmem:[%s4 + $0x8] sm:$0xff]
    %v940 = vlaneseq
    %v941 = vshrl.u32 %v940, 7
    %v942 = vsub.s32 4, %v941
    %v943 = vrot.slane %v38, %v942
    %vm944 = vcmask 130048
    %v946 = vsel %vm944, %v932, 0
    %v949 = vsel %vm944, %v933, 0
    %v952 = vsel %vm944, %v934, 0
    %v955 = vsel %vm944, %v935, 0
    %v958 = vsel %vm944, %v936, 0
    %v961 = vsel %vm944, %v937, 0
    %963 = vmatprep.subr.mxu0 0.0
    %964 = vmatpush1.msra.mxu0 %v938
    %965 = vmatprep.subr.mxu0 0.0
    %966 = vmatpush1.msra.mxu0 %v939
    %967 = vmatprep.subr.mxu0 0.0
    %968 = vmatpush1.msra.mxu0 0.0
    %969 = vmatprep.subr.mxu0 0.0
    %970 = vmatpush1.msra.mxu0 0.0
    %971 = vmatprep.subr.mxu0 0.0
    %972 = vmatpush1.msra.mxu0 0.0
    %973 = vmatprep.subr.mxu0 0.0
    %974 = vmatpush1.msra.mxu0 0.0
    %975 = vmatprep.subr.mxu0 0.0
    %976 = vmatpush1.msra.mxu0 0.0
    %977 = vmatprep.subr.mxu0 0.0
    %978 = vmatpush1.msra.mxu0 0.0
    %979 = vmatprep.subr.mxu0 0.0
    %980 = vmatpush1.msra.mxu0 0.0
    %981 = vmatprep.subr.mxu0 0.0
    %982 = vmatpush1.msra.mxu0 0.0
    %983 = vmatprep.subr.mxu0 0.0
    %984 = vmatpush1.msra.mxu0 0.0
    %985 = vmatprep.subr.mxu0 0.0
    %986 = vmatpush1.msra.mxu0 0.0
    %987 = vmatprep.subr.mxu0 0.0
    %988 = vmatpush1.msra.mxu0 0.0
    %989 = vmatprep.subr.mxu0 0.0
    %990 = vmatpush1.msra.mxu0 0.0
    %991 = vmatprep.subr.mxu0 0.0
    %992 = vmatpush1.msra.mxu0 0.0
    %993 = vmatprep.subr.mxu0 0.0
    %994 = vmatpush1.msra.mxu0 0.0
    %995 = vmatprep.subr.mxu0 0.0
    %996 = vmatpush1.msra.mxu0 0.0
    %997 = vmatprep.subr.mxu0 0.0
    %998 = vmatpush1.msra.mxu0 0.0
    %999 = vmatprep.subr.mxu0 0.0
    %1000 = vmatpush1.msra.mxu0 0.0
    %1001 = vmatprep.subr.mxu0 0.0
    %1002 = vmatpush1.msra.mxu0 0.0
    %1003 = vmatprep.subr.mxu0 0.0
    %1004 = vmatpush1.msra.mxu0 0.0
    %1005 = vmatprep.subr.mxu0 0.0
    %1006 = vmatpush1.msra.mxu0 0.0
    %1007 = vmatprep.subr.mxu0 0.0
    %1008 = vmatpush1.msra.mxu0 0.0
    %1009 = vmatprep.subr.mxu0 0.0
    %1010 = vmatpush1.msra.mxu0 0.0
    %1011 = vmatprep.subr.mxu0 0.0
    %1012 = vmatpush1.msra.mxu0 0.0
    %1013 = vmatprep.subr.mxu0 0.0
    %1014 = vmatpush1.msra.mxu0 0.0
    %1015 = vmatprep.subr.mxu0 0.0
    %1016 = vmatpush1.msra.mxu0 0.0
    %1017 = vmatprep.subr.mxu0 0.0
    %1018 = vmatpush1.msra.mxu0 0.0
    %1019 = vmatprep.subr.mxu0 0.0
    %1020 = vmatpush1.msra.mxu0 0.0
    %1021 = vmatprep.subr.mxu0 0.0
    %1022 = vmatpush1.msra.mxu0 0.0
    %1023 = vmatprep.subr.mxu0 0.0
    %1024 = vmatpush1.msra.mxu0 0.0
    %1025 = vmatprep.subr.mxu0 0.0
    %1026 = vmatpush1.msra.mxu0 0.0
    %1027 = vmatprep.mubr.f32.mxu0 0.0
    %1028 = vmatmul.mubr.f32.gmra.mrb[0].mxu0 %v946
    %v1029 = vpop.f32.mrb[0].mxu0
    %v1030 = vadd.f32 %v943, %v1029
    %v1031 = vpop.f32.mrb[0].mxu0
    %1032 = vmatprep.mubr.f32.mxu0 0.0
    %1033 = vmatmul.mubr.f32.gmra.mrb[0].mxu0 %v949
    %v1034 = vpop.f32.mrb[0].mxu0
    %v1035 = vadd.f32 %v943, %v1034
    %v1036 = vpop.f32.mrb[0].mxu0
    %1037 = vmatprep.mubr.f32.mxu0 0.0
    %1038 = vmatmul.mubr.f32.gmra.mrb[0].mxu0 %v952
    %v1039 = vpop.f32.mrb[0].mxu0
    %v1040 = vadd.f32 %v943, %v1039
    %v1041 = vpop.f32.mrb[0].mxu0
    %1042 = vmatprep.mubr.f32.mxu0 0.0
    %1043 = vmatmul.mubr.f32.gmra.mrb[0].mxu0 %v955
    %v1044 = vpop.f32.mrb[0].mxu0
    %v1045 = vadd.f32 %v943, %v1044
    %v1046 = vpop.f32.mrb[0].mxu0
    %1047 = vmatprep.mubr.f32.mxu0 0.0
    %1048 = vmatmul.mubr.f32.gmra.mrb[0].mxu0 %v958
    %v1049 = vpop.f32.mrb[0].mxu0
    %v1050 = vadd.f32 %v943, %v1049
    %v1051 = vpop.f32.mrb[0].mxu0
    %1052 = vmatprep.mubr.f32.mxu0 0.0
    %1053 = vmatmul.mubr.f32.gmra.mrb[0].mxu0 %v961
    %v1054 = vpop.f32.mrb[0].mxu0
    %v1055 = vadd.f32 %v943, %v1054
    %v1056 = vpop.f32.mrb[0].mxu0
    %1057 = vdwg.mxu0
    %v1058 = vlaneseq
    %v1059 = vshrl.u32 %v1058, 7
    %v1060 = vsub.s32 5, %v1059
    %v1061 = vrot.slane %v38, %v1060
    %v1062 = vmul.f32 %v1030, %v1061
    %v1063 = vmul.f32 %v1035, %v1061
    %v1064 = vmul.f32 %v1040, %v1061
    %v1065 = vmul.f32 %v1045, %v1061
    %v1066 = vmul.f32 %v1050, %v1061
    %v1067 = vmul.f32 %v1055, %v1061
    %v1068 = vsel %vm944, %v1062, 0.0
    %1069 = vadd.xlane.f32.xlu0 %v1068
    %v1070 = vpop.xlane.xlu0 %1069
    %v1071 = vsel %vm944, %v1063, 0.0
    %1072 = vadd.xlane.f32.xlu0 %v1071
    %v1073 = vpop.xlane.xlu0 %1072
    %v1074 = vsel %vm944, %v1064, 0.0
    %1075 = vadd.xlane.f32.xlu0 %v1074
    %v1076 = vpop.xlane.xlu0 %1075
    %v1077 = vsel %vm944, %v1065, 0.0
    %1078 = vadd.xlane.f32.xlu0 %v1077
    %v1079 = vpop.xlane.xlu0 %1078
    %v1080 = vsel %vm944, %v1066, 0.0
    %1081 = vadd.xlane.f32.xlu0 %v1080
    %v1082 = vpop.xlane.xlu0 %1081
    %v1083 = vsel %vm944, %v1067, 0.0
    %1084 = vadd.xlane.f32.xlu0 %v1083
    %v1085 = vpop.xlane.xlu0 %1084
    %v1086 = vlaneseq
    %v1087 = vshrl.u32 %v1086, 7
    %v1088 = vsub.s32 6, %v1087
    %v1089 = vrot.slane %v38, %v1088
    %v1090 = vmul.f32 %v1030, %v1089
    %v1091 = vmul.f32 %v1035, %v1089
    %v1092 = vmul.f32 %v1040, %v1089
    %v1093 = vmul.f32 %v1045, %v1089
    %v1094 = vmul.f32 %v1050, %v1089
    %v1095 = vmul.f32 %v1055, %v1089
    %v1096 = vsel %vm944, %v1090, 0.0
    %1097 = vadd.xlane.f32.xlu0 %v1096
    %v1098 = vpop.xlane.xlu0 %1097
    %v1099 = vsel %vm944, %v1091, 0.0
    %1100 = vadd.xlane.f32.xlu0 %v1099
    %v1101 = vpop.xlane.xlu0 %1100
    %v1102 = vsel %vm944, %v1092, 0.0
    %1103 = vadd.xlane.f32.xlu0 %v1102
    %v1104 = vpop.xlane.xlu0 %1103
    %v1105 = vsel %vm944, %v1093, 0.0
    %1106 = vadd.xlane.f32.xlu0 %v1105
    %v1107 = vpop.xlane.xlu0 %1106
    %v1108 = vsel %vm944, %v1094, 0.0
    %1109 = vadd.xlane.f32.xlu0 %v1108
    %v1110 = vpop.xlane.xlu0 %1109
    %v1111 = vsel %vm944, %v1095, 0.0
    %1112 = vadd.xlane.f32.xlu0 %v1111
    %v1113 = vpop.xlane.xlu0 %1112
    %1114 = vxpose.xlu0.b32.start [1/16] %v1070, 128
    %1115 = vxpose.xlu0.b32.cont [2/16] %v1073, 128
    %1116 = vxpose.xlu0.b32.cont [3/16] %v1076, 128
    %1117 = vxpose.xlu0.b32.cont [4/16] %v1079, 128
    %1118 = vxpose.xlu0.b32.cont [5/16] %v1082, 128
    %1119 = vxpose.xlu0.b32.cont [6/16] %v1085, 128
    %1120 = vxpose.xlu0.b32.cont [7/16] 0.0, 128
    %1121 = vxpose.xlu0.b32.cont [8/16] 0.0, 128
    %1122 = vxpose.xlu0.b32.cont [9/16] 0.0, 128
    %1123 = vxpose.xlu0.b32.cont [10/16] 0.0, 128
    %1124 = vxpose.xlu0.b32.cont [11/16] 0.0, 128
    %1125 = vxpose.xlu0.b32.cont [12/16] 0.0, 128
    %1126 = vxpose.xlu0.b32.cont [13/16] 0.0, 128
    %1127 = vxpose.xlu0.b32.cont [14/16] 0.0, 128
    %1128 = vxpose.xlu0.b32.cont [15/16] 0.0, 128
    %1129 = vxpose.xlu0.b32.end [16/16] 0.0, 128
    %v1130 = vpop.trf.xlu0
    %v1131 = vpop.trf.xlu0
    %v1132 = vpop.trf.xlu0
    %v1133 = vpop.trf.xlu0
    %v1134 = vpop.trf.xlu0
    %v1135 = vpop.trf.xlu0
    %v1136 = vpop.trf.xlu0
    %v1137 = vpop.trf.xlu0
    %v1138 = vpop.trf.xlu0
    %v1139 = vpop.trf.xlu0
    %v1140 = vpop.trf.xlu0
    %v1141 = vpop.trf.xlu0
    %v1142 = vpop.trf.xlu0
    %v1143 = vpop.trf.xlu0
    %v1144 = vpop.trf.xlu0
    %v1145 = vpop.trf.xlu0
    %v1146 = vlaneseq
    %v1147 = vshrl.u32 %v1146, 7
    %v1148 = vsub.s32 0, %v1147
    %v1149 = vrot.slane %v1130, %v1148
    %v1150 = vadd.f32 %v1098, %v1149
    %v1151 = vadd.f32 %v1101, %v1149
    %v1152 = vadd.f32 %v1104, %v1149
    %v1153 = vadd.f32 %v1107, %v1149
    %v1154 = vadd.f32 %v1110, %v1149
    %v1155 = vadd.f32 %v1113, %v1149
    %v1156 = vrot.slane %v38, 7
    %s1157 = vtos %v1156
    %v1158 = vstv %s1157
    %v1160 = vadd.f32 %v1150, %v1158
    %v1161 = vadd.f32 %v1151, %v1158
    %v1162 = vadd.f32 %v1152, %v1158
    %v1163 = vadd.f32 %v1153, %v1158
    %v1164 = vadd.f32 %v1154, %v1158
    %v1165 = vadd.f32 %v1155, %v1158
    %vm1166 = vcmp.gt.f32.partialorder %v1160, 0.0
    %vm1167 = vcmp.gt.f32.partialorder %v1161, 0.0
    %vm1168 = vcmp.gt.f32.partialorder %v1162, 0.0
    %vm1169 = vcmp.gt.f32.partialorder %v1163, 0.0
    %vm1170 = vcmp.gt.f32.partialorder %v1164, 0.0
    %vm1171 = vcmp.gt.f32.partialorder %v1165, 0.0
    %v1172 = vmul.f32 %v1160, 0.01
    %v1173 = vmul.f32 %v1161, 0.01
    %v1174 = vmul.f32 %v1162, 0.01
    %v1175 = vmul.f32 %v1163, 0.01
    %v1176 = vmul.f32 %v1164, 0.01
    %v1177 = vmul.f32 %v1165, 0.01
    %v1178 = vsel %vm1166, %v1160, %v1172
    %v1179 = vsel %vm1167, %v1161, %v1173
    %v1180 = vsel %vm1168, %v1162, %v1174
    %v1181 = vsel %vm1169, %v1163, %v1175
    %v1182 = vsel %vm1170, %v1164, %v1176
    %v1183 = vsel %vm1171, %v1165, %v1177
    %v1184 = vadd.f32 %v1178, %v32
    %v1185 = vadd.f32 %v1179, %v33
    %v1186 = vadd.f32 %v1180, %v34
    %v1187 = vadd.f32 %v1181, %v35
    %v1188 = vadd.f32 %v1182, %v36
    %v1189 = vadd.f32 %v1183, %v37
    %v1190 = vsel %vm304, %v1184, -inf
    %1191 = vmax.xlane.f32.xlu0 %v1190
    %v1192 = vpop.xlane.xlu0 %1191
    %v1193 = vsel %vm304, %v1185, -inf
    %1194 = vmax.xlane.f32.xlu0 %v1193
    %v1195 = vpop.xlane.xlu0 %1194
    %v1196 = vsel %vm304, %v1186, -inf
    %1197 = vmax.xlane.f32.xlu0 %v1196
    %v1198 = vpop.xlane.xlu0 %1197
    %v1199 = vsel %vm304, %v1187, -inf
    %1200 = vmax.xlane.f32.xlu0 %v1199
    %v1201 = vpop.xlane.xlu0 %1200
    %v1202 = vsel %vm304, %v1188, -inf
    %1203 = vmax.xlane.f32.xlu0 %v1202
    %v1204 = vpop.xlane.xlu0 %1203
    %v1205 = vsel %vm304, %v1189, -inf
    %1206 = vmax.xlane.f32.xlu0 %v1205
    %v1207 = vpop.xlane.xlu0 %1206
    %v1208 = vsub.f32 %v1184, %v1192
    %v1209 = vsub.f32 %v1185, %v1195
    %v1210 = vsub.f32 %v1186, %v1198
    %v1211 = vsub.f32 %v1187, %v1201
    %v1212 = vsub.f32 %v1188, %v1204
    %v1213 = vsub.f32 %v1189, %v1207
    %v1214 = vmul.f32 %v1208, 1.442695
    %v1215 = vpow.pop %v1214
    %v1216 = vmul.f32 %v1209, 1.442695
    %v1217 = vpow.pop %v1216
    %v1218 = vmul.f32 %v1210, 1.442695
    %v1219 = vpow.pop %v1218
    %v1220 = vmul.f32 %v1211, 1.442695
    %v1221 = vpow.pop %v1220
    %v1222 = vmul.f32 %v1212, 1.442695
    %v1223 = vpow.pop %v1222
    %v1224 = vmul.f32 %v1213, 1.442695
    %v1225 = vpow.pop %v1224
    %v1226 = vsel %vm304, %v1215, 0.0
    %1227 = vadd.xlane.f32.xlu0 %v1226
    %v1228 = vpop.xlane.xlu0 %1227
    %v1229 = vsel %vm304, %v1217, 0.0
    %1230 = vadd.xlane.f32.xlu0 %v1229
    %v1231 = vpop.xlane.xlu0 %1230
    %v1232 = vsel %vm304, %v1219, 0.0
    %1233 = vadd.xlane.f32.xlu0 %v1232
    %v1234 = vpop.xlane.xlu0 %1233
    %v1235 = vsel %vm304, %v1221, 0.0
    %1236 = vadd.xlane.f32.xlu0 %v1235
    %v1237 = vpop.xlane.xlu0 %1236
    %v1238 = vsel %vm304, %v1223, 0.0
    %1239 = vadd.xlane.f32.xlu0 %v1238
    %v1240 = vpop.xlane.xlu0 %1239
    %v1241 = vsel %vm304, %v1225, 0.0
    %1242 = vadd.xlane.f32.xlu0 %v1241
    %v1243 = vpop.xlane.xlu0 %1242
    %v1244 = vrcp.pop %v1228
    %v1245 = vrcp.pop %v1231
    %v1246 = vrcp.pop %v1234
    %v1247 = vrcp.pop %v1237
    %v1248 = vrcp.pop %v1240
    %v1249 = vrcp.pop %v1243
    %v1250 = vmul.f32 %v1215, %v1244
    %v1251 = vmul.f32 %v1217, %v1245
    %v1252 = vmul.f32 %v1219, %v1246
    %v1253 = vmul.f32 %v1221, %v1247
    %v1254 = vmul.f32 %v1223, %v1248
    %v1255 = vmul.f32 %v1225, %v1249
    %v1257 = vsel %vm304, %v1250, 0
    %v1260 = vsel %vm304, %v1251, 0
    %v1263 = vsel %vm304, %v1252, 0
    %v1266 = vsel %vm304, %v1253, 0
    %v1269 = vsel %vm304, %v1254, 0
    %v1272 = vsel %vm304, %v1255, 0
    %1274 = vmatprep.subr.mxu0 0.0
    %1275 = vmatpush1.msra.mxu0 %v1030
    %1276 = vmatprep.subr.mxu0 0.0
    %1277 = vmatpush1.msra.mxu0 %v1035
    %1278 = vmatprep.subr.mxu0 0.0
    %1279 = vmatpush1.msra.mxu0 %v1040
    %1280 = vmatprep.subr.mxu0 0.0
    %1281 = vmatpush1.msra.mxu0 %v1045
    %1282 = vmatprep.subr.mxu0 0.0
    %1283 = vmatpush1.msra.mxu0 %v1050
    %1284 = vmatprep.subr.mxu0 0.0
    %1285 = vmatpush1.msra.mxu0 %v1055
    %1286 = vmatprep.subr.mxu0 0.0
    %1287 = vmatpush1.msra.mxu0 0.0
    %1288 = vmatprep.subr.mxu0 0.0
    %1289 = vmatpush1.msra.mxu0 0.0
    %1290 = vmatprep.subr.mxu0 0.0
    %1291 = vmatpush1.msra.mxu0 0.0
    %1292 = vmatprep.subr.mxu0 0.0
    %1293 = vmatpush1.msra.mxu0 0.0
    %1294 = vmatprep.subr.mxu0 0.0
    %1295 = vmatpush1.msra.mxu0 0.0
    %1296 = vmatprep.subr.mxu0 0.0
    %1297 = vmatpush1.msra.mxu0 0.0
    %1298 = vmatprep.subr.mxu0 0.0
    %1299 = vmatpush1.msra.mxu0 0.0
    %1300 = vmatprep.subr.mxu0 0.0
    %1301 = vmatpush1.msra.mxu0 0.0
    %1302 = vmatprep.subr.mxu0 0.0
    %1303 = vmatpush1.msra.mxu0 0.0
    %1304 = vmatprep.subr.mxu0 0.0
    %1305 = vmatpush1.msra.mxu0 0.0
    %1306 = vmatprep.subr.mxu0 0.0
    %1307 = vmatpush1.msra.mxu0 0.0
    %1308 = vmatprep.subr.mxu0 0.0
    %1309 = vmatpush1.msra.mxu0 0.0
    %1310 = vmatprep.subr.mxu0 0.0
    %1311 = vmatpush1.msra.mxu0 0.0
    %1312 = vmatprep.subr.mxu0 0.0
    %1313 = vmatpush1.msra.mxu0 0.0
    %1314 = vmatprep.subr.mxu0 0.0
    %1315 = vmatpush1.msra.mxu0 0.0
    %1316 = vmatprep.subr.mxu0 0.0
    %1317 = vmatpush1.msra.mxu0 0.0
    %1318 = vmatprep.subr.mxu0 0.0
    %1319 = vmatpush1.msra.mxu0 0.0
    %1320 = vmatprep.subr.mxu0 0.0
    %1321 = vmatpush1.msra.mxu0 0.0
    %1322 = vmatprep.subr.mxu0 0.0
    %1323 = vmatpush1.msra.mxu0 0.0
    %1324 = vmatprep.subr.mxu0 0.0
    %1325 = vmatpush1.msra.mxu0 0.0
    %1326 = vmatprep.subr.mxu0 0.0
    %1327 = vmatpush1.msra.mxu0 0.0
    %1328 = vmatprep.subr.mxu0 0.0
    %1329 = vmatpush1.msra.mxu0 0.0
    %1330 = vmatprep.subr.mxu0 0.0
    %1331 = vmatpush1.msra.mxu0 0.0
    %1332 = vmatprep.subr.mxu0 0.0
    %1333 = vmatpush1.msra.mxu0 0.0
    %1334 = vmatprep.subr.mxu0 0.0
    %1335 = vmatpush1.msra.mxu0 0.0
    %1336 = vmatprep.subr.mxu0 0.0
    %1337 = vmatpush1.msra.mxu0 0.0
    %1338 = vmatprep.mubr.f32.mxu0 0.0
    %1339 = vmatmul.mubr.f32.gmra.mrb[0].mxu0 %v1257
    %v1340 = vpop.f32.mrb[0].mxu0
    %v1341 = vadd.f32 0.0, %v1340
    %v1342 = vpop.f32.mrb[0].mxu0
    %1343 = vmatprep.mubr.f32.mxu0 0.0
    %1344 = vmatmul.mubr.f32.gmra.mrb[0].mxu0 %v1260
    %v1345 = vpop.f32.mrb[0].mxu0
    %v1346 = vadd.f32 0.0, %v1345
    %v1347 = vpop.f32.mrb[0].mxu0
    %1348 = vmatprep.mubr.f32.mxu0 0.0
    %1349 = vmatmul.mubr.f32.gmra.mrb[0].mxu0 %v1263
    %v1350 = vpop.f32.mrb[0].mxu0
    %v1351 = vadd.f32 0.0, %v1350
    %v1352 = vpop.f32.mrb[0].mxu0
    %1353 = vmatprep.mubr.f32.mxu0 0.0
    %1354 = vmatmul.mubr.f32.gmra.mrb[0].mxu0 %v1266
    %v1355 = vpop.f32.mrb[0].mxu0
    %v1356 = vadd.f32 0.0, %v1355
    %v1357 = vpop.f32.mrb[0].mxu0
    %1358 = vmatprep.mubr.f32.mxu0 0.0
    %1359 = vmatmul.mubr.f32.gmra.mrb[0].mxu0 %v1269
    %v1360 = vpop.f32.mrb[0].mxu0
    %v1361 = vadd.f32 0.0, %v1360
    %v1362 = vpop.f32.mrb[0].mxu0
    %1363 = vmatprep.mubr.f32.mxu0 0.0
    %1364 = vmatmul.mubr.f32.gmra.mrb[0].mxu0 %v1272
    %v1365 = vpop.f32.mrb[0].mxu0
    %v1366 = vadd.f32 0.0, %v1365
    %v1367 = vpop.f32.mrb[0].mxu0
    %1368 = vdwg.mxu0
    %vm1369 = vcmp.gt.f32.partialorder %v1341, 0.0
    %vm1370 = vcmp.gt.f32.partialorder %v1346, 0.0
    %vm1371 = vcmp.gt.f32.partialorder %v1351, 0.0
    %vm1372 = vcmp.gt.f32.partialorder %v1356, 0.0
    %vm1373 = vcmp.gt.f32.partialorder %v1361, 0.0
    %vm1374 = vcmp.gt.f32.partialorder %v1366, 0.0
    %v1375 = vmul.f32 %v1341, 1.442695
    %v1376 = vpow.pop %v1375
    %v1377 = vmul.f32 %v1346, 1.442695
    %v1378 = vpow.pop %v1377
    %v1379 = vmul.f32 %v1351, 1.442695
    %v1380 = vpow.pop %v1379
    %v1381 = vmul.f32 %v1356, 1.442695
    %v1382 = vpow.pop %v1381
    %v1383 = vmul.f32 %v1361, 1.442695
    %v1384 = vpow.pop %v1383
    %v1385 = vmul.f32 %v1366, 1.442695
    %v1386 = vpow.pop %v1385
    %v1387 = vsub.f32 %v1376, 1.0
    %v1388 = vsub.f32 %v1378, 1.0
    %v1389 = vsub.f32 %v1380, 1.0
    %v1390 = vsub.f32 %v1382, 1.0
    %v1391 = vsub.f32 %v1384, 1.0
    %v1392 = vsub.f32 %v1386, 1.0
    %v1393 = vsel %vm1369, %v1341, %v1387
    %v1394 = vsel %vm1370, %v1346, %v1388
    %v1395 = vsel %vm1371, %v1351, %v1389
    %v1396 = vsel %vm1372, %v1356, %v1390
    %v1397 = vsel %vm1373, %v1361, %v1391
    %v1398 = vsel %vm1374, %v1366, %v1392
    %v1399 = vsel %vm944, %v1393, -inf
    %v1400 = vrot.slane %v1399, 4
    %v1401 = vmax.f32 %v1399, %v1400
    %v1402 = vrot.slane %v1401, 2
    %v1403 = vmax.f32 %v1401, %v1402
    %v1404 = vrot.slane %v1403, 1
    %v1405 = vmax.f32 %v1403, %v1404
    %v1406 = vsel %vm944, %v1394, -inf
    %v1407 = vrot.slane %v1406, 4
    %v1408 = vmax.f32 %v1406, %v1407
    %v1409 = vrot.slane %v1408, 2
    %v1410 = vmax.f32 %v1408, %v1409
    %v1411 = vrot.slane %v1410, 1
    %v1412 = vmax.f32 %v1410, %v1411
    %v1413 = vsel %vm944, %v1395, -inf
    %v1414 = vrot.slane %v1413, 4
    %v1415 = vmax.f32 %v1413, %v1414
    %v1416 = vrot.slane %v1415, 2
    %v1417 = vmax.f32 %v1415, %v1416
    %v1418 = vrot.slane %v1417, 1
    %v1419 = vmax.f32 %v1417, %v1418
    %v1420 = vsel %vm944, %v1396, -inf
    %v1421 = vrot.slane %v1420, 4
    %v1422 = vmax.f32 %v1420, %v1421
    %v1423 = vrot.slane %v1422, 2
    %v1424 = vmax.f32 %v1422, %v1423
    %v1425 = vrot.slane %v1424, 1
    %v1426 = vmax.f32 %v1424, %v1425
    %v1427 = vsel %vm944, %v1397, -inf
    %v1428 = vrot.slane %v1427, 4
    %v1429 = vmax.f32 %v1427, %v1428
    %v1430 = vrot.slane %v1429, 2
    %v1431 = vmax.f32 %v1429, %v1430
    %v1432 = vrot.slane %v1431, 1
    %v1433 = vmax.f32 %v1431, %v1432
    %v1434 = vsel %vm944, %v1398, -inf
    %v1435 = vrot.slane %v1434, 4
    %v1436 = vmax.f32 %v1434, %v1435
    %v1437 = vrot.slane %v1436, 2
    %v1438 = vmax.f32 %v1436, %v1437
    %v1439 = vrot.slane %v1438, 1
    %v1440 = vmax.f32 %v1438, %v1439
    %vm1441 = vcmask 1040384
    %v1442 = vsel %vm1441, %v1405, %v1412
    %vm1443 = vcmask 1041408
    %v1444 = vsel %vm1443, %v1442, %v1419
    %vm1445 = vcmask 1042432
    %v1446 = vsel %vm1445, %v1444, %v1426
    %v1447 = vsel %vm71, %v1446, %v1433
    %vm1448 = vcmask 1044480
    %v1449 = vsel %vm1448, %v1447, %v1440
    %v1450 = vlaneseq
    %v1451 = vand.u32 %v1450, 127
    %vm1452 = vcmp.lt.s32.totalorder %v1451, 32
    %v1453 = vsel %vm1452, %v39, 0.0
    %v1454 = vsub.f32 %v39, %v1453
    %v1455 = vld [vmem:[%s5] sm:$0xff]
    %v1456 = vld [vmem:[%s5 + $0x8] sm:$0xff]
    %v1457 = vlaneseq
    %v1458 = vshrl.u32 %v1457, 7
    %v1459 = vsub.s32 0, %v1458
    %v1460 = vrot.slane %v39, %v1459
    %v1462 = vsel %vm944, %v1449, 0
    %1464 = vmatprep.subr.mxu0 0.0
    %1465 = vmatpush1.msra.mxu0 %v1455
    %1466 = vmatprep.subr.mxu0 0.0
    %1467 = vmatpush1.msra.mxu0 %v1456
    %1468 = vmatprep.subr.mxu0 0.0
    %1469 = vmatpush1.msra.mxu0 0.0
    %1470 = vmatprep.subr.mxu0 0.0
    %1471 = vmatpush1.msra.mxu0 0.0
    %1472 = vmatprep.subr.mxu0 0.0
    %1473 = vmatpush1.msra.mxu0 0.0
    %1474 = vmatprep.subr.mxu0 0.0
    %1475 = vmatpush1.msra.mxu0 0.0
    %1476 = vmatprep.subr.mxu0 0.0
    %1477 = vmatpush1.msra.mxu0 0.0
    %1478 = vmatprep.subr.mxu0 0.0
    %1479 = vmatpush1.msra.mxu0 0.0
    %1480 = vmatprep.subr.mxu0 0.0
    %1481 = vmatpush1.msra.mxu0 0.0
    %1482 = vmatprep.subr.mxu0 0.0
    %1483 = vmatpush1.msra.mxu0 0.0
    %1484 = vmatprep.subr.mxu0 0.0
    %1485 = vmatpush1.msra.mxu0 0.0
    %1486 = vmatprep.subr.mxu0 0.0
    %1487 = vmatpush1.msra.mxu0 0.0
    %1488 = vmatprep.subr.mxu0 0.0
    %1489 = vmatpush1.msra.mxu0 0.0
    %1490 = vmatprep.subr.mxu0 0.0
    %1491 = vmatpush1.msra.mxu0 0.0
    %1492 = vmatprep.subr.mxu0 0.0
    %1493 = vmatpush1.msra.mxu0 0.0
    %1494 = vmatprep.subr.mxu0 0.0
    %1495 = vmatpush1.msra.mxu0 0.0
    %1496 = vmatprep.subr.mxu0 0.0
    %1497 = vmatpush1.msra.mxu0 0.0
    %1498 = vmatprep.subr.mxu0 0.0
    %1499 = vmatpush1.msra.mxu0 0.0
    %1500 = vmatprep.subr.mxu0 0.0
    %1501 = vmatpush1.msra.mxu0 0.0
    %1502 = vmatprep.subr.mxu0 0.0
    %1503 = vmatpush1.msra.mxu0 0.0
    %1504 = vmatprep.subr.mxu0 0.0
    %1505 = vmatpush1.msra.mxu0 0.0
    %1506 = vmatprep.subr.mxu0 0.0
    %1507 = vmatpush1.msra.mxu0 0.0
    %1508 = vmatprep.subr.mxu0 0.0
    %1509 = vmatpush1.msra.mxu0 0.0
    %1510 = vmatprep.subr.mxu0 0.0
    %1511 = vmatpush1.msra.mxu0 0.0
    %1512 = vmatprep.subr.mxu0 0.0
    %1513 = vmatpush1.msra.mxu0 0.0
    %1514 = vmatprep.subr.mxu0 0.0
    %1515 = vmatpush1.msra.mxu0 0.0
    %1516 = vmatprep.subr.mxu0 0.0
    %1517 = vmatpush1.msra.mxu0 0.0
    %1518 = vmatprep.subr.mxu0 0.0
    %1519 = vmatpush1.msra.mxu0 0.0
    %1520 = vmatprep.subr.mxu0 0.0
    %1521 = vmatpush1.msra.mxu0 0.0
    %1522 = vmatprep.subr.mxu0 0.0
    %1523 = vmatpush1.msra.mxu0 0.0
    %1524 = vmatprep.subr.mxu0 0.0
    %1525 = vmatpush1.msra.mxu0 0.0
    %1526 = vmatprep.subr.mxu0 0.0
    %1527 = vmatpush1.msra.mxu0 0.0
    %1528 = vmatprep.mubr.f32.mxu0 0.0
    %1529 = vmatmul.mubr.f32.gmra.mrb[0].mxu0 %v1462
    %v1530 = vpop.f32.mrb[0].mxu0
    %v1531 = vadd.f32 %v1460, %v1530
    %v1532 = vpop.f32.mrb[0].mxu0
    %1533 = vdwg.mxu0
    %v1534 = vlaneseq
    %v1535 = vshrl.u32 %v1534, 7
    %v1536 = vsub.s32 1, %v1535
    %v1537 = vrot.slane %v1453, %v1536
    %v1538 = vadd.f32 %v1531, %v1537
    %1540 = vset.pattern.permute.xlu0 0
    %1541 = vperm.xlu0 %1540, %v40
    %v1542 = vpop.permute.xlu0 %1541
    %v1544 = vlaneseq
    %v1545 = vshrl.u32 %v1544, 7
    %v1546 = vsub.s32 2, %v1545
    %v1547 = vrot.slane %v39, %v1546
    %v1548 = vmul.f32 %v1542, %v1547
    %1549 = vset.pattern.permute.xlu0 1
    %1550 = vperm.xlu0 %1549, %v40
    %v1551 = vpop.permute.xlu0 %1550
    %v1553 = vlaneseq
    %v1554 = vshrl.u32 %v1553, 7
    %v1555 = vsub.s32 3, %v1554
    %v1556 = vrot.slane %v39, %v1555
    %v1557 = vmul.f32 %v1551, %v1556
    %v1558 = vadd.f32 %v1548, %v1557
    %v1559 = vlaneseq
    %v1560 = vshrl.u32 %v1559, 7
    %v1561 = vsub.s32 4, %v1560
    %v1562 = vrot.slane %v39, %v1561
    %v1563 = vadd.f32 %v1558, %v1562
    %v1564 = vld [vmem:[%s6] sm:$0xff]
    %v1565 = vld [vmem:[%s6 + $0x8] sm:$0xff]
    %v1567 = vrot.slane %v39, 5
    %v1568 = vsel %vm944, %v1567, 0
    %1570 = vmatprep.subr.mxu0 0.0
    %1571 = vmatpush1.msra.mxu0 %v1564
    %1572 = vmatprep.subr.mxu0 0.0
    %1573 = vmatpush1.msra.mxu0 %v1565
    %1574 = vmatprep.subr.mxu0 0.0
    %1575 = vmatpush1.msra.mxu0 0.0
    %1576 = vmatprep.subr.mxu0 0.0
    %1577 = vmatpush1.msra.mxu0 0.0
    %1578 = vmatprep.subr.mxu0 0.0
    %1579 = vmatpush1.msra.mxu0 0.0
    %1580 = vmatprep.subr.mxu0 0.0
    %1581 = vmatpush1.msra.mxu0 0.0
    %1582 = vmatprep.subr.mxu0 0.0
    %1583 = vmatpush1.msra.mxu0 0.0
    %1584 = vmatprep.subr.mxu0 0.0
    %1585 = vmatpush1.msra.mxu0 0.0
    %1586 = vmatprep.subr.mxu0 0.0
    %1587 = vmatpush1.msra.mxu0 0.0
    %1588 = vmatprep.subr.mxu0 0.0
    %1589 = vmatpush1.msra.mxu0 0.0
    %1590 = vmatprep.subr.mxu0 0.0
    %1591 = vmatpush1.msra.mxu0 0.0
    %1592 = vmatprep.subr.mxu0 0.0
    %1593 = vmatpush1.msra.mxu0 0.0
    %1594 = vmatprep.subr.mxu0 0.0
    %1595 = vmatpush1.msra.mxu0 0.0
    %1596 = vmatprep.subr.mxu0 0.0
    %1597 = vmatpush1.msra.mxu0 0.0
    %1598 = vmatprep.subr.mxu0 0.0
    %1599 = vmatpush1.msra.mxu0 0.0
    %1600 = vmatprep.subr.mxu0 0.0
    %1601 = vmatpush1.msra.mxu0 0.0
    %1602 = vmatprep.subr.mxu0 0.0
    %1603 = vmatpush1.msra.mxu0 0.0
    %1604 = vmatprep.subr.mxu0 0.0
    %1605 = vmatpush1.msra.mxu0 0.0
    %1606 = vmatprep.subr.mxu0 0.0
    %1607 = vmatpush1.msra.mxu0 0.0
    %1608 = vmatprep.subr.mxu0 0.0
    %1609 = vmatpush1.msra.mxu0 0.0
    %1610 = vmatprep.subr.mxu0 0.0
    %1611 = vmatpush1.msra.mxu0 0.0
    %1612 = vmatprep.subr.mxu0 0.0
    %1613 = vmatpush1.msra.mxu0 0.0
    %1614 = vmatprep.subr.mxu0 0.0
    %1615 = vmatpush1.msra.mxu0 0.0
    %1616 = vmatprep.subr.mxu0 0.0
    %1617 = vmatpush1.msra.mxu0 0.0
    %1618 = vmatprep.subr.mxu0 0.0
    %1619 = vmatpush1.msra.mxu0 0.0
    %1620 = vmatprep.subr.mxu0 0.0
    %1621 = vmatpush1.msra.mxu0 0.0
    %1622 = vmatprep.subr.mxu0 0.0
    %1623 = vmatpush1.msra.mxu0 0.0
    %1624 = vmatprep.subr.mxu0 0.0
    %1625 = vmatpush1.msra.mxu0 0.0
    %1626 = vmatprep.subr.mxu0 0.0
    %1627 = vmatpush1.msra.mxu0 0.0
    %1628 = vmatprep.subr.mxu0 0.0
    %1629 = vmatpush1.msra.mxu0 0.0
    %1630 = vmatprep.subr.mxu0 0.0
    %1631 = vmatpush1.msra.mxu0 0.0
    %1632 = vmatprep.subr.mxu0 0.0
    %1633 = vmatpush1.msra.mxu0 0.0
    %1634 = vmatprep.mubr.f32.mxu0 0.0
    %1635 = vmatmul.mubr.f32.gmra.mrb[0].mxu0 %v1568
    %v1636 = vpop.f32.mrb[0].mxu0
    %v1637 = vadd.f32 0.0, %v1636
    %v1638 = vpop.f32.mrb[0].mxu0
    %1639 = vdwg.mxu0
    %v1641 = vrot.slane %v1454, 1
    %v1643 = vadd.f32 %v1637, %v1641
    %v1644 = vadd.f32 %v1538, %v1643
    %v1645 = vxor.u32 %v1644, 2147483648
    %v1646 = vmul.f32 %v1645, 1.442695
    %v1647 = vpow.pop %v1646
    %v1648 = vadd.f32 %v1647, 1.0
    %v1649 = vrcp.pop %v1648
    %v1650 = vmul.f32 1.0, %v1649
    %1652 = vrot.lane.b32.xlu0 %v1643, 96
    %v1653 = vpop.permute.xlu0 %1652
    %v1655 = vmul.f32 %v1650, %v1653
    %1657 = vrot.lane.b32.xlu0 %v1655, 32
    %v1658 = vpop.permute.xlu0 %1657
    %v1660 = vadd.f32 %v1538, %v1658
    %v1661 = vtanh.pop %v1660
    %v1662 = vsub.f32 1.0, %v1650
    %1664 = vrot.lane.b32.xlu0 %v1661, 112
    %v1665 = vpop.permute.xlu0 %1664
    %v1667 = vmul.f32 %v1662, %v1665
    %1668 = vrot.lane.b32.xlu0 %v1567, 16
    %v1669 = vpop.permute.xlu0 %1668
    %v1671 = vmul.f32 %v1650, %v1669
    %v1672 = vadd.f32 %v1667, %v1671
    %1674 = vrot.lane.b32.xlu0 %v1672, 112
    %v1675 = vpop.permute.xlu0 %1674
    %v1676 = vsel %vm944, %v1675, 0
    %1678 = vmatprep.subr.mxu0 0.0
    %1679 = vmatpush1.msra.mxu0 %v1564
    %1680 = vmatprep.subr.mxu0 0.0
    %1681 = vmatpush1.msra.mxu0 %v1565
    %1682 = vmatprep.subr.mxu0 0.0
    %1683 = vmatpush1.msra.mxu0 0.0
    %1684 = vmatprep.subr.mxu0 0.0
    %1685 = vmatpush1.msra.mxu0 0.0
    %1686 = vmatprep.subr.mxu0 0.0
    %1687 = vmatpush1.msra.mxu0 0.0
    %1688 = vmatprep.subr.mxu0 0.0
    %1689 = vmatpush1.msra.mxu0 0.0
    %1690 = vmatprep.subr.mxu0 0.0
    %1691 = vmatpush1.msra.mxu0 0.0
    %1692 = vmatprep.subr.mxu0 0.0
    %1693 = vmatpush1.msra.mxu0 0.0
    %1694 = vmatprep.subr.mxu0 0.0
    %1695 = vmatpush1.msra.mxu0 0.0
    %1696 = vmatprep.subr.mxu0 0.0
    %1697 = vmatpush1.msra.mxu0 0.0
    %1698 = vmatprep.subr.mxu0 0.0
    %1699 = vmatpush1.msra.mxu0 0.0
    %1700 = vmatprep.subr.mxu0 0.0
    %1701 = vmatpush1.msra.mxu0 0.0
    %1702 = vmatprep.subr.mxu0 0.0
    %1703 = vmatpush1.msra.mxu0 0.0
    %1704 = vmatprep.subr.mxu0 0.0
    %1705 = vmatpush1.msra.mxu0 0.0
    %1706 = vmatprep.subr.mxu0 0.0
    %1707 = vmatpush1.msra.mxu0 0.0
    %1708 = vmatprep.subr.mxu0 0.0
    %1709 = vmatpush1.msra.mxu0 0.0
    %1710 = vmatprep.subr.mxu0 0.0
    %1711 = vmatpush1.msra.mxu0 0.0
    %1712 = vmatprep.subr.mxu0 0.0
    %1713 = vmatpush1.msra.mxu0 0.0
    %1714 = vmatprep.subr.mxu0 0.0
    %1715 = vmatpush1.msra.mxu0 0.0
    %1716 = vmatprep.subr.mxu0 0.0
    %1717 = vmatpush1.msra.mxu0 0.0
    %1718 = vmatprep.subr.mxu0 0.0
    %1719 = vmatpush1.msra.mxu0 0.0
    %1720 = vmatprep.subr.mxu0 0.0
    %1721 = vmatpush1.msra.mxu0 0.0
    %1722 = vmatprep.subr.mxu0 0.0
    %1723 = vmatpush1.msra.mxu0 0.0
    %1724 = vmatprep.subr.mxu0 0.0
    %1725 = vmatpush1.msra.mxu0 0.0
    %1726 = vmatprep.subr.mxu0 0.0
    %1727 = vmatpush1.msra.mxu0 0.0
    %1728 = vmatprep.subr.mxu0 0.0
    %1729 = vmatpush1.msra.mxu0 0.0
    %1730 = vmatprep.subr.mxu0 0.0
    %1731 = vmatpush1.msra.mxu0 0.0
    %1732 = vmatprep.subr.mxu0 0.0
    %1733 = vmatpush1.msra.mxu0 0.0
    %1734 = vmatprep.subr.mxu0 0.0
    %1735 = vmatpush1.msra.mxu0 0.0
    %1736 = vmatprep.subr.mxu0 0.0
    %1737 = vmatpush1.msra.mxu0 0.0
    %1738 = vmatprep.subr.mxu0 0.0
    %1739 = vmatpush1.msra.mxu0 0.0
    %1740 = vmatprep.subr.mxu0 0.0
    %1741 = vmatpush1.msra.mxu0 0.0
    %1742 = vmatprep.mubr.f32.mxu0 0.0
    %1743 = vmatmul.mubr.f32.gmra.mrb[0].mxu0 %v1676
    %v1744 = vpop.f32.mrb[0].mxu0
    %v1745 = vadd.f32 0.0, %v1744
    %v1746 = vpop.f32.mrb[0].mxu0
    %1747 = vdwg.mxu0
    %1749 = vrot.lane.b32.xlu0 %v1563, 48
    %v1750 = vpop.permute.xlu0 %1749
    %v1752 = vadd.f32 %v1745, %v1750
    %1754 = vrot.lane.b32.xlu0 %v1752, 80
    %v1755 = vpop.permute.xlu0 %1754
    %vm1757 = vcmask 57344
    %1758 = vst.msk [vmem:[%s8] sm:$0x1] %vm1757, %v1755
    %1759 = vrot.lane.b32.xlu0 %v1752, 72
    %v1760 = vpop.permute.xlu0 %1759
    %vm1762 = vcmask 8192
    %1763 = vst.msk [vmem:[#allocation2] sm:$0x1] %vm1762, %v1760
    %v1764 = vadd.f32 %v1745, %v1641
    %v1766 = vrot.slane %v1764, 7
    %v1768 = vadd.f32 %v1538, %v1766
    %v1769 = vxor.u32 %v1768, 2147483648
    %v1770 = vmul.f32 %v1769, 1.442695
    %v1771 = vpow.pop %v1770
    %v1772 = vadd.f32 %v1771, 1.0
    %v1773 = vrcp.pop %v1772
    %v1774 = vmul.f32 1.0, %v1773
    %1775 = vrot.lane.b32.xlu0 %v1766, 96
    %v1776 = vpop.permute.xlu0 %1775
    %v1778 = vmul.f32 %v1774, %v1776
    %1780 = vrot.lane.b32.xlu0 %v1778, 32
    %v1781 = vpop.permute.xlu0 %1780
    %v1783 = vadd.f32 %v1538, %v1781
    %v1784 = vtanh.pop %v1783
    %v1785 = vsub.f32 1.0, %v1774
    %1787 = vrot.lane.b32.xlu0 %v1784, 112
    %v1788 = vpop.permute.xlu0 %1787
    %v1790 = vmul.f32 %v1785, %v1788
    %v1791 = vrot.slane %v1672, 7
    %v1793 = vmul.f32 %v1774, %v1791
    %v1794 = vadd.f32 %v1790, %v1793
    %v1796 = vrot.slane %v1794, 1
    %1797 = vrot.lane.b32.xlu0 %v1796, 112
    %v1798 = vpop.permute.xlu0 %1797
    %v1799 = vsel %vm944, %v1798, 0
    %1801 = vmatprep.subr.mxu0 0.0
    %1802 = vmatpush1.msra.mxu0 %v1564
    %1803 = vmatprep.subr.mxu0 0.0
    %1804 = vmatpush1.msra.mxu0 %v1565
    %1805 = vmatprep.subr.mxu0 0.0
    %1806 = vmatpush1.msra.mxu0 0.0
    %1807 = vmatprep.subr.mxu0 0.0
    %1808 = vmatpush1.msra.mxu0 0.0
    %1809 = vmatprep.subr.mxu0 0.0
    %1810 = vmatpush1.msra.mxu0 0.0
    %1811 = vmatprep.subr.mxu0 0.0
    %1812 = vmatpush1.msra.mxu0 0.0
    %1813 = vmatprep.subr.mxu0 0.0
    %1814 = vmatpush1.msra.mxu0 0.0
    %1815 = vmatprep.subr.mxu0 0.0
    %1816 = vmatpush1.msra.mxu0 0.0
    %1817 = vmatprep.subr.mxu0 0.0
    %1818 = vmatpush1.msra.mxu0 0.0
    %1819 = vmatprep.subr.mxu0 0.0
    %1820 = vmatpush1.msra.mxu0 0.0
    %1821 = vmatprep.subr.mxu0 0.0
    %1822 = vmatpush1.msra.mxu0 0.0
    %1823 = vmatprep.subr.mxu0 0.0
    %1824 = vmatpush1.msra.mxu0 0.0
    %1825 = vmatprep.subr.mxu0 0.0
    %1826 = vmatpush1.msra.mxu0 0.0
    %1827 = vmatprep.subr.mxu0 0.0
    %1828 = vmatpush1.msra.mxu0 0.0
    %1829 = vmatprep.subr.mxu0 0.0
    %1830 = vmatpush1.msra.mxu0 0.0
    %1831 = vmatprep.subr.mxu0 0.0
    %1832 = vmatpush1.msra.mxu0 0.0
    %1833 = vmatprep.subr.mxu0 0.0
    %1834 = vmatpush1.msra.mxu0 0.0
    %1835 = vmatprep.subr.mxu0 0.0
    %1836 = vmatpush1.msra.mxu0 0.0
    %1837 = vmatprep.subr.mxu0 0.0
    %1838 = vmatpush1.msra.mxu0 0.0
    %1839 = vmatprep.subr.mxu0 0.0
    %1840 = vmatpush1.msra.mxu0 0.0
    %1841 = vmatprep.subr.mxu0 0.0
    %1842 = vmatpush1.msra.mxu0 0.0
    %1843 = vmatprep.subr.mxu0 0.0
    %1844 = vmatpush1.msra.mxu0 0.0
    %1845 = vmatprep.subr.mxu0 0.0
    %1846 = vmatpush1.msra.mxu0 0.0
    %1847 = vmatprep.subr.mxu0 0.0
    %1848 = vmatpush1.msra.mxu0 0.0
    %1849 = vmatprep.subr.mxu0 0.0
    %1850 = vmatpush1.msra.mxu0 0.0
    %1851 = vmatprep.subr.mxu0 0.0
    %1852 = vmatpush1.msra.mxu0 0.0
    %1853 = vmatprep.subr.mxu0 0.0
    %1854 = vmatpush1.msra.mxu0 0.0
    %1855 = vmatprep.subr.mxu0 0.0
    %1856 = vmatpush1.msra.mxu0 0.0
    %1857 = vmatprep.subr.mxu0 0.0
    %1858 = vmatpush1.msra.mxu0 0.0
    %1859 = vmatprep.subr.mxu0 0.0
    %1860 = vmatpush1.msra.mxu0 0.0
    %1861 = vmatprep.subr.mxu0 0.0
    %1862 = vmatpush1.msra.mxu0 0.0
    %1863 = vmatprep.subr.mxu0 0.0
    %1864 = vmatpush1.msra.mxu0 0.0
    %1865 = vmatprep.mubr.f32.mxu0 0.0
    %1866 = vmatmul.mubr.f32.gmra.mrb[0].mxu0 %v1799
    %v1867 = vpop.f32.mrb[0].mxu0
    %v1868 = vadd.f32 0.0, %v1867
    %v1869 = vpop.f32.mrb[0].mxu0
    %1870 = vdwg.mxu0
    %v1871 = vrot.slane %v1563, 1
    %1872 = vrot.lane.b32.xlu0 %v1871, 48
    %v1873 = vpop.permute.xlu0 %1872
    %v1875 = vadd.f32 %v1868, %v1873
    %1877 = vrot.lane.b32.xlu0 %v1875, 80
    %v1878 = vpop.permute.xlu0 %1877
    %1880 = vst.msk [vmem:[%s8 + $0x1] sm:$0x1] %vm1757, %v1878
    %1881 = vrot.lane.b32.xlu0 %v1875, 72
    %v1882 = vpop.permute.xlu0 %1881
    %1884 = vst.msk [vmem:[#allocation2 + $0x1] sm:$0x1] %vm1762, %v1882
    %v1885 = vadd.f32 %v1868, %v1641
    %v1887 = vrot.slane %v1885, 6
    %v1889 = vadd.f32 %v1538, %v1887
    %v1890 = vxor.u32 %v1889, 2147483648
    %v1891 = vmul.f32 %v1890, 1.442695
    %v1892 = vpow.pop %v1891
    %v1893 = vadd.f32 %v1892, 1.0
    %v1894 = vrcp.pop %v1893
    %v1895 = vmul.f32 1.0, %v1894
    %1896 = vrot.lane.b32.xlu0 %v1887, 96
    %v1897 = vpop.permute.xlu0 %1896
    %v1899 = vmul.f32 %v1895, %v1897
    %1901 = vrot.lane.b32.xlu0 %v1899, 32
    %v1902 = vpop.permute.xlu0 %1901
    %v1904 = vadd.f32 %v1538, %v1902
    %v1905 = vtanh.pop %v1904
    %v1906 = vsub.f32 1.0, %v1895
    %1908 = vrot.lane.b32.xlu0 %v1905, 112
    %v1909 = vpop.permute.xlu0 %1908
    %v1911 = vmul.f32 %v1906, %v1909
    %v1912 = vrot.slane %v1794, 7
    %v1914 = vmul.f32 %v1895, %v1912
    %v1915 = vadd.f32 %v1911, %v1914
    %v1917 = vrot.slane %v1915, 2
    %1918 = vrot.lane.b32.xlu0 %v1917, 112
    %v1919 = vpop.permute.xlu0 %1918
    %v1920 = vsel %vm944, %v1919, 0
    %1922 = vmatprep.subr.mxu0 0.0
    %1923 = vmatpush1.msra.mxu0 %v1564
    %1924 = vmatprep.subr.mxu0 0.0
    %1925 = vmatpush1.msra.mxu0 %v1565
    %1926 = vmatprep.subr.mxu0 0.0
    %1927 = vmatpush1.msra.mxu0 0.0
    %1928 = vmatprep.subr.mxu0 0.0
    %1929 = vmatpush1.msra.mxu0 0.0
    %1930 = vmatprep.subr.mxu0 0.0
    %1931 = vmatpush1.msra.mxu0 0.0
    %1932 = vmatprep.subr.mxu0 0.0
    %1933 = vmatpush1.msra.mxu0 0.0
    %1934 = vmatprep.subr.mxu0 0.0
    %1935 = vmatpush1.msra.mxu0 0.0
    %1936 = vmatprep.subr.mxu0 0.0
    %1937 = vmatpush1.msra.mxu0 0.0
    %1938 = vmatprep.subr.mxu0 0.0
    %1939 = vmatpush1.msra.mxu0 0.0
    %1940 = vmatprep.subr.mxu0 0.0
    %1941 = vmatpush1.msra.mxu0 0.0
    %1942 = vmatprep.subr.mxu0 0.0
    %1943 = vmatpush1.msra.mxu0 0.0
    %1944 = vmatprep.subr.mxu0 0.0
    %1945 = vmatpush1.msra.mxu0 0.0
    %1946 = vmatprep.subr.mxu0 0.0
    %1947 = vmatpush1.msra.mxu0 0.0
    %1948 = vmatprep.subr.mxu0 0.0
    %1949 = vmatpush1.msra.mxu0 0.0
    %1950 = vmatprep.subr.mxu0 0.0
    %1951 = vmatpush1.msra.mxu0 0.0
    %1952 = vmatprep.subr.mxu0 0.0
    %1953 = vmatpush1.msra.mxu0 0.0
    %1954 = vmatprep.subr.mxu0 0.0
    %1955 = vmatpush1.msra.mxu0 0.0
    %1956 = vmatprep.subr.mxu0 0.0
    %1957 = vmatpush1.msra.mxu0 0.0
    %1958 = vmatprep.subr.mxu0 0.0
    %1959 = vmatpush1.msra.mxu0 0.0
    %1960 = vmatprep.subr.mxu0 0.0
    %1961 = vmatpush1.msra.mxu0 0.0
    %1962 = vmatprep.subr.mxu0 0.0
    %1963 = vmatpush1.msra.mxu0 0.0
    %1964 = vmatprep.subr.mxu0 0.0
    %1965 = vmatpush1.msra.mxu0 0.0
    %1966 = vmatprep.subr.mxu0 0.0
    %1967 = vmatpush1.msra.mxu0 0.0
    %1968 = vmatprep.subr.mxu0 0.0
    %1969 = vmatpush1.msra.mxu0 0.0
    %1970 = vmatprep.subr.mxu0 0.0
    %1971 = vmatpush1.msra.mxu0 0.0
    %1972 = vmatprep.subr.mxu0 0.0
    %1973 = vmatpush1.msra.mxu0 0.0
    %1974 = vmatprep.subr.mxu0 0.0
    %1975 = vmatpush1.msra.mxu0 0.0
    %1976 = vmatprep.subr.mxu0 0.0
    %1977 = vmatpush1.msra.mxu0 0.0
    %1978 = vmatprep.subr.mxu0 0.0
    %1979 = vmatpush1.msra.mxu0 0.0
    %1980 = vmatprep.subr.mxu0 0.0
    %1981 = vmatpush1.msra.mxu0 0.0
    %1982 = vmatprep.subr.mxu0 0.0
    %1983 = vmatpush1.msra.mxu0 0.0
    %1984 = vmatprep.subr.mxu0 0.0
    %1985 = vmatpush1.msra.mxu0 0.0
    %1986 = vmatprep.mubr.f32.mxu0 0.0
    %1987 = vmatmul.mubr.f32.gmra.mrb[0].mxu0 %v1920
    %v1988 = vpop.f32.mrb[0].mxu0
    %v1989 = vadd.f32 0.0, %v1988
    %v1990 = vpop.f32.mrb[0].mxu0
    %1991 = vdwg.mxu0
    %v1992 = vrot.slane %v1563, 2
    %1993 = vrot.lane.b32.xlu0 %v1992, 48
    %v1994 = vpop.permute.xlu0 %1993
    %v1996 = vadd.f32 %v1989, %v1994
    %1998 = vrot.lane.b32.xlu0 %v1996, 80
    %v1999 = vpop.permute.xlu0 %1998
    %2001 = vst.msk [vmem:[%s8 + $0x2] sm:$0x1] %vm1757, %v1999
    %2002 = vrot.lane.b32.xlu0 %v1996, 72
    %v2003 = vpop.permute.xlu0 %2002
    %2005 = vst.msk [vmem:[#allocation2 + $0x2] sm:$0x1] %vm1762, %v2003
    %v2006 = vadd.f32 %v1989, %v1641
    %v2008 = vrot.slane %v2006, 5
    %v2010 = vadd.f32 %v1538, %v2008
    %v2011 = vxor.u32 %v2010, 2147483648
    %v2012 = vmul.f32 %v2011, 1.442695
    %v2013 = vpow.pop %v2012
    %v2014 = vadd.f32 %v2013, 1.0
    %v2015 = vrcp.pop %v2014
    %v2016 = vmul.f32 1.0, %v2015
    %2017 = vrot.lane.b32.xlu0 %v2008, 96
    %v2018 = vpop.permute.xlu0 %2017
    %v2020 = vmul.f32 %v2016, %v2018
    %2022 = vrot.lane.b32.xlu0 %v2020, 32
    %v2023 = vpop.permute.xlu0 %2022
    %v2025 = vadd.f32 %v1538, %v2023
    %v2026 = vtanh.pop %v2025
    %v2027 = vsub.f32 1.0, %v2016
    %2029 = vrot.lane.b32.xlu0 %v2026, 112
    %v2030 = vpop.permute.xlu0 %2029
    %v2032 = vmul.f32 %v2027, %v2030
    %v2033 = vrot.slane %v1915, 7
    %v2035 = vmul.f32 %v2016, %v2033
    %v2036 = vadd.f32 %v2032, %v2035
    %v2038 = vrot.slane %v2036, 3
    %2039 = vrot.lane.b32.xlu0 %v2038, 112
    %v2040 = vpop.permute.xlu0 %2039
    %v2041 = vsel %vm944, %v2040, 0
    %2043 = vmatprep.subr.mxu0 0.0
    %2044 = vmatpush1.msra.mxu0 %v1564
    %2045 = vmatprep.subr.mxu0 0.0
    %2046 = vmatpush1.msra.mxu0 %v1565
    %2047 = vmatprep.subr.mxu0 0.0
    %2048 = vmatpush1.msra.mxu0 0.0
    %2049 = vmatprep.subr.mxu0 0.0
    %2050 = vmatpush1.msra.mxu0 0.0
    %2051 = vmatprep.subr.mxu0 0.0
    %2052 = vmatpush1.msra.mxu0 0.0
    %2053 = vmatprep.subr.mxu0 0.0
    %2054 = vmatpush1.msra.mxu0 0.0
    %2055 = vmatprep.subr.mxu0 0.0
    %2056 = vmatpush1.msra.mxu0 0.0
    %2057 = vmatprep.subr.mxu0 0.0
    %2058 = vmatpush1.msra.mxu0 0.0
    %2059 = vmatprep.subr.mxu0 0.0
    %2060 = vmatpush1.msra.mxu0 0.0
    %2061 = vmatprep.subr.mxu0 0.0
    %2062 = vmatpush1.msra.mxu0 0.0
    %2063 = vmatprep.subr.mxu0 0.0
    %2064 = vmatpush1.msra.mxu0 0.0
    %2065 = vmatprep.subr.mxu0 0.0
    %2066 = vmatpush1.msra.mxu0 0.0
    %2067 = vmatprep.subr.mxu0 0.0
    %2068 = vmatpush1.msra.mxu0 0.0
    %2069 = vmatprep.subr.mxu0 0.0
    %2070 = vmatpush1.msra.mxu0 0.0
    %2071 = vmatprep.subr.mxu0 0.0
    %2072 = vmatpush1.msra.mxu0 0.0
    %2073 = vmatprep.subr.mxu0 0.0
    %2074 = vmatpush1.msra.mxu0 0.0
    %2075 = vmatprep.subr.mxu0 0.0
    %2076 = vmatpush1.msra.mxu0 0.0
    %2077 = vmatprep.subr.mxu0 0.0
    %2078 = vmatpush1.msra.mxu0 0.0
    %2079 = vmatprep.subr.mxu0 0.0
    %2080 = vmatpush1.msra.mxu0 0.0
    %2081 = vmatprep.subr.mxu0 0.0
    %2082 = vmatpush1.msra.mxu0 0.0
    %2083 = vmatprep.subr.mxu0 0.0
    %2084 = vmatpush1.msra.mxu0 0.0
    %2085 = vmatprep.subr.mxu0 0.0
    %2086 = vmatpush1.msra.mxu0 0.0
    %2087 = vmatprep.subr.mxu0 0.0
    %2088 = vmatpush1.msra.mxu0 0.0
    %2089 = vmatprep.subr.mxu0 0.0
    %2090 = vmatpush1.msra.mxu0 0.0
    %2091 = vmatprep.subr.mxu0 0.0
    %2092 = vmatpush1.msra.mxu0 0.0
    %2093 = vmatprep.subr.mxu0 0.0
    %2094 = vmatpush1.msra.mxu0 0.0
    %2095 = vmatprep.subr.mxu0 0.0
    %2096 = vmatpush1.msra.mxu0 0.0
    %2097 = vmatprep.subr.mxu0 0.0
    %2098 = vmatpush1.msra.mxu0 0.0
    %2099 = vmatprep.subr.mxu0 0.0
    %2100 = vmatpush1.msra.mxu0 0.0
    %2101 = vmatprep.subr.mxu0 0.0
    %2102 = vmatpush1.msra.mxu0 0.0
    %2103 = vmatprep.subr.mxu0 0.0
    %2104 = vmatpush1.msra.mxu0 0.0
    %2105 = vmatprep.subr.mxu0 0.0
    %2106 = vmatpush1.msra.mxu0 0.0
    %2107 = vmatprep.mubr.f32.mxu0 0.0
    %2108 = vmatmul.mubr.f32.gmra.mrb[0].mxu0 %v2041
    %v2109 = vpop.f32.mrb[0].mxu0
    %v2110 = vadd.f32 0.0, %v2109
    %v2111 = vpop.f32.mrb[0].mxu0
    %2112 = vdwg.mxu0
    %v2113 = vrot.slane %v1563, 3
    %2114 = vrot.lane.b32.xlu0 %v2113, 48
    %v2115 = vpop.permute.xlu0 %2114
    %v2117 = vadd.f32 %v2110, %v2115
    %2119 = vrot.lane.b32.xlu0 %v2117, 80
    %v2120 = vpop.permute.xlu0 %2119
    %2122 = vst.msk [vmem:[%s8 + $0x3] sm:$0x1] %vm1757, %v2120
    %2123 = vrot.lane.b32.xlu0 %v2117, 72
    %v2124 = vpop.permute.xlu0 %2123
    %2126 = vst.msk [vmem:[#allocation2 + $0x3] sm:$0x1] %vm1762, %v2124
    %v2127 = vadd.f32 %v2110, %v1641
    %v2129 = vrot.slane %v2127, 4
    %v2131 = vadd.f32 %v1538, %v2129
    %v2132 = vxor.u32 %v2131, 2147483648
    %v2133 = vmul.f32 %v2132, 1.442695
    %v2134 = vpow.pop %v2133
    %v2135 = vadd.f32 %v2134, 1.0
    %v2136 = vrcp.pop %v2135
    %v2137 = vmul.f32 1.0, %v2136
    %2138 = vrot.lane.b32.xlu0 %v2129, 96
    %v2139 = vpop.permute.xlu0 %2138
    %v2141 = vmul.f32 %v2137, %v2139
    %2143 = vrot.lane.b32.xlu0 %v2141, 32
    %v2144 = vpop.permute.xlu0 %2143
    %v2146 = vadd.f32 %v1538, %v2144
    %v2147 = vtanh.pop %v2146
    %v2148 = vsub.f32 1.0, %v2137
    %2150 = vrot.lane.b32.xlu0 %v2147, 112
    %v2151 = vpop.permute.xlu0 %2150
    %v2153 = vmul.f32 %v2148, %v2151
    %v2154 = vrot.slane %v2036, 7
    %v2156 = vmul.f32 %v2137, %v2154
    %v2157 = vadd.f32 %v2153, %v2156
    %v2159 = vrot.slane %v2157, 4
    %2160 = vrot.lane.b32.xlu0 %v2159, 112
    %v2161 = vpop.permute.xlu0 %2160
    %v2162 = vsel %vm944, %v2161, 0
    %2164 = vmatprep.subr.mxu0 0.0
    %2165 = vmatpush1.msra.mxu0 %v1564
    %2166 = vmatprep.subr.mxu0 0.0
    %2167 = vmatpush1.msra.mxu0 %v1565
    %2168 = vmatprep.subr.mxu0 0.0
    %2169 = vmatpush1.msra.mxu0 0.0
    %2170 = vmatprep.subr.mxu0 0.0
    %2171 = vmatpush1.msra.mxu0 0.0
    %2172 = vmatprep.subr.mxu0 0.0
    %2173 = vmatpush1.msra.mxu0 0.0
    %2174 = vmatprep.subr.mxu0 0.0
    %2175 = vmatpush1.msra.mxu0 0.0
    %2176 = vmatprep.subr.mxu0 0.0
    %2177 = vmatpush1.msra.mxu0 0.0
    %2178 = vmatprep.subr.mxu0 0.0
    %2179 = vmatpush1.msra.mxu0 0.0
    %2180 = vmatprep.subr.mxu0 0.0
    %2181 = vmatpush1.msra.mxu0 0.0
    %2182 = vmatprep.subr.mxu0 0.0
    %2183 = vmatpush1.msra.mxu0 0.0
    %2184 = vmatprep.subr.mxu0 0.0
    %2185 = vmatpush1.msra.mxu0 0.0
    %2186 = vmatprep.subr.mxu0 0.0
    %2187 = vmatpush1.msra.mxu0 0.0
    %2188 = vmatprep.subr.mxu0 0.0
    %2189 = vmatpush1.msra.mxu0 0.0
    %2190 = vmatprep.subr.mxu0 0.0
    %2191 = vmatpush1.msra.mxu0 0.0
    %2192 = vmatprep.subr.mxu0 0.0
    %2193 = vmatpush1.msra.mxu0 0.0
    %2194 = vmatprep.subr.mxu0 0.0
    %2195 = vmatpush1.msra.mxu0 0.0
    %2196 = vmatprep.subr.mxu0 0.0
    %2197 = vmatpush1.msra.mxu0 0.0
    %2198 = vmatprep.subr.mxu0 0.0
    %2199 = vmatpush1.msra.mxu0 0.0
    %2200 = vmatprep.subr.mxu0 0.0
    %2201 = vmatpush1.msra.mxu0 0.0
    %2202 = vmatprep.subr.mxu0 0.0
    %2203 = vmatpush1.msra.mxu0 0.0
    %2204 = vmatprep.subr.mxu0 0.0
    %2205 = vmatpush1.msra.mxu0 0.0
    %2206 = vmatprep.subr.mxu0 0.0
    %2207 = vmatpush1.msra.mxu0 0.0
    %2208 = vmatprep.subr.mxu0 0.0
    %2209 = vmatpush1.msra.mxu0 0.0
    %2210 = vmatprep.subr.mxu0 0.0
    %2211 = vmatpush1.msra.mxu0 0.0
    %2212 = vmatprep.subr.mxu0 0.0
    %2213 = vmatpush1.msra.mxu0 0.0
    %2214 = vmatprep.subr.mxu0 0.0
    %2215 = vmatpush1.msra.mxu0 0.0
    %2216 = vmatprep.subr.mxu0 0.0
    %2217 = vmatpush1.msra.mxu0 0.0
    %2218 = vmatprep.subr.mxu0 0.0
    %2219 = vmatpush1.msra.mxu0 0.0
    %2220 = vmatprep.subr.mxu0 0.0
    %2221 = vmatpush1.msra.mxu0 0.0
    %2222 = vmatprep.subr.mxu0 0.0
    %2223 = vmatpush1.msra.mxu0 0.0
    %2224 = vmatprep.subr.mxu0 0.0
    %2225 = vmatpush1.msra.mxu0 0.0
    %2226 = vmatprep.subr.mxu0 0.0
    %2227 = vmatpush1.msra.mxu0 0.0
    %2228 = vmatprep.mubr.f32.mxu0 0.0
    %2229 = vmatmul.mubr.f32.gmra.mrb[0].mxu0 %v2162
    %v2230 = vpop.f32.mrb[0].mxu0
    %v2231 = vadd.f32 0.0, %v2230
    %v2232 = vpop.f32.mrb[0].mxu0
    %2233 = vdwg.mxu0
    %v2234 = vrot.slane %v1563, 4
    %2235 = vrot.lane.b32.xlu0 %v2234, 48
    %v2236 = vpop.permute.xlu0 %2235
    %v2238 = vadd.f32 %v2231, %v2236
    %2240 = vrot.lane.b32.xlu0 %v2238, 80
    %v2241 = vpop.permute.xlu0 %2240
    %2243 = vst.msk [vmem:[%s8 + $0x4] sm:$0x1] %vm1757, %v2241
    %2244 = vrot.lane.b32.xlu0 %v2238, 72
    %v2245 = vpop.permute.xlu0 %2244
    %2247 = vst.msk [vmem:[#allocation2 + $0x4] sm:$0x1] %vm1762, %v2245
    %v2248 = vadd.f32 %v2231, %v1641
    %v2250 = vrot.slane %v2248, 3
    %v2252 = vadd.f32 %v1538, %v2250
    %v2253 = vxor.u32 %v2252, 2147483648
    %v2254 = vmul.f32 %v2253, 1.442695
    %v2255 = vpow.pop %v2254
    %v2256 = vadd.f32 %v2255, 1.0
    %v2257 = vrcp.pop %v2256
    %v2258 = vmul.f32 1.0, %v2257
    %2259 = vrot.lane.b32.xlu0 %v2250, 96
    %v2260 = vpop.permute.xlu0 %2259
    %v2262 = vmul.f32 %v2258, %v2260
    %2264 = vrot.lane.b32.xlu0 %v2262, 32
    %v2265 = vpop.permute.xlu0 %2264
    %v2267 = vadd.f32 %v1538, %v2265
    %v2268 = vtanh.pop %v2267
    %v2269 = vsub.f32 1.0, %v2258
    %2271 = vrot.lane.b32.xlu0 %v2268, 112
    %v2272 = vpop.permute.xlu0 %2271
    %v2274 = vmul.f32 %v2269, %v2272
    %v2275 = vrot.slane %v2157, 7
    %v2277 = vmul.f32 %v2258, %v2275
    %v2278 = vadd.f32 %v2274, %v2277
    %v2280 = vrot.slane %v2278, 5
    %2281 = vrot.lane.b32.xlu0 %v2280, 112
    %v2282 = vpop.permute.xlu0 %2281
    %v2283 = vsel %vm944, %v2282, 0
    %2285 = vmatprep.subr.mxu0 0.0
    %2286 = vmatpush1.msra.mxu0 %v1564
    %2287 = vmatprep.subr.mxu0 0.0
    %2288 = vmatpush1.msra.mxu0 %v1565
    %2289 = vmatprep.subr.mxu0 0.0
    %2290 = vmatpush1.msra.mxu0 0.0
    %2291 = vmatprep.subr.mxu0 0.0
    %2292 = vmatpush1.msra.mxu0 0.0
    %2293 = vmatprep.subr.mxu0 0.0
    %2294 = vmatpush1.msra.mxu0 0.0
    %2295 = vmatprep.subr.mxu0 0.0
    %2296 = vmatpush1.msra.mxu0 0.0
    %2297 = vmatprep.subr.mxu0 0.0
    %2298 = vmatpush1.msra.mxu0 0.0
    %2299 = vmatprep.subr.mxu0 0.0
    %2300 = vmatpush1.msra.mxu0 0.0
    %2301 = vmatprep.subr.mxu0 0.0
    %2302 = vmatpush1.msra.mxu0 0.0
    %2303 = vmatprep.subr.mxu0 0.0
    %2304 = vmatpush1.msra.mxu0 0.0
    %2305 = vmatprep.subr.mxu0 0.0
    %2306 = vmatpush1.msra.mxu0 0.0
    %2307 = vmatprep.subr.mxu0 0.0
    %2308 = vmatpush1.msra.mxu0 0.0
    %2309 = vmatprep.subr.mxu0 0.0
    %2310 = vmatpush1.msra.mxu0 0.0
    %2311 = vmatprep.subr.mxu0 0.0
    %2312 = vmatpush1.msra.mxu0 0.0
    %2313 = vmatprep.subr.mxu0 0.0
    %2314 = vmatpush1.msra.mxu0 0.0
    %2315 = vmatprep.subr.mxu0 0.0
    %2316 = vmatpush1.msra.mxu0 0.0
    %2317 = vmatprep.subr.mxu0 0.0
    %2318 = vmatpush1.msra.mxu0 0.0
    %2319 = vmatprep.subr.mxu0 0.0
    %2320 = vmatpush1.msra.mxu0 0.0
    %2321 = vmatprep.subr.mxu0 0.0
    %2322 = vmatpush1.msra.mxu0 0.0
    %2323 = vmatprep.subr.mxu0 0.0
    %2324 = vmatpush1.msra.mxu0 0.0
    %2325 = vmatprep.subr.mxu0 0.0
    %2326 = vmatpush1.msra.mxu0 0.0
    %2327 = vmatprep.subr.mxu0 0.0
    %2328 = vmatpush1.msra.mxu0 0.0
    %2329 = vmatprep.subr.mxu0 0.0
    %2330 = vmatpush1.msra.mxu0 0.0
    %2331 = vmatprep.subr.mxu0 0.0
    %2332 = vmatpush1.msra.mxu0 0.0
    %2333 = vmatprep.subr.mxu0 0.0
    %2334 = vmatpush1.msra.mxu0 0.0
    %2335 = vmatprep.subr.mxu0 0.0
    %2336 = vmatpush1.msra.mxu0 0.0
    %2337 = vmatprep.subr.mxu0 0.0
    %2338 = vmatpush1.msra.mxu0 0.0
    %2339 = vmatprep.subr.mxu0 0.0
    %2340 = vmatpush1.msra.mxu0 0.0
    %2341 = vmatprep.subr.mxu0 0.0
    %2342 = vmatpush1.msra.mxu0 0.0
    %2343 = vmatprep.subr.mxu0 0.0
    %2344 = vmatpush1.msra.mxu0 0.0
    %2345 = vmatprep.subr.mxu0 0.0
    %2346 = vmatpush1.msra.mxu0 0.0
    %2347 = vmatprep.subr.mxu0 0.0
    %2348 = vmatpush1.msra.mxu0 0.0
    %2349 = vmatprep.mubr.f32.mxu0 0.0
    %2350 = vmatmul.mubr.f32.gmra.mrb[0].mxu0 %v2283
    %v2351 = vpop.f32.mrb[0].mxu0
    %v2352 = vadd.f32 0.0, %v2351
    %v2353 = vpop.f32.mrb[0].mxu0
    %2354 = vdwg.mxu0
    %v2355 = vrot.slane %v1563, 5
    %2356 = vrot.lane.b32.xlu0 %v2355, 48
    %v2357 = vpop.permute.xlu0 %2356
    %v2359 = vadd.f32 %v2352, %v2357
    %2361 = vrot.lane.b32.xlu0 %v2359, 80
    %v2362 = vpop.permute.xlu0 %2361
    %2364 = vst.msk [vmem:[%s8 + $0x5] sm:$0x1] %vm1757, %v2362
    %2365 = vrot.lane.b32.xlu0 %v2359, 72
    %v2366 = vpop.permute.xlu0 %2365
    %2368 = vst.msk [vmem:[#allocation2 + $0x5] sm:$0x1] %vm1762, %v2366
    %2369 = vrot.lane.b32.xlu0 %v2278, 112
    %v2370 = vpop.permute.xlu0 %2369
    %vm2372 = vcmask 128005
    %2373 = vst.msk [vmem:[#allocation3 - $0x5] sm:$0x20] %vm2372, %v2370
    %v2374 = vld [vmem:[#allocation2] sm:$0x3f]
    %v2375 = vxor.u32 %v2374, 2147483648
    %v2376 = vmul.f32 %v2375, 1.442695
    %v2377 = vpow.pop %v2376
    %v2378 = vadd.f32 %v2377, 1.0
    %v2379 = vrcp.pop %v2378
    %v2380 = vmul.f32 1.0, %v2379
    %2381 = vrot.lane.b32.xlu0 %v40, 2
    %v2382 = vpop.permute.xlu0 %2381
    %v2384 = vsub.f32 %v40, %v2382
    %2385 = vrot.lane.b32.xlu0 %v40, 1
    %v2386 = vpop.permute.xlu0 %2385
    %v2388 = vsub.f32 %v2384, %v2386
    %2389 = vrot.lane.b32.xlu0 %v40, 126
    %v2390 = vpop.permute.xlu0 %2389
    %v2392 = vmul.f32 %v2380, %v2390
    %2393 = vrot.lane.b32.xlu0 %v40, 127
    %v2394 = vpop.permute.xlu0 %2393
    %v2396 = vmul.f32 %v2388, %v2394
    %2398 = vrot.lane.b32.xlu0 %v2396, 124
    %v2399 = vpop.permute.xlu0 %2398
    %v2401 = vmul.f32 %v2392, %v2399
    %v2402 = vmul.f32 %v2380, %v2394
    %2404 = vrot.lane.b32.xlu0 %v2402, 127
    %v2405 = vpop.permute.xlu0 %2404
    %v2407 = vsub.f32 %v2401, %v2405
    %2409 = vrot.lane.b32.xlu0 %v2407, 2
    %v2410 = vpop.permute.xlu0 %2409
    %v2412 = vadd.f32 %v40, %v2410
    %2413 = vrot.lane.b32.xlu0 %v2402, 2
    %v2414 = vpop.permute.xlu0 %2413
    %v2416 = vadd.f32 %v40, %v2414
    %2418 = vrot.lane.b32.xlu0 %v2412, 2
    %v2419 = vpop.permute.xlu0 %2418
    %v2421 = vsub.f32 %v40, %v2419
    %2423 = vrot.lane.b32.xlu0 %v2416, 1
    %v2424 = vpop.permute.xlu0 %2423
    %v2426 = vsub.f32 %v2421, %v2424
    %2427 = vrot.lane.b32.xlu0 %v2412, 126
    %v2428 = vpop.permute.xlu0 %2427
    %v2430 = vmul.f32 %v2380, %v2428
    %v2431 = vmul.f32 %v2426, %v2394
    %2433 = vrot.lane.b32.xlu0 %v2431, 124
    %v2434 = vpop.permute.xlu0 %2433
    %v2436 = vmul.f32 %v2430, %v2434
    %2437 = vrot.lane.b32.xlu0 %v2412, 127
    %v2438 = vpop.permute.xlu0 %2437
    %v2440 = vmul.f32 %v2380, %v2438
    %2442 = vrot.lane.b32.xlu0 %v2440, 127
    %v2443 = vpop.permute.xlu0 %2442
    %v2445 = vsub.f32 %v2436, %v2443
    %2447 = vrot.lane.b32.xlu0 %v2445, 2
    %v2448 = vpop.permute.xlu0 %2447
    %v2450 = vadd.f32 %v2412, %v2448
    %2451 = vrot.lane.b32.xlu0 %v2440, 2
    %v2452 = vpop.permute.xlu0 %2451
    %v2454 = vadd.f32 %v2416, %v2452
    %2456 = vrot.lane.b32.xlu0 %v2450, 2
    %v2457 = vpop.permute.xlu0 %2456
    %v2459 = vsub.f32 %v40, %v2457
    %2461 = vrot.lane.b32.xlu0 %v2454, 1
    %v2462 = vpop.permute.xlu0 %2461
    %v2464 = vsub.f32 %v2459, %v2462
    %2465 = vrot.lane.b32.xlu0 %v2450, 126
    %v2466 = vpop.permute.xlu0 %2465
    %v2468 = vmul.f32 %v2380, %v2466
    %v2469 = vmul.f32 %v2464, %v2394
    %2471 = vrot.lane.b32.xlu0 %v2469, 124
    %v2472 = vpop.permute.xlu0 %2471
    %v2474 = vmul.f32 %v2468, %v2472
    %2475 = vrot.lane.b32.xlu0 %v2450, 127
    %v2476 = vpop.permute.xlu0 %2475
    %v2478 = vmul.f32 %v2380, %v2476
    %2480 = vrot.lane.b32.xlu0 %v2478, 127
    %v2481 = vpop.permute.xlu0 %2480
    %v2483 = vsub.f32 %v2474, %v2481
    %2485 = vrot.lane.b32.xlu0 %v2483, 2
    %v2486 = vpop.permute.xlu0 %2485
    %v2488 = vadd.f32 %v2450, %v2486
    %2489 = vrot.lane.b32.xlu0 %v2478, 2
    %v2490 = vpop.permute.xlu0 %2489
    %v2492 = vadd.f32 %v2454, %v2490
    %2494 = vrot.lane.b32.xlu0 %v2488, 2
    %v2495 = vpop.permute.xlu0 %2494
    %v2497 = vsub.f32 %v40, %v2495
    %2499 = vrot.lane.b32.xlu0 %v2492, 1
    %v2500 = vpop.permute.xlu0 %2499
    %v2502 = vsub.f32 %v2497, %v2500
    %2503 = vrot.lane.b32.xlu0 %v2488, 126
    %v2504 = vpop.permute.xlu0 %2503
    %v2506 = vmul.f32 %v2380, %v2504
    %v2507 = vmul.f32 %v2502, %v2394
    %2509 = vrot.lane.b32.xlu0 %v2507, 124
    %v2510 = vpop.permute.xlu0 %2509
    %v2512 = vmul.f32 %v2506, %v2510
    %2513 = vrot.lane.b32.xlu0 %v2488, 127
    %v2514 = vpop.permute.xlu0 %2513
    %v2516 = vmul.f32 %v2380, %v2514
    %2518 = vrot.lane.b32.xlu0 %v2516, 127
    %v2519 = vpop.permute.xlu0 %2518
    %v2521 = vsub.f32 %v2512, %v2519
    %2522 = vrot.lane.b32.xlu0 %v2445, 1
    %v2523 = vpop.permute.xlu0 %2522
    %2526 = vrot.lane.b32.xlu0 %v2521, 3
    %v2527 = vpop.permute.xlu0 %2526
    %vm2529 = vcmask 7168
    %v2530 = vsel %vm2529, %v2407, %v2523
    %vm2531 = vcmask 15360
    %v2532 = vsel %vm2531, %v2530, %v2486
    %vm2533 = vcmask 23552
    %v2534 = vsel %vm2533, %v2532, %v2527
    %2536 = vrot.lane.b32.xlu0 %v2534, 8
    %v2537 = vpop.permute.xlu0 %2536
    %vm2539 = vcmask 95296
    %2540 = vst.msk [vmem:[%s8] sm:$0x3f] %vm2539, %v2537
    %2541 = vrot.lane.b32.xlu0 %v2478, 1
    %v2542 = vpop.permute.xlu0 %2541
    %2544 = vrot.lane.b32.xlu0 %v2516, 2
    %v2545 = vpop.permute.xlu0 %2544
    %v2547 = vsel %vm2529, %v2405, %v2440
    %v2548 = vsel %vm2531, %v2547, %v2542
    %v2549 = vsel %vm2533, %v2548, %v2545
    %2551 = vrot.lane.b32.xlu0 %v2549, 12
    %v2552 = vpop.permute.xlu0 %2551
    %vm2554 = vcmask 128096
    %2555 = vst.msk [vmem:[%s8] sm:$0x3f] %vm2554, %v2552
    // Predicated region
    $region34: #{stan_pallas.1} parent=1 // pred_check
      _
    $region35: #{stan_pallas.1} parent=1 // pred_check_branch
      %2557 = sbr.rel (0) target = $region37
    $region36: #{stan_pallas.1} parent=1 // pred_region
      _
    $region37: #{stan_pallas.1} parent=1 // pred_fallthru
      _
    // Predicated region
    $region38: #{stan_pallas.1} parent=1 // pred_check
      _
    $region39: #{stan_pallas.1} parent=1 // pred_check_branch
      %2559 = sbr.rel (0) target = $region41
    $region40: #{stan_pallas.1} parent=1 // pred_region
      %s2561 = ssub.s32 16, 16
      %2562 = vsyncadd [#allocation4], %s2561
      %s2564 = sshll.u32 [#allocation3], 4
      %s2565 = int_to_ptr.vmem [resolvable:$true] %s2564
      %2567 = dma.vmem_to_hbm [thread:$0]  %s2565, 16, %s9, [#allocation4]
    $region41: #{stan_pallas.1} parent=1 // pred_fallthru
      _
    // Predicated region
    $region42: #{stan_pallas.1} parent=1 // pred_check
      _
    $region43: #{stan_pallas.1} parent=1 // pred_check_branch
      %2569 = sbr.rel (0) target = $region45
    $region44: #{stan_pallas.1} parent=1 // pred_region
      _
    $region45: #{stan_pallas.1} parent=1 // pred_fallthru
      _
    // Predicated region
    $region46: #{stan_pallas.1} parent=1 // pred_check
      _
    $region47: #{stan_pallas.1} parent=1 // pred_check_branch
      %2571 = sbr.rel (0) target = $region49
    $region48: #{stan_pallas.1} parent=1 // pred_region
      %2572 = dma.done [#allocation4], 16
    $region49: #{stan_pallas.1} parent=1 // pred_fallthru
      _
    %2573 = vsyncpa [#allocation4], 1

</llo_original>
